<compile_context>
chip_gen: v7x
topology: tpu7x:2x2x1
jax: 0.10.0
libtpu: 0.0.40
codegen_flags: <defaults>
</compile_context>

<pallas_src>
import functools

import jax
import jax.numpy as jnp
from jax.experimental import pallas as pl
from jax.experimental.pallas import tpu as pltpu


# ---------------- features: conv3x3(pad=1) + ReLU + maxpool 2x2 ----------------

def _conv_relu_pool_kernel(p_ref, w_ref, o_ref):
    # p_ref: (N*H*W, 9*Cin) im2col patches (rows ordered n, h, w)
    # w_ref: (9*Cin, Cout)  rows ordered (kh, kw, cin)
    # o_ref: (N, Ho, Wo, Cout)
    N, Ho, Wo, Cout = o_ref.shape
    H, W = 2 * Ho, 2 * Wo

    # single fused im2col matmul (one MXU stream instead of 9 tiny dots)
    acc = jnp.dot(p_ref[...], w_ref[...], preferred_element_type=jnp.float32)
    acc = jnp.maximum(acc, 0.0)                                  # ReLU

    # maxpool 2x2 via reshape + max (no strided gathers, no scratch)
    a = jnp.max(acc.reshape(N * H * Wo, 2, Cout), axis=1)        # pool W
    b = jnp.max(a.reshape(N * Ho, 2, Wo, Cout), axis=1)          # pool H
    o_ref[...] = b.reshape(N, Ho, Wo, Cout)


def conv_relu_pool(x_nchw, w_hwio):
    # NOTE: whole feature map in one VMEM block — fine at this micro scale.
    N, Cin, H, W = x_nchw.shape
    Cout = w_hwio.shape[-1]
    Ho, Wo = H // 2, W // 2

    x = jnp.transpose(x_nchw, (0, 2, 3, 1)).astype(jnp.float32)   # NHWC
    xp = jnp.pad(x, ((0, 0), (1, 1), (1, 1), (0, 0)))             # padding=1
    # im2col (wrapper-side layout plumbing; ~18 KB here). Last dim ordered
    # (kh, kw, cin) to match w_hwio.reshape(9*Cin, Cout).
    patches = jnp.concatenate(
        [xp[:, kh:kh + H, kw:kw + W, :] for kh in range(3) for kw in range(3)],
        axis=-1).reshape(N * H * W, 9 * Cin)
    w = w_hwio.reshape(9 * Cin, Cout).astype(jnp.float32)

    return pl.pallas_call(
        _conv_relu_pool_kernel,
        out_shape=jax.ShapeDtypeStruct((N, Ho, Wo, Cout), jnp.float32),
        in_specs=[pl.BlockSpec(memory_space=pltpu.MemorySpace.VMEM),
                  pl.BlockSpec(memory_space=pltpu.MemorySpace.VMEM)],
        out_specs=pl.BlockSpec(memory_space=pltpu.MemorySpace.VMEM),
    )(patches, w)


# ---------------- quantized linear (weights pre-quantized to int8) ----------------

def prepare_qlinear_weight(w, n_bits=7, pad_out_to=None):
    """One-time (init-time) weight prep — NOT in the per-forward path.

    w: (out_features, in_features) — PyTorch nn.Linear layout.
    Returns (wq_t, step):
      wq_t: int8 (in_features, out_features[, padded to pad_out_to]) = round(W/step).T
      step: f32 scalar = max|W| / (2**n_bits - 1)
    Zero-padding extra output columns does not change the result.
    """
    w = w.astype(jnp.float32)
    step = jnp.max(jnp.abs(w)) / (2 ** n_bits - 1)
    # Guard the all-zero-weight edge case (would otherwise be 0/0); for any
    # nonzero W this does not change the result.
    safe_step = jnp.maximum(step, jnp.finfo(jnp.float32).tiny)
    wq_t = jnp.round(w / safe_step).astype(jnp.int8).T    # integers in [-127, 127]
    if pad_out_to is not None and wq_t.shape[1] < pad_out_to:
        wq_t = jnp.pad(wq_t, ((0, 0), (0, pad_out_to - wq_t.shape[1])))
    return wq_t, step.astype(jnp.float32)


def _default_tiles():
    """Chip-aware tile defaults (safe fallback if device query fails).

    v5e : tk=tn=1024  -> 1 MiB int8 tiles + 2 MiB bf16 temp, well inside the
                         16 MiB scoped-VMEM default.
    v7x : tk=tn=1024  -> parallel N grid >= 4 on w1/w2 so both TensorCores get
                         >= 2 N blocks and >= 4 K pipeline steps.
    v6e : tk=1024, tn=2048 -> grid (2, 4) for w2: 2 MiB weight tiles, 8 K
                         steps, fill/drain and per-step overhead both small.
    """
    try:
        kind = jax.devices()[0].device_kind.lower()
    except Exception:
        kind = ""
    if "v6" in kind:
        return 1024, 2048
    return 1024, 1024


def _qlinear_kernel(step_ref, x_ref, wq_ref, o_ref, *, relu):
    k = pl.program_id(1)

    @pl.when(k == 0)
    def _():
        o_ref[...] = jnp.zeros_like(o_ref)

    # int8 -> bf16 upcast on the VPU (lossless: bf16 represents every integer
    # in [-127, 127] exactly).  bf16 x bf16 uses the single-pass MXU path;
    # the scalar `step` is applied once to the f32 accumulator at the end.
    # TODO(synk): optional v5e/v6e-only path — quantize activations per-row to
    # int8 and use the native int8 MXU (i32 accum); skipped here because it
    # changes numerics vs. the torch reference.
    w = wq_ref[...].astype(jnp.bfloat16)
    x = x_ref[...].astype(jnp.bfloat16)
    o_ref[...] += jnp.dot(x, w, preferred_element_type=jnp.float32)

    @pl.when(k == pl.num_programs(1) - 1)
    def _():
        r = o_ref[...] * step_ref[0]
        if relu:
            r = jnp.maximum(r, 0.0)
        o_ref[...] = r


def quantized_linear(x, wq_t, step, *, relu, tk=None, tn=None):
    # x: (B, K) f32; wq_t: (K, N) int8 pre-quantized transposed weight; step: scalar
    B, K = x.shape
    K2, N = wq_t.shape
    assert K == K2
    dtk, dtn = _default_tiles()
    tk = min(tk if tk is not None else dtk, K)
    tn = min(tn if tn is not None else dtn, N)
    assert K % tk == 0 and N % tn == 0

    step_arr = jnp.reshape(step, (1,)).astype(jnp.float32)
    kernel = functools.partial(_qlinear_kernel, relu=relu)
    # NOTE: on v7x a 3-deep weight buffer (pipeline_mode=pl.Buffered(3)) could
    # further hide shared-HBM DMA latency; left at the default 2-deep buffer
    # for portability.
    return pl.pallas_call(
        kernel,
        out_shape=jax.ShapeDtypeStruct((B, N), jnp.float32),
        grid_spec=pltpu.PrefetchScalarGridSpec(
            num_scalar_prefetch=1,
            grid=(N // tn, K // tk),
            in_specs=[pl.BlockSpec((B, tk), lambda i, k, s: (0, k)),
                      pl.BlockSpec((tk, tn), lambda i, k, s: (k, i))],
            out_specs=pl.BlockSpec((B, tn), lambda i, k, s: (0, i))),
        compiler_params=pltpu.CompilerParams(
            dimension_semantics=("parallel", "arbitrary"),
            vmem_limit_bytes=32 * 1024 * 1024),
    )(step_arr, x, wq_t)


# ---------------- full VGG forward ----------------

def vgg_forward(x_nchw, conv_w, qw1, s1, qw2, s2, qw3, s3, num_class=10):
    B = x_nchw.shape[0]
    feat = conv_relu_pool(x_nchw, conv_w)             # (B, H/2, W/2, Cout) NHWC
    feat = jnp.transpose(feat, (0, 3, 1, 2))          # NCHW -> matches torch .view order
    feat = feat.reshape(B, -1)                        # (B, 512)

    h1 = quantized_linear(feat, qw1, s1, relu=True)   # 512 -> 4096, ReLU
    # TODO(synk): nn.Dropout() is identity in eval mode; training-mode masking not implemented.
    h2 = quantized_linear(h1, qw2, s2, relu=True)     # 4096 -> 4096, ReLU
    logits = quantized_linear(h2, qw3, s3, relu=False)[:, :num_class]  # -> num_class
    return logits


if __name__ == "__main__":
    key = jax.random.PRNGKey(0)
    k1, k2, k3, k4, k5 = jax.random.split(key, 5)

    B, Cin, H, W = 2, 4, 8, 8
    Cout = 32                       # 32 * (8/2) * (8/2) = 512 = classifier in-dim
    num_class = 10

    x = jax.random.normal(k1, (B, Cin, H, W), jnp.float32)
    conv_w = jax.random.normal(k2, (3, 3, Cin, Cout), jnp.float32) * 0.1
    # PyTorch Linear weight layout is (out_features, in_features):
    w1 = jax.random.normal(k3, (4096, 512), jnp.float32) * 0.05
    w2 = jax.random.normal(k4, (4096, 4096), jnp.float32) * 0.02
    w3 = jax.random.normal(k5, (num_class, 4096), jnp.float32) * 0.02

    # One-time weight prep (hoisted out of the per-forward path): quantize to
    # int8, pre-transpose to (K, N), pad the final layer's out-dim to 128 lanes.
    qw1, s1 = prepare_qlinear_weight(w1)
    qw2, s2 = prepare_qlinear_weight(w2)
    qw3, s3 = prepare_qlinear_weight(w3, pad_out_to=128)

    fwd = jax.jit(functools.partial(vgg_forward, num_class=num_class))
    logits = jax.block_until_ready(fwd(x, conv_w, qw1, s1, qw2, s2, qw3, s3))

    assert logits.shape == (B, num_class)
    assert bool(jnp.all(jnp.isfinite(logits)))
    print("KERNEL_OK")
</pallas_src>

<mosaic_0001>
module attributes {stable_mosaic.version = 11 : i64} {
  func.func @_qlinear_kernel(%arg0: i32, %arg1: i32, %arg2: memref<1xf32, #tpu.memory_space<smem>>, %arg3: memref<2x512xf32, #tpu.memory_space<vmem>>, %arg4: memref<512x1024xi8, #tpu.memory_space<vmem>>, %arg5: memref<2x1024xf32, #tpu.memory_space<vmem>>) attributes {dimension_semantics = [#tpu.dimension_semantics<parallel>, #tpu.dimension_semantics<arbitrary>], iteration_bounds = array<i64: 4, 1>, scalar_prefetch = 1 : i64, scratch_operands = 0 : i64, tpu.core_type = #tpu.core_type<tc>, window_params = [{transform_indices = @transform_0, window_bounds = array<i64: 2, 512>}, {transform_indices = @transform_1, window_bounds = array<i64: 512, 1024>}, {transform_indices = @transform_2, window_bounds = array<i64: 2, 1024>}]} {
    %c0_i32 = arith.constant 0 : i32
    %0 = arith.cmpi eq, %arg1, %c0_i32 : i32
    %1 = arith.extui %0 : i1 to i32
    %c0_i32_0 = arith.constant 0 : i32
    %2 = arith.cmpi ne, %1, %c0_i32_0 : i32
    scf.if %2 {
      %cst_10 = arith.constant 0.000000e+00 : f32
      %14 = vector.broadcast %cst_10 : f32 to vector<2x1024xf32>
      %c0_11 = arith.constant 0 : index
      %c0_12 = arith.constant 0 : index
      %15 = vector.load %arg5[%c0_11, %c0_12] : memref<2x1024xf32, #tpu.memory_space<vmem>>, vector<2x1024xf32>
      tpu.vector_store %arg5[%c0_11, %c0_12], %14 {strides = array<i32>} : memref<2x1024xf32, #tpu.memory_space<vmem>>, vector<2x1024xf32>,
    } else {
    }
    %c0 = arith.constant 0 : index
    %c0_1 = arith.constant 0 : index
    %3 = vector.load %arg4[%c0, %c0_1] : memref<512x1024xi8, #tpu.memory_space<vmem>>, vector<512x1024xi8>
    %4 = arith.sitofp %3 : vector<512x1024xi8> to vector<512x1024xbf16>
    %c0_2 = arith.constant 0 : index
    %c0_3 = arith.constant 0 : index
    %5 = vector.load %arg3[%c0_2, %c0_3] : memref<2x512xf32, #tpu.memory_space<vmem>>, vector<2x512xf32>
    %6 = arith.truncf %5 : vector<2x512xf32> to vector<2x512xbf16>
    %c0_4 = arith.constant 0 : index
    %c0_5 = arith.constant 0 : index
    %7 = vector.load %arg5[%c0_4, %c0_5] : memref<2x1024xf32, #tpu.memory_space<vmem>>, vector<2x1024xf32>
    %cst = arith.constant dense<0.000000e+00> : vector<2x1024xf32>
    %8 = tpu.matmul %6, %4, %cst {dimension_numbers = #tpu.dot_dimension_numbers<[1], [0], [0], [1], [0, 0, 1, 1], [], []>} : vector<2x512xbf16>, vector<512x1024xbf16>, vector<2x1024xf32> -> vector<2x1024xf32>
    %9 = arith.addf %7, %8 : vector<2x1024xf32>
    %c0_6 = arith.constant 0 : index
    %c0_7 = arith.constant 0 : index
    %10 = vector.load %arg5[%c0_6, %c0_7] : memref<2x1024xf32, #tpu.memory_space<vmem>>, vector<2x1024xf32>
    tpu.vector_store %arg5[%c0_6, %c0_7], %9 {strides = array<i32>} : memref<2x1024xf32, #tpu.memory_space<vmem>>, vector<2x1024xf32>,
    %c0_i32_8 = arith.constant 0 : i32
    %11 = arith.cmpi eq, %arg1, %c0_i32_8 : i32
    %12 = arith.extui %11 : i1 to i32
    %c0_i32_9 = arith.constant 0 : i32
    %13 = arith.cmpi ne, %12, %c0_i32_9 : i32
    scf.if %13 {
      %c0_10 = arith.constant 0 : index
      %c0_11 = arith.constant 0 : index
      %14 = vector.load %arg5[%c0_10, %c0_11] : memref<2x1024xf32, #tpu.memory_space<vmem>>, vector<2x1024xf32>
      %c0_12 = arith.constant 0 : index
      %15 = memref.load %arg2[%c0_12] : memref<1xf32, #tpu.memory_space<smem>>
      %16 = vector.broadcast %15 : f32 to vector<2x1024xf32>
      %17 = arith.mulf %14, %16 : vector<2x1024xf32>
      %cst_13 = arith.constant 0.000000e+00 : f32
      %18 = vector.broadcast %cst_13 : f32 to vector<2x1024xf32>
      %19 = arith.maximumf %17, %18 : vector<2x1024xf32>
      %c0_14 = arith.constant 0 : index
      %c0_15 = arith.constant 0 : index
      %20 = vector.load %arg5[%c0_14, %c0_15] : memref<2x1024xf32, #tpu.memory_space<vmem>>, vector<2x1024xf32>
      tpu.vector_store %arg5[%c0_14, %c0_15], %19 {strides = array<i32>} : memref<2x1024xf32, #tpu.memory_space<vmem>>, vector<2x1024xf32>,
    } else {
    }
    return
  }
  func.func @transform_0(%arg0: i32, %arg1: i32, %arg2: memref<1xf32, #tpu.memory_space<smem>>) -> (i32, i32) {
    %c0_i32 = arith.constant 0 : i32
    %c0_i32_0 = arith.constant 0 : i32
    return %c0_i32, %arg1 : i32, i32
  }
  func.func @transform_1(%arg0: i32, %arg1: i32, %arg2: memref<1xf32, #tpu.memory_space<smem>>) -> (i32, i32) {
    %c0_i32 = arith.constant 0 : i32
    return %arg1, %arg0 : i32, i32
  }
  func.func @transform_2(%arg0: i32, %arg1: i32, %arg2: memref<1xf32, #tpu.memory_space<smem>>) -> (i32, i32) {
    %c0_i32 = arith.constant 0 : i32
    %c0_i32_0 = arith.constant 0 : i32
    return %c0_i32, %arg0 : i32, i32
  }
}

module attributes {stable_mosaic.version = 11 : i64} {
  func.func @_conv_relu_pool_kernel(%arg0: memref<128x36xf32, #tpu.memory_space<vmem>>, %arg1: memref<36x32xf32, #tpu.memory_space<vmem>>, %arg2: memref<2x4x4x32xf32, #tpu.memory_space<vmem>>) attributes {dimension_semantics = [], scalar_prefetch = 0 : i64, scratch_operands = 0 : i64, tpu.core_type = #tpu.core_type<tc>} {
    %c0 = arith.constant 0 : index
    %c0_0 = arith.constant 0 : index
    %0 = vector.load %arg0[%c0, %c0_0] : memref<128x36xf32, #tpu.memory_space<vmem>>, vector<128x36xf32>
    %c0_1 = arith.constant 0 : index
    %c0_2 = arith.constant 0 : index
    %1 = vector.load %arg1[%c0_1, %c0_2] : memref<36x32xf32, #tpu.memory_space<vmem>>, vector<36x32xf32>
    %cst = arith.constant dense<0.000000e+00> : vector<128x32xf32>
    %2 = tpu.matmul %0, %1, %cst {dimension_numbers = #tpu.dot_dimension_numbers<[1], [0], [0], [1], [0, 0, 1, 1], [], []>} : vector<128x36xf32>, vector<36x32xf32>, vector<128x32xf32> -> vector<128x32xf32>
    %cst_3 = arith.constant 0.000000e+00 : f32
    %3 = vector.broadcast %cst_3 : f32 to vector<128x32xf32>
    %4 = arith.maximumf %2, %3 : vector<128x32xf32>
    %5 = vector.shape_cast %4 : vector<128x32xf32> to vector<64x2x32xf32>
    %cst_4 = arith.constant dense<0xFF800000> : vector<64x32xf32>
    %6 = vector.multi_reduction <maximumf>, %5, %cst_4 [1] : vector<64x2x32xf32> to vector<64x32xf32>
    %7 = vector.shape_cast %6 : vector<64x32xf32> to vector<8x2x4x32xf32>
    %cst_5 = arith.constant dense<0xFF800000> : vector<8x4x32xf32>
    %8 = vector.multi_reduction <maximumf>, %7, %cst_5 [1] : vector<8x2x4x32xf32> to vector<8x4x32xf32>
    %9 = vector.shape_cast %8 : vector<8x4x32xf32> to vector<2x4x4x32xf32>
    %c0_6 = arith.constant 0 : index
    %c0_7 = arith.constant 0 : index
    %c0_8 = arith.constant 0 : index
    %c0_9 = arith.constant 0 : index
    %10 = vector.load %arg2[%c0_6, %c0_7, %c0_8, %c0_9] : memref<2x4x4x32xf32, #tpu.memory_space<vmem>>, vector<2x4x4x32xf32>
    tpu.vector_store %arg2[%c0_6, %c0_7, %c0_8, %c0_9], %9 {strides = array<i32>} : memref<2x4x4x32xf32, #tpu.memory_space<vmem>>, vector<2x4x4x32xf32>,
    return
  }
}

module attributes {stable_mosaic.version = 11 : i64} {
  func.func @_qlinear_kernel(%arg0: i32, %arg1: i32, %arg2: memref<1xf32, #tpu.memory_space<smem>>, %arg3: memref<2x1024xf32, #tpu.memory_space<vmem>>, %arg4: memref<1024x1024xi8, #tpu.memory_space<vmem>>, %arg5: memref<2x1024xf32, #tpu.memory_space<vmem>>) attributes {dimension_semantics = [#tpu.dimension_semantics<parallel>, #tpu.dimension_semantics<arbitrary>], iteration_bounds = array<i64: 4, 4>, scalar_prefetch = 1 : i64, scratch_operands = 0 : i64, tpu.core_type = #tpu.core_type<tc>, window_params = [{transform_indices = @transform_0, window_bounds = array<i64: 2, 1024>}, {transform_indices = @transform_1, window_bounds = array<i64: 1024, 1024>}, {transform_indices = @transform_2, window_bounds = array<i64: 2, 1024>}]} {
    %c0_i32 = arith.constant 0 : i32
    %0 = arith.cmpi eq, %arg1, %c0_i32 : i32
    %1 = arith.extui %0 : i1 to i32
    %c0_i32_0 = arith.constant 0 : i32
    %2 = arith.cmpi ne, %1, %c0_i32_0 : i32
    scf.if %2 {
      %cst_9 = arith.constant 0.000000e+00 : f32
      %14 = vector.broadcast %cst_9 : f32 to vector<2x1024xf32>
      %c0_10 = arith.constant 0 : index
      %c0_11 = arith.constant 0 : index
      %15 = vector.load %arg5[%c0_10, %c0_11] : memref<2x1024xf32, #tpu.memory_space<vmem>>, vector<2x1024xf32>
      tpu.vector_store %arg5[%c0_10, %c0_11], %14 {strides = array<i32>} : memref<2x1024xf32, #tpu.memory_space<vmem>>, vector<2x1024xf32>,
    } else {
    }
    %c0 = arith.constant 0 : index
    %c0_1 = arith.constant 0 : index
    %3 = vector.load %arg4[%c0, %c0_1] : memref<1024x1024xi8, #tpu.memory_space<vmem>>, vector<1024x1024xi8>
    %4 = arith.sitofp %3 : vector<1024x1024xi8> to vector<1024x1024xbf16>
    %c0_2 = arith.constant 0 : index
    %c0_3 = arith.constant 0 : index
    %5 = vector.load %arg3[%c0_2, %c0_3] : memref<2x1024xf32, #tpu.memory_space<vmem>>, vector<2x1024xf32>
    %6 = arith.truncf %5 : vector<2x1024xf32> to vector<2x1024xbf16>
    %c0_4 = arith.constant 0 : index
    %c0_5 = arith.constant 0 : index
    %7 = vector.load %arg5[%c0_4, %c0_5] : memref<2x1024xf32, #tpu.memory_space<vmem>>, vector<2x1024xf32>
    %cst = arith.constant dense<0.000000e+00> : vector<2x1024xf32>
    %8 = tpu.matmul %6, %4, %cst {dimension_numbers = #tpu.dot_dimension_numbers<[1], [0], [0], [1], [0, 0, 1, 1], [], []>} : vector<2x1024xbf16>, vector<1024x1024xbf16>, vector<2x1024xf32> -> vector<2x1024xf32>
    %9 = arith.addf %7, %8 : vector<2x1024xf32>
    %c0_6 = arith.constant 0 : index
    %c0_7 = arith.constant 0 : index
    %10 = vector.load %arg5[%c0_6, %c0_7] : memref<2x1024xf32, #tpu.memory_space<vmem>>, vector<2x1024xf32>
    tpu.vector_store %arg5[%c0_6, %c0_7], %9 {strides = array<i32>} : memref<2x1024xf32, #tpu.memory_space<vmem>>, vector<2x1024xf32>,
    %c3_i32 = arith.constant 3 : i32
    %11 = arith.cmpi eq, %arg1, %c3_i32 : i32
    %12 = arith.extui %11 : i1 to i32
    %c0_i32_8 = arith.constant 0 : i32
    %13 = arith.cmpi ne, %12, %c0_i32_8 : i32
    scf.if %13 {
      %c0_9 = arith.constant 0 : index
      %c0_10 = arith.constant 0 : index
      %14 = vector.load %arg5[%c0_9, %c0_10] : memref<2x1024xf32, #tpu.memory_space<vmem>>, vector<2x1024xf32>
      %c0_11 = arith.constant 0 : index
      %15 = memref.load %arg2[%c0_11] : memref<1xf32, #tpu.memory_space<smem>>
      %16 = vector.broadcast %15 : f32 to vector<2x1024xf32>
      %17 = arith.mulf %14, %16 : vector<2x1024xf32>
      %cst_12 = arith.constant 0.000000e+00 : f32
      %18 = vector.broadcast %cst_12 : f32 to vector<2x1024xf32>
      %19 = arith.maximumf %17, %18 : vector<2x1024xf32>
      %c0_13 = arith.constant 0 : index
      %c0_14 = arith.constant 0 : index
      %20 = vector.load %arg5[%c0_13, %c0_14] : memref<2x1024xf32, #tpu.memory_space<vmem>>, vector<2x1024xf32>
      tpu.vector_store %arg5[%c0_13, %c0_14], %19 {strides = array<i32>} : memref<2x1024xf32, #tpu.memory_space<vmem>>, vector<2x1024xf32>,
    } else {
    }
    return
  }
  func.func @transform_0(%arg0: i32, %arg1: i32, %arg2: memref<1xf32, #tpu.memory_space<smem>>) -> (i32, i32) {
    %c0_i32 = arith.constant 0 : i32
    %c0_i32_0 = arith.constant 0 : i32
    return %c0_i32, %arg1 : i32, i32
  }
  func.func @transform_1(%arg0: i32, %arg1: i32, %arg2: memref<1xf32, #tpu.memory_space<smem>>) -> (i32, i32) {
    %c0_i32 = arith.constant 0 : i32
    return %arg1, %arg0 : i32, i32
  }
  func.func @transform_2(%arg0: i32, %arg1: i32, %arg2: memref<1xf32, #tpu.memory_space<smem>>) -> (i32, i32) {
    %c0_i32 = arith.constant 0 : i32
    %c0_i32_0 = arith.constant 0 : i32
    return %c0_i32, %arg0 : i32, i32
  }
}

module attributes {stable_mosaic.version = 11 : i64} {
  func.func @_qlinear_kernel(%arg0: i32, %arg1: i32, %arg2: memref<1xf32, #tpu.memory_space<smem>>, %arg3: memref<2x1024xf32, #tpu.memory_space<vmem>>, %arg4: memref<1024x128xi8, #tpu.memory_space<vmem>>, %arg5: memref<2x128xf32, #tpu.memory_space<vmem>>) attributes {dimension_semantics = [#tpu.dimension_semantics<parallel>, #tpu.dimension_semantics<arbitrary>], iteration_bounds = array<i64: 1, 4>, scalar_prefetch = 1 : i64, scratch_operands = 0 : i64, tpu.core_type = #tpu.core_type<tc>, window_params = [{transform_indices = @transform_0, window_bounds = array<i64: 2, 1024>}, {transform_indices = @transform_1, window_bounds = array<i64: 1024, 128>}, {transform_indices = @transform_2, window_bounds = array<i64: 2, 128>}]} {
    %c0_i32 = arith.constant 0 : i32
    %0 = arith.cmpi eq, %arg1, %c0_i32 : i32
    %1 = arith.extui %0 : i1 to i32
    %c0_i32_0 = arith.constant 0 : i32
    %2 = arith.cmpi ne, %1, %c0_i32_0 : i32
    scf.if %2 {
      %cst_9 = arith.constant 0.000000e+00 : f32
      %14 = vector.broadcast %cst_9 : f32 to vector<2x128xf32>
      %c0_10 = arith.constant 0 : index
      %c0_11 = arith.constant 0 : index
      %15 = vector.load %arg5[%c0_10, %c0_11] : memref<2x128xf32, #tpu.memory_space<vmem>>, vector<2x128xf32>
      tpu.vector_store %arg5[%c0_10, %c0_11], %14 {strides = array<i32>} : memref<2x128xf32, #tpu.memory_space<vmem>>, vector<2x128xf32>,
    } else {
    }
    %c0 = arith.constant 0 : index
    %c0_1 = arith.constant 0 : index
    %3 = vector.load %arg4[%c0, %c0_1] : memref<1024x128xi8, #tpu.memory_space<vmem>>, vector<1024x128xi8>
    %4 = arith.sitofp %3 : vector<1024x128xi8> to vector<1024x128xbf16>
    %c0_2 = arith.constant 0 : index
    %c0_3 = arith.constant 0 : index
    %5 = vector.load %arg3[%c0_2, %c0_3] : memref<2x1024xf32, #tpu.memory_space<vmem>>, vector<2x1024xf32>
    %6 = arith.truncf %5 : vector<2x1024xf32> to vector<2x1024xbf16>
    %c0_4 = arith.constant 0 : index
    %c0_5 = arith.constant 0 : index
    %7 = vector.load %arg5[%c0_4, %c0_5] : memref<2x128xf32, #tpu.memory_space<vmem>>, vector<2x128xf32>
    %cst = arith.constant dense<0.000000e+00> : vector<2x128xf32>
    %8 = tpu.matmul %6, %4, %cst {dimension_numbers = #tpu.dot_dimension_numbers<[1], [0], [0], [1], [0, 0, 1, 1], [], []>} : vector<2x1024xbf16>, vector<1024x128xbf16>, vector<2x128xf32> -> vector<2x128xf32>
    %9 = arith.addf %7, %8 : vector<2x128xf32>
    %c0_6 = arith.constant 0 : index
    %c0_7 = arith.constant 0 : index
    %10 = vector.load %arg5[%c0_6, %c0_7] : memref<2x128xf32, #tpu.memory_space<vmem>>, vector<2x128xf32>
    tpu.vector_store %arg5[%c0_6, %c0_7], %9 {strides = array<i32>} : memref<2x128xf32, #tpu.memory_space<vmem>>, vector<2x128xf32>,
    %c3_i32 = arith.constant 3 : i32
    %11 = arith.cmpi eq, %arg1, %c3_i32 : i32
    %12 = arith.extui %11 : i1 to i32
    %c0_i32_8 = arith.constant 0 : i32
    %13 = arith.cmpi ne, %12, %c0_i32_8 : i32
    scf.if %13 {
      %c0_9 = arith.constant 0 : index
      %c0_10 = arith.constant 0 : index
      %14 = vector.load %arg5[%c0_9, %c0_10] : memref<2x128xf32, #tpu.memory_space<vmem>>, vector<2x128xf32>
      %c0_11 = arith.constant 0 : index
      %15 = memref.load %arg2[%c0_11] : memref<1xf32, #tpu.memory_space<smem>>
      %16 = vector.broadcast %15 : f32 to vector<2x128xf32>
      %17 = arith.mulf %14, %16 : vector<2x128xf32>
      %c0_12 = arith.constant 0 : index
      %c0_13 = arith.constant 0 : index
      %18 = vector.load %arg5[%c0_12, %c0_13] : memref<2x128xf32, #tpu.memory_space<vmem>>, vector<2x128xf32>
      tpu.vector_store %arg5[%c0_12, %c0_13], %17 {strides = array<i32>} : memref<2x128xf32, #tpu.memory_space<vmem>>, vector<2x128xf32>,
    } else {
    }
    return
  }
  func.func @transform_0(%arg0: i32, %arg1: i32, %arg2: memref<1xf32, #tpu.memory_space<smem>>) -> (i32, i32) {
    %c0_i32 = arith.constant 0 : i32
    %c0_i32_0 = arith.constant 0 : i32
    return %c0_i32, %arg1 : i32, i32
  }
  func.func @transform_1(%arg0: i32, %arg1: i32, %arg2: memref<1xf32, #tpu.memory_space<smem>>) -> (i32, i32) {
    %c0_i32 = arith.constant 0 : i32
    return %arg1, %arg0 : i32, i32
  }
  func.func @transform_2(%arg0: i32, %arg1: i32, %arg2: memref<1xf32, #tpu.memory_space<smem>>) -> (i32, i32) {
    %c0_i32 = arith.constant 0 : i32
    %c0_i32_0 = arith.constant 0 : i32
    return %c0_i32, %arg0 : i32, i32
  }
}

</mosaic_0001>

<llo_original>
// kernel: vgg_forward.4
$region0: #{vgg_forward.4}
  #allocation0 [shape = 'u32[]', space=smem, size = 0x4, offset = 0x4, fixed_abs, tag = 'smem constant byte address 0x4 - core index']
  #allocation1 [shape = 'u32[144,128]{1,0:T(1,128)}', space=vmem, size = 0x12000, scoped, tag = 'internal scratch']
  %s0 = inlined_call_operand.vmem [shape: f32[128,36], index: 0, kind: input, shape index: {}]
  %s1 = inlined_call_operand.vmem [shape: f32[36,32], index: 1, kind: input, shape index: {}]
  %s2 = inlined_call_operand.vmem [shape: f32[2,4,4,32], index: 2, kind: output, shape index: {}]
  %s3 = sld [smem:[#allocation0]]
  $region18: #{vgg_forward.4} parent=0
    _
  %s5 = ssub.s32 1, %s3
  %s6 = scalar_select 0, %s5, %s3
  // Predicated region
  $region2: #{vgg_forward.4} parent=0 // pred_check
    _
  $region3: #{vgg_forward.4} parent=0 // pred_check_branch
    %8 = sbr.rel (0) target = $region5
  $region4: #{vgg_forward.4} parent=0 // pred_region
    _
  $region5: #{vgg_forward.4} parent=0 // pred_fallthru
    _
  // Predicated region
  $region6: #{vgg_forward.4} parent=0 // pred_check
    _
  $region7: #{vgg_forward.4} parent=0 // pred_check_branch
    %10 = sbr.rel (0) target = $region9
  $region8: #{vgg_forward.4} parent=0 // pred_region
    _
  $region9: #{vgg_forward.4} parent=0 // pred_fallthru
    _
  %v11 = vld [vmem:[%s0] sm:$0xff]
  %v12 = vld [vmem:[%s0 + $0x8] sm:$0xff]
  %v13 = vld [vmem:[%s0 + $0x10] sm:$0xff]
  %v14 = vld [vmem:[%s0 + $0x18] sm:$0xff]
  %v15 = vld [vmem:[%s0 + $0x20] sm:$0xff]
  %v16 = vld [vmem:[%s0 + $0x28] sm:$0xff]
  %v17 = vld [vmem:[%s0 + $0x30] sm:$0xff]
  %v18 = vld [vmem:[%s0 + $0x38] sm:$0xff]
  %v19 = vld [vmem:[%s0 + $0x40] sm:$0xff]
  %v20 = vld [vmem:[%s0 + $0x48] sm:$0xff]
  %v21 = vld [vmem:[%s0 + $0x50] sm:$0xff]
  %v22 = vld [vmem:[%s0 + $0x58] sm:$0xff]
  %v23 = vld [vmem:[%s0 + $0x60] sm:$0xff]
  %v24 = vld [vmem:[%s0 + $0x68] sm:$0xff]
  %v25 = vld [vmem:[%s0 + $0x70] sm:$0xff]
  %v26 = vld [vmem:[%s0 + $0x78] sm:$0xff]
  %v27 = vld [vmem:[%s1] sm:$0xff]
  %v28 = vld [vmem:[%s1 + $0x8] sm:$0xff]
  %v29 = vld [vmem:[%s1 + $0x10] sm:$0xff]
  %v30 = vld [vmem:[%s1 + $0x18] sm:$0xff]
  %v31 = vld [vmem:[%s1 + $0x20] sm:$0xf]
  %vm32 = vcmask 293888
  %v34 = vsel %vm32, %v11, 0
  %v37 = vsel %vm32, %v12, 0
  %v40 = vsel %vm32, %v13, 0
  %v43 = vsel %vm32, %v14, 0
  %v46 = vsel %vm32, %v15, 0
  %v49 = vsel %vm32, %v16, 0
  %v52 = vsel %vm32, %v17, 0
  %v55 = vsel %vm32, %v18, 0
  %v58 = vsel %vm32, %v19, 0
  %v61 = vsel %vm32, %v20, 0
  %v64 = vsel %vm32, %v21, 0
  %v67 = vsel %vm32, %v22, 0
  %v70 = vsel %vm32, %v23, 0
  %v73 = vsel %vm32, %v24, 0
  %v76 = vsel %vm32, %v25, 0
  %v79 = vsel %vm32, %v26, 0
  %vm81 = vcmask 1043456
  %v83 = vsel %vm81, %v31, 0
  %85 = vmatprep.subr.mxu0 0.0
  %86 = vmatpush1.msra.mxu0 %v27
  %87 = vmatprep.subr.mxu0 0.0
  %88 = vmatpush1.msra.mxu0 %v28
  %89 = vmatprep.subr.mxu0 0.0
  %90 = vmatpush1.msra.mxu0 %v29
  %91 = vmatprep.subr.mxu0 0.0
  %92 = vmatpush1.msra.mxu0 %v30
  %93 = vmatprep.subr.mxu0 0.0
  %94 = vmatpush1.msra.mxu0 %v83
  %95 = vmatprep.subr.mxu0 0.0
  %96 = vmatpush1.msra.mxu0 0.0
  %97 = vmatprep.subr.mxu0 0.0
  %98 = vmatpush1.msra.mxu0 0.0
  %99 = vmatprep.subr.mxu0 0.0
  %100 = vmatpush1.msra.mxu0 0.0
  %101 = vmatprep.subr.mxu0 0.0
  %102 = vmatpush1.msra.mxu0 0.0
  %103 = vmatprep.subr.mxu0 0.0
  %104 = vmatpush1.msra.mxu0 0.0
  %105 = vmatprep.subr.mxu0 0.0
  %106 = vmatpush1.msra.mxu0 0.0
  %107 = vmatprep.subr.mxu0 0.0
  %108 = vmatpush1.msra.mxu0 0.0
  %109 = vmatprep.subr.mxu0 0.0
  %110 = vmatpush1.msra.mxu0 0.0
  %111 = vmatprep.subr.mxu0 0.0
  %112 = vmatpush1.msra.mxu0 0.0
  %113 = vmatprep.subr.mxu0 0.0
  %114 = vmatpush1.msra.mxu0 0.0
  %115 = vmatprep.subr.mxu0 0.0
  %116 = vmatpush1.msra.mxu0 0.0
  %117 = vmatprep.subr.mxu0 0.0
  %118 = vmatpush1.msra.mxu0 0.0
  %119 = vmatprep.subr.mxu0 0.0
  %120 = vmatpush1.msra.mxu0 0.0
  %121 = vmatprep.subr.mxu0 0.0
  %122 = vmatpush1.msra.mxu0 0.0
  %123 = vmatprep.subr.mxu0 0.0
  %124 = vmatpush1.msra.mxu0 0.0
  %125 = vmatprep.subr.mxu0 0.0
  %126 = vmatpush1.msra.mxu0 0.0
  %127 = vmatprep.subr.mxu0 0.0
  %128 = vmatpush1.msra.mxu0 0.0
  %129 = vmatprep.subr.mxu0 0.0
  %130 = vmatpush1.msra.mxu0 0.0
  %131 = vmatprep.subr.mxu0 0.0
  %132 = vmatpush1.msra.mxu0 0.0
  %133 = vmatprep.subr.mxu0 0.0
  %134 = vmatpush1.msra.mxu0 0.0
  %135 = vmatprep.subr.mxu0 0.0
  %136 = vmatpush1.msra.mxu0 0.0
  %137 = vmatprep.subr.mxu0 0.0
  %138 = vmatpush1.msra.mxu0 0.0
  %139 = vmatprep.subr.mxu0 0.0
  %140 = vmatpush1.msra.mxu0 0.0
  %141 = vmatprep.subr.mxu0 0.0
  %142 = vmatpush1.msra.mxu0 0.0
  %143 = vmatprep.subr.mxu0 0.0
  %144 = vmatpush1.msra.mxu0 0.0
  %145 = vmatprep.subr.mxu0 0.0
  %146 = vmatpush1.msra.mxu0 0.0
  %147 = vmatprep.subr.mxu0 0.0
  %148 = vmatpush1.msra.mxu0 0.0
  %149 = vmatprep.mubr.f32.mxu0 0.0
  %150 = vmatmul.mubr.f32.gmra.mrb[0].mxu0 %v34
  %v151 = vpop.f32.mrb[0].mxu0
  %v152 = vadd.f32 0.0, %v151
  %v153 = vpop.f32.mrb[0].mxu0
  %154 = vmatprep.mubr.f32.mxu0 0.0
  %155 = vmatmul.mubr.f32.gmra.mrb[0].mxu0 %v37
  %v156 = vpop.f32.mrb[0].mxu0
  %v157 = vadd.f32 0.0, %v156
  %v158 = vpop.f32.mrb[0].mxu0
  %159 = vmatprep.mubr.f32.mxu0 0.0
  %160 = vmatmul.mubr.f32.gmra.mrb[0].mxu0 %v40
  %v161 = vpop.f32.mrb[0].mxu0
  %v162 = vadd.f32 0.0, %v161
  %v163 = vpop.f32.mrb[0].mxu0
  %164 = vmatprep.mubr.f32.mxu0 0.0
  %165 = vmatmul.mubr.f32.gmra.mrb[0].mxu0 %v43
  %v166 = vpop.f32.mrb[0].mxu0
  %v167 = vadd.f32 0.0, %v166
  %v168 = vpop.f32.mrb[0].mxu0
  %169 = vmatprep.mubr.f32.mxu0 0.0
  %170 = vmatmul.mubr.f32.gmra.mrb[0].mxu0 %v46
  %v171 = vpop.f32.mrb[0].mxu0
  %v172 = vadd.f32 0.0, %v171
  %v173 = vpop.f32.mrb[0].mxu0
  %174 = vmatprep.mubr.f32.mxu0 0.0
  %175 = vmatmul.mubr.f32.gmra.mrb[0].mxu0 %v49
  %v176 = vpop.f32.mrb[0].mxu0
  %v177 = vadd.f32 0.0, %v176
  %v178 = vpop.f32.mrb[0].mxu0
  %179 = vmatprep.mubr.f32.mxu0 0.0
  %180 = vmatmul.mubr.f32.gmra.mrb[0].mxu0 %v52
  %v181 = vpop.f32.mrb[0].mxu0
  %v182 = vadd.f32 0.0, %v181
  %v183 = vpop.f32.mrb[0].mxu0
  %184 = vmatprep.mubr.f32.mxu0 0.0
  %185 = vmatmul.mubr.f32.gmra.mrb[0].mxu0 %v55
  %v186 = vpop.f32.mrb[0].mxu0
  %v187 = vadd.f32 0.0, %v186
  %v188 = vpop.f32.mrb[0].mxu0
  %189 = vmatprep.mubr.f32.mxu0 0.0
  %190 = vmatmul.mubr.f32.gmra.mrb[0].mxu0 %v58
  %v191 = vpop.f32.mrb[0].mxu0
  %v192 = vadd.f32 0.0, %v191
  %v193 = vpop.f32.mrb[0].mxu0
  %194 = vmatprep.mubr.f32.mxu0 0.0
  %195 = vmatmul.mubr.f32.gmra.mrb[0].mxu0 %v61
  %v196 = vpop.f32.mrb[0].mxu0
  %v197 = vadd.f32 0.0, %v196
  %v198 = vpop.f32.mrb[0].mxu0
  %199 = vmatprep.mubr.f32.mxu0 0.0
  %200 = vmatmul.mubr.f32.gmra.mrb[0].mxu0 %v64
  %v201 = vpop.f32.mrb[0].mxu0
  %v202 = vadd.f32 0.0, %v201
  %v203 = vpop.f32.mrb[0].mxu0
  %204 = vmatprep.mubr.f32.mxu0 0.0
  %205 = vmatmul.mubr.f32.gmra.mrb[0].mxu0 %v67
  %v206 = vpop.f32.mrb[0].mxu0
  %v207 = vadd.f32 0.0, %v206
  %v208 = vpop.f32.mrb[0].mxu0
  %209 = vmatprep.mubr.f32.mxu0 0.0
  %210 = vmatmul.mubr.f32.gmra.mrb[0].mxu0 %v70
  %v211 = vpop.f32.mrb[0].mxu0
  %v212 = vadd.f32 0.0, %v211
  %v213 = vpop.f32.mrb[0].mxu0
  %214 = vmatprep.mubr.f32.mxu0 0.0
  %215 = vmatmul.mubr.f32.gmra.mrb[0].mxu0 %v73
  %v216 = vpop.f32.mrb[0].mxu0
  %v217 = vadd.f32 0.0, %v216
  %v218 = vpop.f32.mrb[0].mxu0
  %219 = vmatprep.mubr.f32.mxu0 0.0
  %220 = vmatmul.mubr.f32.gmra.mrb[0].mxu0 %v76
  %v221 = vpop.f32.mrb[0].mxu0
  %v222 = vadd.f32 0.0, %v221
  %v223 = vpop.f32.mrb[0].mxu0
  %224 = vmatprep.mubr.f32.mxu0 0.0
  %225 = vmatmul.mubr.f32.gmra.mrb[0].mxu0 %v79
  %v226 = vpop.f32.mrb[0].mxu0
  %v227 = vadd.f32 0.0, %v226
  %v228 = vpop.f32.mrb[0].mxu0
  %229 = vdwg.mxu0
  %v230 = vmax.f32 %v152, 0.0
  %v231 = vmax.f32 %v157, 0.0
  %v232 = vmax.f32 %v162, 0.0
  %v233 = vmax.f32 %v167, 0.0
  %v234 = vmax.f32 %v172, 0.0
  %v235 = vmax.f32 %v177, 0.0
  %v236 = vmax.f32 %v182, 0.0
  %v237 = vmax.f32 %v187, 0.0
  %v238 = vmax.f32 %v192, 0.0
  %v239 = vmax.f32 %v197, 0.0
  %v240 = vmax.f32 %v202, 0.0
  %v241 = vmax.f32 %v207, 0.0
  %v242 = vmax.f32 %v212, 0.0
  %v243 = vmax.f32 %v217, 0.0
  %v244 = vmax.f32 %v222, 0.0
  %v245 = vmax.f32 %v227, 0.0
  %v262 = vcombine.high %v230, %v230
  %v264 = vunpack.c.l.s4 1983009808
  %v265 = vunpack.c.0.s8 %v264
  %v266 = vlaneseq
  %v267 = vshrl.u32 %v266, 7
  %v268 = vsub.s32 %v265, %v267
  %v269 = vrot.slane %v230, %v268
  %v271 = vunpack.c.l.s4 1983009808
  %v272 = vunpack.c.0.s8 %v271
  %v273 = vlaneseq
  %v274 = vshrl.u32 %v273, 7
  %v275 = vsub.s32 %v272, %v274
  %v276 = vrot.slane %v262, %v275
  %v277 = vcombine.high %v269, %v269
  %v278 = vcombine.high %v276, %v276
  %v279 = vcombine.high %v231, %v231
  %v281 = vunpack.c.l.s4 1983009808
  %v282 = vunpack.c.0.s8 %v281
  %v283 = vlaneseq
  %v284 = vshrl.u32 %v283, 7
  %v285 = vsub.s32 %v282, %v284
  %v286 = vrot.slane %v231, %v285
  %v288 = vunpack.c.l.s4 1983009808
  %v289 = vunpack.c.0.s8 %v288
  %v290 = vlaneseq
  %v291 = vshrl.u32 %v290, 7
  %v292 = vsub.s32 %v289, %v291
  %v293 = vrot.slane %v279, %v292
  %v294 = vcombine.high %v286, %v286
  %v295 = vcombine.high %v293, %v293
  %v296 = vcombine.high %v232, %v232
  %v298 = vunpack.c.l.s4 1983009808
  %v299 = vunpack.c.0.s8 %v298
  %v300 = vlaneseq
  %v301 = vshrl.u32 %v300, 7
  %v302 = vsub.s32 %v299, %v301
  %v303 = vrot.slane %v232, %v302
  %v305 = vunpack.c.l.s4 1983009808
  %v306 = vunpack.c.0.s8 %v305
  %v307 = vlaneseq
  %v308 = vshrl.u32 %v307, 7
  %v309 = vsub.s32 %v306, %v308
  %v310 = vrot.slane %v296, %v309
  %v311 = vcombine.high %v303, %v303
  %v312 = vcombine.high %v310, %v310
  %v313 = vcombine.high %v233, %v233
  %v315 = vunpack.c.l.s4 1983009808
  %v316 = vunpack.c.0.s8 %v315
  %v317 = vlaneseq
  %v318 = vshrl.u32 %v317, 7
  %v319 = vsub.s32 %v316, %v318
  %v320 = vrot.slane %v233, %v319
  %v322 = vunpack.c.l.s4 1983009808
  %v323 = vunpack.c.0.s8 %v322
  %v324 = vlaneseq
  %v325 = vshrl.u32 %v324, 7
  %v326 = vsub.s32 %v323, %v325
  %v327 = vrot.slane %v313, %v326
  %v328 = vcombine.high %v320, %v320
  %v329 = vcombine.high %v327, %v327
  %v330 = vcombine.high %v234, %v234
  %v332 = vunpack.c.l.s4 1983009808
  %v333 = vunpack.c.0.s8 %v332
  %v334 = vlaneseq
  %v335 = vshrl.u32 %v334, 7
  %v336 = vsub.s32 %v333, %v335
  %v337 = vrot.slane %v234, %v336
  %v339 = vunpack.c.l.s4 1983009808
  %v340 = vunpack.c.0.s8 %v339
  %v341 = vlaneseq
  %v342 = vshrl.u32 %v341, 7
  %v343 = vsub.s32 %v340, %v342
  %v344 = vrot.slane %v330, %v343
  %v345 = vcombine.high %v337, %v337
  %v346 = vcombine.high %v344, %v344
  %v347 = vcombine.high %v235, %v235
  %v349 = vunpack.c.l.s4 1983009808
  %v350 = vunpack.c.0.s8 %v349
  %v351 = vlaneseq
  %v352 = vshrl.u32 %v351, 7
  %v353 = vsub.s32 %v350, %v352
  %v354 = vrot.slane %v235, %v353
  %v356 = vunpack.c.l.s4 1983009808
  %v357 = vunpack.c.0.s8 %v356
  %v358 = vlaneseq
  %v359 = vshrl.u32 %v358, 7
  %v360 = vsub.s32 %v357, %v359
  %v361 = vrot.slane %v347, %v360
  %v362 = vcombine.high %v354, %v354
  %v363 = vcombine.high %v361, %v361
  %v364 = vcombine.high %v236, %v236
  %v366 = vunpack.c.l.s4 1983009808
  %v367 = vunpack.c.0.s8 %v366
  %v368 = vlaneseq
  %v369 = vshrl.u32 %v368, 7
  %v370 = vsub.s32 %v367, %v369
  %v371 = vrot.slane %v236, %v370
  %v373 = vunpack.c.l.s4 1983009808
  %v374 = vunpack.c.0.s8 %v373
  %v375 = vlaneseq
  %v376 = vshrl.u32 %v375, 7
  %v377 = vsub.s32 %v374, %v376
  %v378 = vrot.slane %v364, %v377
  %v379 = vcombine.high %v371, %v371
  %v380 = vcombine.high %v378, %v378
  %v381 = vcombine.high %v237, %v237
  %v383 = vunpack.c.l.s4 1983009808
  %v384 = vunpack.c.0.s8 %v383
  %v385 = vlaneseq
  %v386 = vshrl.u32 %v385, 7
  %v387 = vsub.s32 %v384, %v386
  %v388 = vrot.slane %v237, %v387
  %v390 = vunpack.c.l.s4 1983009808
  %v391 = vunpack.c.0.s8 %v390
  %v392 = vlaneseq
  %v393 = vshrl.u32 %v392, 7
  %v394 = vsub.s32 %v391, %v393
  %v395 = vrot.slane %v381, %v394
  %v396 = vcombine.high %v388, %v388
  %v397 = vcombine.high %v395, %v395
  %v398 = vcombine.high %v238, %v238
  %v400 = vunpack.c.l.s4 1983009808
  %v401 = vunpack.c.0.s8 %v400
  %v402 = vlaneseq
  %v403 = vshrl.u32 %v402, 7
  %v404 = vsub.s32 %v401, %v403
  %v405 = vrot.slane %v238, %v404
  %v407 = vunpack.c.l.s4 1983009808
  %v408 = vunpack.c.0.s8 %v407
  %v409 = vlaneseq
  %v410 = vshrl.u32 %v409, 7
  %v411 = vsub.s32 %v408, %v410
  %v412 = vrot.slane %v398, %v411
  %v413 = vcombine.high %v405, %v405
  %v414 = vcombine.high %v412, %v412
  %v415 = vcombine.high %v239, %v239
  %v417 = vunpack.c.l.s4 1983009808
  %v418 = vunpack.c.0.s8 %v417
  %v419 = vlaneseq
  %v420 = vshrl.u32 %v419, 7
  %v421 = vsub.s32 %v418, %v420
  %v422 = vrot.slane %v239, %v421
  %v424 = vunpack.c.l.s4 1983009808
  %v425 = vunpack.c.0.s8 %v424
  %v426 = vlaneseq
  %v427 = vshrl.u32 %v426, 7
  %v428 = vsub.s32 %v425, %v427
  %v429 = vrot.slane %v415, %v428
  %v430 = vcombine.high %v422, %v422
  %v431 = vcombine.high %v429, %v429
  %v432 = vcombine.high %v240, %v240
  %v434 = vunpack.c.l.s4 1983009808
  %v435 = vunpack.c.0.s8 %v434
  %v436 = vlaneseq
  %v437 = vshrl.u32 %v436, 7
  %v438 = vsub.s32 %v435, %v437
  %v439 = vrot.slane %v240, %v438
  %v441 = vunpack.c.l.s4 1983009808
  %v442 = vunpack.c.0.s8 %v441
  %v443 = vlaneseq
  %v444 = vshrl.u32 %v443, 7
  %v445 = vsub.s32 %v442, %v444
  %v446 = vrot.slane %v432, %v445
  %v447 = vcombine.high %v439, %v439
  %v448 = vcombine.high %v446, %v446
  %v449 = vcombine.high %v241, %v241
  %v451 = vunpack.c.l.s4 1983009808
  %v452 = vunpack.c.0.s8 %v451
  %v453 = vlaneseq
  %v454 = vshrl.u32 %v453, 7
  %v455 = vsub.s32 %v452, %v454
  %v456 = vrot.slane %v241, %v455
  %v458 = vunpack.c.l.s4 1983009808
  %v459 = vunpack.c.0.s8 %v458
  %v460 = vlaneseq
  %v461 = vshrl.u32 %v460, 7
  %v462 = vsub.s32 %v459, %v461
  %v463 = vrot.slane %v449, %v462
  %v464 = vcombine.high %v456, %v456
  %v465 = vcombine.high %v463, %v463
  %v466 = vcombine.high %v242, %v242
  %v468 = vunpack.c.l.s4 1983009808
  %v469 = vunpack.c.0.s8 %v468
  %v470 = vlaneseq
  %v471 = vshrl.u32 %v470, 7
  %v472 = vsub.s32 %v469, %v471
  %v473 = vrot.slane %v242, %v472
  %v475 = vunpack.c.l.s4 1983009808
  %v476 = vunpack.c.0.s8 %v475
  %v477 = vlaneseq
  %v478 = vshrl.u32 %v477, 7
  %v479 = vsub.s32 %v476, %v478
  %v480 = vrot.slane %v466, %v479
  %v481 = vcombine.high %v473, %v473
  %v482 = vcombine.high %v480, %v480
  %v483 = vcombine.high %v243, %v243
  %v485 = vunpack.c.l.s4 1983009808
  %v486 = vunpack.c.0.s8 %v485
  %v487 = vlaneseq
  %v488 = vshrl.u32 %v487, 7
  %v489 = vsub.s32 %v486, %v488
  %v490 = vrot.slane %v243, %v489
  %v492 = vunpack.c.l.s4 1983009808
  %v493 = vunpack.c.0.s8 %v492
  %v494 = vlaneseq
  %v495 = vshrl.u32 %v494, 7
  %v496 = vsub.s32 %v493, %v495
  %v497 = vrot.slane %v483, %v496
  %v498 = vcombine.high %v490, %v490
  %v499 = vcombine.high %v497, %v497
  %v500 = vcombine.high %v244, %v244
  %v502 = vunpack.c.l.s4 1983009808
  %v503 = vunpack.c.0.s8 %v502
  %v504 = vlaneseq
  %v505 = vshrl.u32 %v504, 7
  %v506 = vsub.s32 %v503, %v505
  %v507 = vrot.slane %v244, %v506
  %v509 = vunpack.c.l.s4 1983009808
  %v510 = vunpack.c.0.s8 %v509
  %v511 = vlaneseq
  %v512 = vshrl.u32 %v511, 7
  %v513 = vsub.s32 %v510, %v512
  %v514 = vrot.slane %v500, %v513
  %v515 = vcombine.high %v507, %v507
  %v516 = vcombine.high %v514, %v514
  %v517 = vcombine.high %v245, %v245
  %v519 = vunpack.c.l.s4 1983009808
  %v520 = vunpack.c.0.s8 %v519
  %v521 = vlaneseq
  %v522 = vshrl.u32 %v521, 7
  %v523 = vsub.s32 %v520, %v522
  %v524 = vrot.slane %v245, %v523
  %v526 = vunpack.c.l.s4 1983009808
  %v527 = vunpack.c.0.s8 %v526
  %v528 = vlaneseq
  %v529 = vshrl.u32 %v528, 7
  %v530 = vsub.s32 %v527, %v529
  %v531 = vrot.slane %v517, %v530
  %v532 = vcombine.high %v524, %v524
  %v533 = vcombine.high %v531, %v531
  %vm598 = vcmask 254976
  %v599 = vsel %vm598, %v269, -inf
  %v600 = vrot.slane %v599, 4
  %v601 = vmax.f32 %v599, %v600
  %v602 = vrot.slane %v601, 2
  %v603 = vmax.f32 %v601, %v602
  %v604 = vrot.slane %v603, 1
  %v605 = vmax.f32 %v603, %v604
  %v606 = vsel %vm598, %v277, -inf
  %v607 = vrot.slane %v606, 4
  %v608 = vmax.f32 %v606, %v607
  %v609 = vrot.slane %v608, 2
  %v610 = vmax.f32 %v608, %v609
  %v611 = vrot.slane %v610, 1
  %v612 = vmax.f32 %v610, %v611
  %v613 = vsel %vm598, %v276, -inf
  %v614 = vrot.slane %v613, 4
  %v615 = vmax.f32 %v613, %v614
  %v616 = vrot.slane %v615, 2
  %v617 = vmax.f32 %v615, %v616
  %v618 = vrot.slane %v617, 1
  %v619 = vmax.f32 %v617, %v618
  %v620 = vsel %vm598, %v278, -inf
  %v621 = vrot.slane %v620, 4
  %v622 = vmax.f32 %v620, %v621
  %v623 = vrot.slane %v622, 2
  %v624 = vmax.f32 %v622, %v623
  %v625 = vrot.slane %v624, 1
  %v626 = vmax.f32 %v624, %v625
  %v627 = vsel %vm598, %v286, -inf
  %v628 = vrot.slane %v627, 4
  %v629 = vmax.f32 %v627, %v628
  %v630 = vrot.slane %v629, 2
  %v631 = vmax.f32 %v629, %v630
  %v632 = vrot.slane %v631, 1
  %v633 = vmax.f32 %v631, %v632
  %v634 = vsel %vm598, %v294, -inf
  %v635 = vrot.slane %v634, 4
  %v636 = vmax.f32 %v634, %v635
  %v637 = vrot.slane %v636, 2
  %v638 = vmax.f32 %v636, %v637
  %v639 = vrot.slane %v638, 1
  %v640 = vmax.f32 %v638, %v639
  %v641 = vsel %vm598, %v293, -inf
  %v642 = vrot.slane %v641, 4
  %v643 = vmax.f32 %v641, %v642
  %v644 = vrot.slane %v643, 2
  %v645 = vmax.f32 %v643, %v644
  %v646 = vrot.slane %v645, 1
  %v647 = vmax.f32 %v645, %v646
  %v648 = vsel %vm598, %v295, -inf
  %v649 = vrot.slane %v648, 4
  %v650 = vmax.f32 %v648, %v649
  %v651 = vrot.slane %v650, 2
  %v652 = vmax.f32 %v650, %v651
  %v653 = vrot.slane %v652, 1
  %v654 = vmax.f32 %v652, %v653
  %v655 = vsel %vm598, %v303, -inf
  %v656 = vrot.slane %v655, 4
  %v657 = vmax.f32 %v655, %v656
  %v658 = vrot.slane %v657, 2
  %v659 = vmax.f32 %v657, %v658
  %v660 = vrot.slane %v659, 1
  %v661 = vmax.f32 %v659, %v660
  %v662 = vsel %vm598, %v311, -inf
  %v663 = vrot.slane %v662, 4
  %v664 = vmax.f32 %v662, %v663
  %v665 = vrot.slane %v664, 2
  %v666 = vmax.f32 %v664, %v665
  %v667 = vrot.slane %v666, 1
  %v668 = vmax.f32 %v666, %v667
  %v669 = vsel %vm598, %v310, -inf
  %v670 = vrot.slane %v669, 4
  %v671 = vmax.f32 %v669, %v670
  %v672 = vrot.slane %v671, 2
  %v673 = vmax.f32 %v671, %v672
  %v674 = vrot.slane %v673, 1
  %v675 = vmax.f32 %v673, %v674
  %v676 = vsel %vm598, %v312, -inf
  %v677 = vrot.slane %v676, 4
  %v678 = vmax.f32 %v676, %v677
  %v679 = vrot.slane %v678, 2
  %v680 = vmax.f32 %v678, %v679
  %v681 = vrot.slane %v680, 1
  %v682 = vmax.f32 %v680, %v681
  %v683 = vsel %vm598, %v320, -inf
  %v684 = vrot.slane %v683, 4
  %v685 = vmax.f32 %v683, %v684
  %v686 = vrot.slane %v685, 2
  %v687 = vmax.f32 %v685, %v686
  %v688 = vrot.slane %v687, 1
  %v689 = vmax.f32 %v687, %v688
  %v690 = vsel %vm598, %v328, -inf
  %v691 = vrot.slane %v690, 4
  %v692 = vmax.f32 %v690, %v691
  %v693 = vrot.slane %v692, 2
  %v694 = vmax.f32 %v692, %v693
  %v695 = vrot.slane %v694, 1
  %v696 = vmax.f32 %v694, %v695
  %v697 = vsel %vm598, %v327, -inf
  %v698 = vrot.slane %v697, 4
  %v699 = vmax.f32 %v697, %v698
  %v700 = vrot.slane %v699, 2
  %v701 = vmax.f32 %v699, %v700
  %v702 = vrot.slane %v701, 1
  %v703 = vmax.f32 %v701, %v702
  %v704 = vsel %vm598, %v329, -inf
  %v705 = vrot.slane %v704, 4
  %v706 = vmax.f32 %v704, %v705
  %v707 = vrot.slane %v706, 2
  %v708 = vmax.f32 %v706, %v707
  %v709 = vrot.slane %v708, 1
  %v710 = vmax.f32 %v708, %v709
  %v711 = vsel %vm598, %v337, -inf
  %v712 = vrot.slane %v711, 4
  %v713 = vmax.f32 %v711, %v712
  %v714 = vrot.slane %v713, 2
  %v715 = vmax.f32 %v713, %v714
  %v716 = vrot.slane %v715, 1
  %v717 = vmax.f32 %v715, %v716
  %v718 = vsel %vm598, %v345, -inf
  %v719 = vrot.slane %v718, 4
  %v720 = vmax.f32 %v718, %v719
  %v721 = vrot.slane %v720, 2
  %v722 = vmax.f32 %v720, %v721
  %v723 = vrot.slane %v722, 1
  %v724 = vmax.f32 %v722, %v723
  %v725 = vsel %vm598, %v344, -inf
  %v726 = vrot.slane %v725, 4
  %v727 = vmax.f32 %v725, %v726
  %v728 = vrot.slane %v727, 2
  %v729 = vmax.f32 %v727, %v728
  %v730 = vrot.slane %v729, 1
  %v731 = vmax.f32 %v729, %v730
  %v732 = vsel %vm598, %v346, -inf
  %v733 = vrot.slane %v732, 4
  %v734 = vmax.f32 %v732, %v733
  %v735 = vrot.slane %v734, 2
  %v736 = vmax.f32 %v734, %v735
  %v737 = vrot.slane %v736, 1
  %v738 = vmax.f32 %v736, %v737
  %v739 = vsel %vm598, %v354, -inf
  %v740 = vrot.slane %v739, 4
  %v741 = vmax.f32 %v739, %v740
  %v742 = vrot.slane %v741, 2
  %v743 = vmax.f32 %v741, %v742
  %v744 = vrot.slane %v743, 1
  %v745 = vmax.f32 %v743, %v744
  %v746 = vsel %vm598, %v362, -inf
  %v747 = vrot.slane %v746, 4
  %v748 = vmax.f32 %v746, %v747
  %v749 = vrot.slane %v748, 2
  %v750 = vmax.f32 %v748, %v749
  %v751 = vrot.slane %v750, 1
  %v752 = vmax.f32 %v750, %v751
  %v753 = vsel %vm598, %v361, -inf
  %v754 = vrot.slane %v753, 4
  %v755 = vmax.f32 %v753, %v754
  %v756 = vrot.slane %v755, 2
  %v757 = vmax.f32 %v755, %v756
  %v758 = vrot.slane %v757, 1
  %v759 = vmax.f32 %v757, %v758
  %v760 = vsel %vm598, %v363, -inf
  %v761 = vrot.slane %v760, 4
  %v762 = vmax.f32 %v760, %v761
  %v763 = vrot.slane %v762, 2
  %v764 = vmax.f32 %v762, %v763
  %v765 = vrot.slane %v764, 1
  %v766 = vmax.f32 %v764, %v765
  %v767 = vsel %vm598, %v371, -inf
  %v768 = vrot.slane %v767, 4
  %v769 = vmax.f32 %v767, %v768
  %v770 = vrot.slane %v769, 2
  %v771 = vmax.f32 %v769, %v770
  %v772 = vrot.slane %v771, 1
  %v773 = vmax.f32 %v771, %v772
  %v774 = vsel %vm598, %v379, -inf
  %v775 = vrot.slane %v774, 4
  %v776 = vmax.f32 %v774, %v775
  %v777 = vrot.slane %v776, 2
  %v778 = vmax.f32 %v776, %v777
  %v779 = vrot.slane %v778, 1
  %v780 = vmax.f32 %v778, %v779
  %v781 = vsel %vm598, %v378, -inf
  %v782 = vrot.slane %v781, 4
  %v783 = vmax.f32 %v781, %v782
  %v784 = vrot.slane %v783, 2
  %v785 = vmax.f32 %v783, %v784
  %v786 = vrot.slane %v785, 1
  %v787 = vmax.f32 %v785, %v786
  %v788 = vsel %vm598, %v380, -inf
  %v789 = vrot.slane %v788, 4
  %v790 = vmax.f32 %v788, %v789
  %v791 = vrot.slane %v790, 2
  %v792 = vmax.f32 %v790, %v791
  %v793 = vrot.slane %v792, 1
  %v794 = vmax.f32 %v792, %v793
  %v795 = vsel %vm598, %v388, -inf
  %v796 = vrot.slane %v795, 4
  %v797 = vmax.f32 %v795, %v796
  %v798 = vrot.slane %v797, 2
  %v799 = vmax.f32 %v797, %v798
  %v800 = vrot.slane %v799, 1
  %v801 = vmax.f32 %v799, %v800
  %v802 = vsel %vm598, %v396, -inf
  %v803 = vrot.slane %v802, 4
  %v804 = vmax.f32 %v802, %v803
  %v805 = vrot.slane %v804, 2
  %v806 = vmax.f32 %v804, %v805
  %v807 = vrot.slane %v806, 1
  %v808 = vmax.f32 %v806, %v807
  %v809 = vsel %vm598, %v395, -inf
  %v810 = vrot.slane %v809, 4
  %v811 = vmax.f32 %v809, %v810
  %v812 = vrot.slane %v811, 2
  %v813 = vmax.f32 %v811, %v812
  %v814 = vrot.slane %v813, 1
  %v815 = vmax.f32 %v813, %v814
  %v816 = vsel %vm598, %v397, -inf
  %v817 = vrot.slane %v816, 4
  %v818 = vmax.f32 %v816, %v817
  %v819 = vrot.slane %v818, 2
  %v820 = vmax.f32 %v818, %v819
  %v821 = vrot.slane %v820, 1
  %v822 = vmax.f32 %v820, %v821
  %v823 = vsel %vm598, %v405, -inf
  %v824 = vrot.slane %v823, 4
  %v825 = vmax.f32 %v823, %v824
  %v826 = vrot.slane %v825, 2
  %v827 = vmax.f32 %v825, %v826
  %v828 = vrot.slane %v827, 1
  %v829 = vmax.f32 %v827, %v828
  %v830 = vsel %vm598, %v413, -inf
  %v831 = vrot.slane %v830, 4
  %v832 = vmax.f32 %v830, %v831
  %v833 = vrot.slane %v832, 2
  %v834 = vmax.f32 %v832, %v833
  %v835 = vrot.slane %v834, 1
  %v836 = vmax.f32 %v834, %v835
  %v837 = vsel %vm598, %v412, -inf
  %v838 = vrot.slane %v837, 4
  %v839 = vmax.f32 %v837, %v838
  %v840 = vrot.slane %v839, 2
  %v841 = vmax.f32 %v839, %v840
  %v842 = vrot.slane %v841, 1
  %v843 = vmax.f32 %v841, %v842
  %v844 = vsel %vm598, %v414, -inf
  %v845 = vrot.slane %v844, 4
  %v846 = vmax.f32 %v844, %v845
  %v847 = vrot.slane %v846, 2
  %v848 = vmax.f32 %v846, %v847
  %v849 = vrot.slane %v848, 1
  %v850 = vmax.f32 %v848, %v849
  %v851 = vsel %vm598, %v422, -inf
  %v852 = vrot.slane %v851, 4
  %v853 = vmax.f32 %v851, %v852
  %v854 = vrot.slane %v853, 2
  %v855 = vmax.f32 %v853, %v854
  %v856 = vrot.slane %v855, 1
  %v857 = vmax.f32 %v855, %v856
  %v858 = vsel %vm598, %v430, -inf
  %v859 = vrot.slane %v858, 4
  %v860 = vmax.f32 %v858, %v859
  %v861 = vrot.slane %v860, 2
  %v862 = vmax.f32 %v860, %v861
  %v863 = vrot.slane %v862, 1
  %v864 = vmax.f32 %v862, %v863
  %v865 = vsel %vm598, %v429, -inf
  %v866 = vrot.slane %v865, 4
  %v867 = vmax.f32 %v865, %v866
  %v868 = vrot.slane %v867, 2
  %v869 = vmax.f32 %v867, %v868
  %v870 = vrot.slane %v869, 1
  %v871 = vmax.f32 %v869, %v870
  %v872 = vsel %vm598, %v431, -inf
  %v873 = vrot.slane %v872, 4
  %v874 = vmax.f32 %v872, %v873
  %v875 = vrot.slane %v874, 2
  %v876 = vmax.f32 %v874, %v875
  %v877 = vrot.slane %v876, 1
  %v878 = vmax.f32 %v876, %v877
  %v879 = vsel %vm598, %v439, -inf
  %v880 = vrot.slane %v879, 4
  %v881 = vmax.f32 %v879, %v880
  %v882 = vrot.slane %v881, 2
  %v883 = vmax.f32 %v881, %v882
  %v884 = vrot.slane %v883, 1
  %v885 = vmax.f32 %v883, %v884
  %v886 = vsel %vm598, %v447, -inf
  %v887 = vrot.slane %v886, 4
  %v888 = vmax.f32 %v886, %v887
  %v889 = vrot.slane %v888, 2
  %v890 = vmax.f32 %v888, %v889
  %v891 = vrot.slane %v890, 1
  %v892 = vmax.f32 %v890, %v891
  %v893 = vsel %vm598, %v446, -inf
  %v894 = vrot.slane %v893, 4
  %v895 = vmax.f32 %v893, %v894
  %v896 = vrot.slane %v895, 2
  %v897 = vmax.f32 %v895, %v896
  %v898 = vrot.slane %v897, 1
  %v899 = vmax.f32 %v897, %v898
  %v900 = vsel %vm598, %v448, -inf
  %v901 = vrot.slane %v900, 4
  %v902 = vmax.f32 %v900, %v901
  %v903 = vrot.slane %v902, 2
  %v904 = vmax.f32 %v902, %v903
  %v905 = vrot.slane %v904, 1
  %v906 = vmax.f32 %v904, %v905
  %v907 = vsel %vm598, %v456, -inf
  %v908 = vrot.slane %v907, 4
  %v909 = vmax.f32 %v907, %v908
  %v910 = vrot.slane %v909, 2
  %v911 = vmax.f32 %v909, %v910
  %v912 = vrot.slane %v911, 1
  %v913 = vmax.f32 %v911, %v912
  %v914 = vsel %vm598, %v464, -inf
  %v915 = vrot.slane %v914, 4
  %v916 = vmax.f32 %v914, %v915
  %v917 = vrot.slane %v916, 2
  %v918 = vmax.f32 %v916, %v917
  %v919 = vrot.slane %v918, 1
  %v920 = vmax.f32 %v918, %v919
  %v921 = vsel %vm598, %v463, -inf
  %v922 = vrot.slane %v921, 4
  %v923 = vmax.f32 %v921, %v922
  %v924 = vrot.slane %v923, 2
  %v925 = vmax.f32 %v923, %v924
  %v926 = vrot.slane %v925, 1
  %v927 = vmax.f32 %v925, %v926
  %v928 = vsel %vm598, %v465, -inf
  %v929 = vrot.slane %v928, 4
  %v930 = vmax.f32 %v928, %v929
  %v931 = vrot.slane %v930, 2
  %v932 = vmax.f32 %v930, %v931
  %v933 = vrot.slane %v932, 1
  %v934 = vmax.f32 %v932, %v933
  %v935 = vsel %vm598, %v473, -inf
  %v936 = vrot.slane %v935, 4
  %v937 = vmax.f32 %v935, %v936
  %v938 = vrot.slane %v937, 2
  %v939 = vmax.f32 %v937, %v938
  %v940 = vrot.slane %v939, 1
  %v941 = vmax.f32 %v939, %v940
  %v942 = vsel %vm598, %v481, -inf
  %v943 = vrot.slane %v942, 4
  %v944 = vmax.f32 %v942, %v943
  %v945 = vrot.slane %v944, 2
  %v946 = vmax.f32 %v944, %v945
  %v947 = vrot.slane %v946, 1
  %v948 = vmax.f32 %v946, %v947
  %v949 = vsel %vm598, %v480, -inf
  %v950 = vrot.slane %v949, 4
  %v951 = vmax.f32 %v949, %v950
  %v952 = vrot.slane %v951, 2
  %v953 = vmax.f32 %v951, %v952
  %v954 = vrot.slane %v953, 1
  %v955 = vmax.f32 %v953, %v954
  %v956 = vsel %vm598, %v482, -inf
  %v957 = vrot.slane %v956, 4
  %v958 = vmax.f32 %v956, %v957
  %v959 = vrot.slane %v958, 2
  %v960 = vmax.f32 %v958, %v959
  %v961 = vrot.slane %v960, 1
  %v962 = vmax.f32 %v960, %v961
  %v963 = vsel %vm598, %v490, -inf
  %v964 = vrot.slane %v963, 4
  %v965 = vmax.f32 %v963, %v964
  %v966 = vrot.slane %v965, 2
  %v967 = vmax.f32 %v965, %v966
  %v968 = vrot.slane %v967, 1
  %v969 = vmax.f32 %v967, %v968
  %v970 = vsel %vm598, %v498, -inf
  %v971 = vrot.slane %v970, 4
  %v972 = vmax.f32 %v970, %v971
  %v973 = vrot.slane %v972, 2
  %v974 = vmax.f32 %v972, %v973
  %v975 = vrot.slane %v974, 1
  %v976 = vmax.f32 %v974, %v975
  %v977 = vsel %vm598, %v497, -inf
  %v978 = vrot.slane %v977, 4
  %v979 = vmax.f32 %v977, %v978
  %v980 = vrot.slane %v979, 2
  %v981 = vmax.f32 %v979, %v980
  %v982 = vrot.slane %v981, 1
  %v983 = vmax.f32 %v981, %v982
  %v984 = vsel %vm598, %v499, -inf
  %v985 = vrot.slane %v984, 4
  %v986 = vmax.f32 %v984, %v985
  %v987 = vrot.slane %v986, 2
  %v988 = vmax.f32 %v986, %v987
  %v989 = vrot.slane %v988, 1
  %v990 = vmax.f32 %v988, %v989
  %v991 = vsel %vm598, %v507, -inf
  %v992 = vrot.slane %v991, 4
  %v993 = vmax.f32 %v991, %v992
  %v994 = vrot.slane %v993, 2
  %v995 = vmax.f32 %v993, %v994
  %v996 = vrot.slane %v995, 1
  %v997 = vmax.f32 %v995, %v996
  %v998 = vsel %vm598, %v515, -inf
  %v999 = vrot.slane %v998, 4
  %v1000 = vmax.f32 %v998, %v999
  %v1001 = vrot.slane %v1000, 2
  %v1002 = vmax.f32 %v1000, %v1001
  %v1003 = vrot.slane %v1002, 1
  %v1004 = vmax.f32 %v1002, %v1003
  %v1005 = vsel %vm598, %v514, -inf
  %v1006 = vrot.slane %v1005, 4
  %v1007 = vmax.f32 %v1005, %v1006
  %v1008 = vrot.slane %v1007, 2
  %v1009 = vmax.f32 %v1007, %v1008
  %v1010 = vrot.slane %v1009, 1
  %v1011 = vmax.f32 %v1009, %v1010
  %v1012 = vsel %vm598, %v516, -inf
  %v1013 = vrot.slane %v1012, 4
  %v1014 = vmax.f32 %v1012, %v1013
  %v1015 = vrot.slane %v1014, 2
  %v1016 = vmax.f32 %v1014, %v1015
  %v1017 = vrot.slane %v1016, 1
  %v1018 = vmax.f32 %v1016, %v1017
  %v1019 = vsel %vm598, %v524, -inf
  %v1020 = vrot.slane %v1019, 4
  %v1021 = vmax.f32 %v1019, %v1020
  %v1022 = vrot.slane %v1021, 2
  %v1023 = vmax.f32 %v1021, %v1022
  %v1024 = vrot.slane %v1023, 1
  %v1025 = vmax.f32 %v1023, %v1024
  %v1026 = vsel %vm598, %v532, -inf
  %v1027 = vrot.slane %v1026, 4
  %v1028 = vmax.f32 %v1026, %v1027
  %v1029 = vrot.slane %v1028, 2
  %v1030 = vmax.f32 %v1028, %v1029
  %v1031 = vrot.slane %v1030, 1
  %v1032 = vmax.f32 %v1030, %v1031
  %v1033 = vsel %vm598, %v531, -inf
  %v1034 = vrot.slane %v1033, 4
  %v1035 = vmax.f32 %v1033, %v1034
  %v1036 = vrot.slane %v1035, 2
  %v1037 = vmax.f32 %v1035, %v1036
  %v1038 = vrot.slane %v1037, 1
  %v1039 = vmax.f32 %v1037, %v1038
  %v1040 = vsel %vm598, %v533, -inf
  %v1041 = vrot.slane %v1040, 4
  %v1042 = vmax.f32 %v1040, %v1041
  %v1043 = vrot.slane %v1042, 2
  %v1044 = vmax.f32 %v1042, %v1043
  %v1045 = vrot.slane %v1044, 1
  %v1046 = vmax.f32 %v1044, %v1045
  %vm1047 = vcmask 261120
  %v1048 = vsel %vm1047, %v605, -inf
  %v1049 = vsel %vm1047, %v633, -inf
  %v1050 = vmax.f32 %v1048, %v1049
  %v1051 = vsel %vm1047, %v612, -inf
  %v1052 = vsel %vm1047, %v640, -inf
  %v1053 = vmax.f32 %v1051, %v1052
  %v1054 = vsel %vm1047, %v619, -inf
  %v1055 = vsel %vm1047, %v647, -inf
  %v1056 = vmax.f32 %v1054, %v1055
  %v1057 = vsel %vm1047, %v626, -inf
  %v1058 = vsel %vm1047, %v654, -inf
  %v1059 = vmax.f32 %v1057, %v1058
  %v1060 = vsel %vm1047, %v661, -inf
  %v1061 = vsel %vm1047, %v689, -inf
  %v1062 = vmax.f32 %v1060, %v1061
  %v1063 = vsel %vm1047, %v668, -inf
  %v1064 = vsel %vm1047, %v696, -inf
  %v1065 = vmax.f32 %v1063, %v1064
  %v1066 = vsel %vm1047, %v675, -inf
  %v1067 = vsel %vm1047, %v703, -inf
  %v1068 = vmax.f32 %v1066, %v1067
  %v1069 = vsel %vm1047, %v682, -inf
  %v1070 = vsel %vm1047, %v710, -inf
  %v1071 = vmax.f32 %v1069, %v1070
  %v1072 = vsel %vm1047, %v717, -inf
  %v1073 = vsel %vm1047, %v745, -inf
  %v1074 = vmax.f32 %v1072, %v1073
  %v1075 = vsel %vm1047, %v724, -inf
  %v1076 = vsel %vm1047, %v752, -inf
  %v1077 = vmax.f32 %v1075, %v1076
  %v1078 = vsel %vm1047, %v731, -inf
  %v1079 = vsel %vm1047, %v759, -inf
  %v1080 = vmax.f32 %v1078, %v1079
  %v1081 = vsel %vm1047, %v738, -inf
  %v1082 = vsel %vm1047, %v766, -inf
  %v1083 = vmax.f32 %v1081, %v1082
  %v1084 = vsel %vm1047, %v773, -inf
  %v1085 = vsel %vm1047, %v801, -inf
  %v1086 = vmax.f32 %v1084, %v1085
  %v1087 = vsel %vm1047, %v780, -inf
  %v1088 = vsel %vm1047, %v808, -inf
  %v1089 = vmax.f32 %v1087, %v1088
  %v1090 = vsel %vm1047, %v787, -inf
  %v1091 = vsel %vm1047, %v815, -inf
  %v1092 = vmax.f32 %v1090, %v1091
  %v1093 = vsel %vm1047, %v794, -inf
  %v1094 = vsel %vm1047, %v822, -inf
  %v1095 = vmax.f32 %v1093, %v1094
  %v1096 = vsel %vm1047, %v829, -inf
  %v1097 = vsel %vm1047, %v857, -inf
  %v1098 = vmax.f32 %v1096, %v1097
  %v1099 = vsel %vm1047, %v836, -inf
  %v1100 = vsel %vm1047, %v864, -inf
  %v1101 = vmax.f32 %v1099, %v1100
  %v1102 = vsel %vm1047, %v843, -inf
  %v1103 = vsel %vm1047, %v871, -inf
  %v1104 = vmax.f32 %v1102, %v1103
  %v1105 = vsel %vm1047, %v850, -inf
  %v1106 = vsel %vm1047, %v878, -inf
  %v1107 = vmax.f32 %v1105, %v1106
  %v1108 = vsel %vm1047, %v885, -inf
  %v1109 = vsel %vm1047, %v913, -inf
  %v1110 = vmax.f32 %v1108, %v1109
  %v1111 = vsel %vm1047, %v892, -inf
  %v1112 = vsel %vm1047, %v920, -inf
  %v1113 = vmax.f32 %v1111, %v1112
  %v1114 = vsel %vm1047, %v899, -inf
  %v1115 = vsel %vm1047, %v927, -inf
  %v1116 = vmax.f32 %v1114, %v1115
  %v1117 = vsel %vm1047, %v906, -inf
  %v1118 = vsel %vm1047, %v934, -inf
  %v1119 = vmax.f32 %v1117, %v1118
  %v1120 = vsel %vm1047, %v941, -inf
  %v1121 = vsel %vm1047, %v969, -inf
  %v1122 = vmax.f32 %v1120, %v1121
  %v1123 = vsel %vm1047, %v948, -inf
  %v1124 = vsel %vm1047, %v976, -inf
  %v1125 = vmax.f32 %v1123, %v1124
  %v1126 = vsel %vm1047, %v955, -inf
  %v1127 = vsel %vm1047, %v983, -inf
  %v1128 = vmax.f32 %v1126, %v1127
  %v1129 = vsel %vm1047, %v962, -inf
  %v1130 = vsel %vm1047, %v990, -inf
  %v1131 = vmax.f32 %v1129, %v1130
  %v1132 = vsel %vm1047, %v997, -inf
  %v1133 = vsel %vm1047, %v1025, -inf
  %v1134 = vmax.f32 %v1132, %v1133
  %v1135 = vsel %vm1047, %v1004, -inf
  %v1136 = vsel %vm1047, %v1032, -inf
  %v1137 = vmax.f32 %v1135, %v1136
  %v1138 = vsel %vm1047, %v1011, -inf
  %v1139 = vsel %vm1047, %v1039, -inf
  %v1140 = vmax.f32 %v1138, %v1139
  %v1141 = vsel %vm1047, %v1018, -inf
  %v1142 = vsel %vm1047, %v1046, -inf
  %v1143 = vmax.f32 %v1141, %v1142
  %vm1176 = vcmask 1041409
  %v1177 = vsel %vm1176, %v1053, %v1050
  %vm1178 = vcmask 1042434
  %v1179 = vsel %vm1178, %v1056, %v1177
  %vm1180 = vcmask 1043459
  %v1181 = vsel %vm1180, %v1059, %v1179
  %v1182 = vsel %vm1176, %v1065, %v1062
  %v1183 = vsel %vm1178, %v1068, %v1182
  %v1184 = vsel %vm1180, %v1071, %v1183
  %v1185 = vsel %vm1176, %v1077, %v1074
  %v1186 = vsel %vm1178, %v1080, %v1185
  %v1187 = vsel %vm1180, %v1083, %v1186
  %v1188 = vsel %vm1176, %v1089, %v1086
  %v1189 = vsel %vm1178, %v1092, %v1188
  %v1190 = vsel %vm1180, %v1095, %v1189
  %v1191 = vsel %vm1176, %v1101, %v1098
  %v1192 = vsel %vm1178, %v1104, %v1191
  %v1193 = vsel %vm1180, %v1107, %v1192
  %v1194 = vsel %vm1176, %v1113, %v1110
  %v1195 = vsel %vm1178, %v1116, %v1194
  %v1196 = vsel %vm1180, %v1119, %v1195
  %v1197 = vsel %vm1176, %v1125, %v1122
  %v1198 = vsel %vm1178, %v1128, %v1197
  %v1199 = vsel %vm1180, %v1131, %v1198
  %v1200 = vsel %vm1176, %v1137, %v1134
  %v1201 = vsel %vm1178, %v1140, %v1200
  %v1202 = vsel %vm1180, %v1143, %v1201
  %vm1211 = vcmask 257024
  %1212 = vst.msk [vmem:[%s2] sm:$0xf] %vm1211, %v1181
  %1213 = vst.msk [vmem:[%s2 + $0x4] sm:$0xf] %vm1211, %v1184
  %1214 = vst.msk [vmem:[%s2 + $0x8] sm:$0xf] %vm1211, %v1187
  %1215 = vst.msk [vmem:[%s2 + $0xc] sm:$0xf] %vm1211, %v1190
  %1216 = vst.msk [vmem:[%s2 + $0x10] sm:$0xf] %vm1211, %v1193
  %1217 = vst.msk [vmem:[%s2 + $0x14] sm:$0xf] %vm1211, %v1196
  %1218 = vst.msk [vmem:[%s2 + $0x18] sm:$0xf] %vm1211, %v1199
  %1219 = vst.msk [vmem:[%s2 + $0x1c] sm:$0xf] %vm1211, %v1202
  // Predicated region
  $region10: #{vgg_forward.4} parent=0 // pred_check
    _
  $region11: #{vgg_forward.4} parent=0 // pred_check_branch
    %1221 = sbr.rel (0) target = $region13
  $region12: #{vgg_forward.4} parent=0 // pred_region
    _
  $region13: #{vgg_forward.4} parent=0 // pred_fallthru
    _
  // Predicated region
  $region14: #{vgg_forward.4} parent=0 // pred_check
    _
  $region15: #{vgg_forward.4} parent=0 // pred_check_branch
    %1223 = sbr.rel (0) target = $region17
  $region16: #{vgg_forward.4} parent=0 // pred_region
    _
  $region17: #{vgg_forward.4} parent=0 // pred_fallthru
    _

// kernel: vgg_forward.5
$region0: #{vgg_forward.5}
  #allocation0 [shape = 'u32[]', space=smem, size = 0x4, offset = 0x4, fixed_abs, tag = 'smem constant byte address 0x4 - core index']
  #allocation1 [shape = 'u32[144,128]{1,0:T(1,128)}', space=vmem, size = 0x12000, scoped, tag = 'internal scratch']
  #allocation2 [shape = 's32[1]{0}', space=sflag, size = 0x4, scoped, tag = 'scoped memory for vgg_forward.5']
  #allocation3 [shape = 'f32[1]{0:T(128)S(6)}', space=smem, size = 0x200, scoped, tag = 'prefetched SMEM operand 0']
  %s0 = inlined_call_operand.<no memory space> [shape: f32[1], index: 0, kind: input, shape index: {}]
  %s1 = inlined_call_operand.vmem [shape: f32[2,512], index: 1, kind: input, shape index: {}]
  %s2 = inlined_call_operand.hbm [shape: s8[512,4096], index: 2, kind: input, shape index: {}]
  %s3 = inlined_call_operand.vmem [shape: f32[2,4096], index: 3, kind: output, shape index: {}]
  %s4 = sld [smem:[#allocation0]]
  $region53: #{vgg_forward.5} parent=0
    _
  %s6 = ssub.s32 1, %s4
  %s7 = scalar_select 0, %s6, %s4
  %8 = sst [smem:[#allocation3]] %s0
  $region1: #{vgg_forward.5} parent=0
    #allocation4 [shape = 'u8[1048576]{0}', space=vmem, size = 0x100000, scoped, tag = 'input window, operand 2']
    #allocation5 [shape = 's32[2]{0}', space=sflag, size = 0x8, scoped, tag = 'scoped memory for vgg_forward.5']
    %9 = vsyncpa [#allocation5], 0
    %s10 = scalar_lea.sflag [#allocation5], 1
    %11 = vsyncpa %s10, 0
    loop: start=0, step=1, limit=6
    $region2: #{vgg_forward.5} parent=1 // loop_pre_header
      _
    $region3: #{vgg_forward.5} parent=1 // loop_header
      %s13 = sphi 0, %s17
      %p14 = scmp.ge.s32.totalorder %s13, 6
      %s20 = sphi 0, %s32
      %s21 = sphi 0, %s28
      %s22 = sphi 0, %s20
      %s23 = sphi 0, %s21
      %s24 = sphi 0, %s22
      %s25 = sphi 0, %s23
      %s35 = sphi 0, %s37
      %s38 = sphi 0, %s35
      %s39 = sphi 0, %s38
      %s55 = sphi 0, %s39
      %s63 = sphi 0, %s65
      %s66 = sphi 0, %s63
      %s67 = sphi 0, %s66
      %s83 = sphi 0, %s67
      %s89 = sphi 0, %s91
      %s92 = sphi 0, %s89
      %s93 = sphi 0, %s92
      %s109 = sphi 0, %s93
    $region4: #{vgg_forward.5} parent=1 // loop_header_branch
      %16 = sbr.rel (%p14) target = $region8
    $region5: #{vgg_forward.5} parent=1 // loop_body
      %s18 = ssub.s32 %s13, 1
      %s19 = ssub.s32 %s13, 2
      %s26 = sadd.s32 1, %s21
      %p27 = scmp.ge.s32.totalorder %s26, 1
      %s28 = scalar_select %p27, 0, %s26
      %s29 = sadd.s32 1, %s20
      %s30 = scalar_select %p27, %s29, %s20
      %p31 = scmp.ge.s32.totalorder %s30, 4
      %s32 = scalar_select %p31, 0, %s30
      %s33 = ssub.s32 %s21, %s28
      %p34 = scmp.eq.s32.totalorder %s33, 0
      %s36 = sadd.s32 %s35, 1
      %s37 = scalar_select %p34, %s35, %s36
      %p40 = pneg %p34
      %p41 = scmp.eq.s32.totalorder %s13, 3
      %p42 = por %p40, %p41
      %p43 = scmp.ne.s32.totalorder %s35, %s38
      %p44 = scmp.eq.s32.totalorder %s13, 0
      %p45 = por %p43, %p44
      %p46 = scmp.ne.s32.totalorder %s35, %s38
      %p47 = scmp.eq.s32.totalorder %s18, 3
      %p48 = por %p46, %p47
      %p49 = scmp.ne.s32.totalorder %s38, %s39
      %p50 = scmp.eq.s32.totalorder %s18, 0
      %p51 = por %p49, %p50
      %p52 = scmp.ne.s32.totalorder %s38, %s39
      %p53 = scmp.eq.s32.totalorder %s19, 3
      %p54 = por %p52, %p53
      %p56 = scmp.ne.s32.totalorder %s39, %s55
      %p57 = scmp.eq.s32.totalorder %s19, 0
      %p58 = por %p56, %p57
      %s59 = ssub.s32 %s21, %s28
      %s60 = ssub.s32 %s20, %s32
      %s61 = sor.u32 %s59, %s60
      %p62 = scmp.eq.s32.totalorder %s61, 0
      %s64 = sadd.s32 %s63, 1
      %s65 = scalar_select %p62, %s63, %s64
      %p68 = pneg %p62
      %p69 = scmp.eq.s32.totalorder %s13, 3
      %p70 = por %p68, %p69
      %p71 = scmp.ne.s32.totalorder %s63, %s66
      %p72 = scmp.eq.s32.totalorder %s13, 0
      %p73 = por %p71, %p72
      %p74 = scmp.ne.s32.totalorder %s63, %s66
      %p75 = scmp.eq.s32.totalorder %s18, 3
      %p76 = por %p74, %p75
      %p77 = scmp.ne.s32.totalorder %s66, %s67
      %p78 = scmp.eq.s32.totalorder %s18, 0
      %p79 = por %p77, %p78
      %p80 = scmp.ne.s32.totalorder %s66, %s67
      %p81 = scmp.eq.s32.totalorder %s19, 3
      %p82 = por %p80, %p81
      %p84 = scmp.ne.s32.totalorder %s67, %s83
      %p85 = scmp.eq.s32.totalorder %s19, 0
      %p86 = por %p84, %p85
      %s87 = ssub.s32 %s20, %s32
      %p88 = scmp.eq.s32.totalorder %s87, 0
      %s90 = sadd.s32 %s89, 1
      %s91 = scalar_select %p88, %s89, %s90
      %p94 = pneg %p88
      %p95 = scmp.eq.s32.totalorder %s13, 3
      %p96 = por %p94, %p95
      %p97 = scmp.ne.s32.totalorder %s89, %s92
      %p98 = scmp.eq.s32.totalorder %s13, 0
      %p99 = por %p97, %p98
      %p100 = scmp.ne.s32.totalorder %s89, %s92
      %p101 = scmp.eq.s32.totalorder %s18, 3
      %p102 = por %p100, %p101
      %p103 = scmp.ne.s32.totalorder %s92, %s93
      %p104 = scmp.eq.s32.totalorder %s18, 0
      %p105 = por %p103, %p104
      %p106 = scmp.ne.s32.totalorder %s92, %s93
      %p107 = scmp.eq.s32.totalorder %s19, 3
      %p108 = por %p106, %p107
      %p110 = scmp.ne.s32.totalorder %s93, %s109
      %p111 = scmp.eq.s32.totalorder %s19, 0
      %p112 = por %p110, %p111
      %p113 = scmp.le.s32.totalorder 1, %s13
      %p114 = scmp.lt.s32.totalorder %s13, 5
      %p115 = pnand %p113, %p114
      %p116 = pneg %p115
      // Predicated region
      $region9: #{vgg_forward.5} parent=5 // pred_check
        _
      $region10: #{vgg_forward.5} parent=5 // pred_check_branch
        %118 = sbr.rel (%p115) target = $region12
      $region11: #{vgg_forward.5} parent=5 // pred_region
        %s119 = ssub.s32 %s13, 1
        // Predicated region
        $region13: #{vgg_forward.5} parent=11 // pred_check
          %p120 = pneg %p51
        $region14: #{vgg_forward.5} parent=11 // pred_check_branch
          %122 = sbr.rel (%p120) target = $region16
        $region15: #{vgg_forward.5} parent=11 // pred_region
          %s123 = smul.u32 4, %s23
          %p124 = scmp.lt.s32.totalorder %s123, 3
          %s125 = scalar_select %p124, %s123, 3
          %s126 = smul.addr %s125, 2
          %s127 = scalar_lea.vmem %s1, %s126
          %s128 = smul.u32 4, %s23
        $region16: #{vgg_forward.5} parent=11 // pred_fallthru
          _
      $region12: #{vgg_forward.5} parent=5 // pred_fallthru
        _
      %p129 = scmp.lt.s32.totalorder %s13, 4
      // Predicated region
      $region17: #{vgg_forward.5} parent=5 // pred_check
        %p130 = pneg %p129
      $region18: #{vgg_forward.5} parent=5 // pred_check_branch
        %132 = sbr.rel (%p130) target = $region20
      $region19: #{vgg_forward.5} parent=5 // pred_region
        // Predicated region
        $region21: #{vgg_forward.5} parent=19 // pred_check
          %p133 = pneg %p73
        $region22: #{vgg_forward.5} parent=19 // pred_check_branch
          %135 = sbr.rel (%p133) target = $region24
        $region23: #{vgg_forward.5} parent=19 // pred_region
          %s136 = sand.u32 %s63, 1
          %s137 = scalar_lea.sflag [#allocation5], %s136
          %s138 = sand.u32 %s63, 1
          %s139 = smul.addr %s138, 1024
          %s140 = scalar_lea.vmem [#allocation4], %s139
          %s141 = smul.u32 16, %s21
          %s142 = smul.u32 8, %s20
          %s144 = ssub.s32 16384, 16384
          %145 = vsyncadd %s137, %s144
          %s146 = smul.addr %s141, 32
          %s147 = sadd.s32 %s142, %s146
          %s148 = smul.addr %s147, 128
          %s149 = scalar_lea.hbm %s2, %s148
          %s150 = sshll.u32 %s140, 4
          %s151 = int_to_ptr.vmem [resolvable:$true] %s150
          %156 = dma.hbm_to_vmem [thread:$0]  %s149, 16384, %s151, %s137, 4096, 1024, 64
        $region24: #{vgg_forward.5} parent=19 // pred_fallthru
          _
      $region20: #{vgg_forward.5} parent=5 // pred_fallthru
        _
      %p157 = scmp.le.s32.totalorder 1, %s13
      %p158 = scmp.lt.s32.totalorder %s13, 5
      %p159 = pnand %p157, %p158
      %p160 = pneg %p159
      // Predicated region
      $region25: #{vgg_forward.5} parent=5 // pred_check
        _
      $region26: #{vgg_forward.5} parent=5 // pred_check_branch
        %162 = sbr.rel (%p159) target = $region28
      $region27: #{vgg_forward.5} parent=5 // pred_region
        %s163 = ssub.s32 %s13, 1
        %s164 = sand.u32 %s66, 1
        %s165 = scalar_lea.sflag [#allocation5], %s164
        %s166 = sand.u32 %s66, 1
        %s167 = smul.addr %s166, 1024
        %s168 = scalar_lea.vmem [#allocation4], %s167
        // Predicated region
        $region29: #{vgg_forward.5} parent=27 // pred_check
          %p169 = pneg %p79
        $region30: #{vgg_forward.5} parent=27 // pred_check_branch
          %171 = sbr.rel (%p169) target = $region32
        $region31: #{vgg_forward.5} parent=27 // pred_region
          %172 = dma.done %s165, 16384
        $region32: #{vgg_forward.5} parent=27 // pred_fallthru
          _
        %s173 = smul.u32 4, %s23
        %p174 = scmp.lt.s32.totalorder %s173, 3
        %s175 = scalar_select %p174, %s173, 3
        %s176 = smul.addr %s175, 2
        %s177 = scalar_lea.vmem %s1, %s176
        %p178 = pneg %p51
        %p179 = pneg %p48
        %s180 = sand.u32 %s66, 1
        %s181 = scalar_lea.sflag [#allocation5], %s180
        %s182 = sand.u32 %s66, 1
        %s183 = smul.addr %s182, 1024
        %s184 = scalar_lea.vmem [#allocation4], %s183
        %p185 = pneg %p79
        %p186 = pneg %p76
        %p187 = pneg %p105
        %p188 = pneg %p102
        %s189 = smul.u32 8, %s22
        %p190 = scmp.lt.s32.totalorder %s189, 31
        %s191 = scalar_select %p190, %s189, 31
        %s192 = smul.addr %s191, 2
        %s193 = scalar_lea.vmem %s3, %s192
        %s194 = smul.u32 4, %s23
        %p195 = scmp.lt.s32.totalorder %s194, 3
        %s196 = scalar_select %p195, %s194, 3
        %s197 = smul.addr %s196, 2
        %s198 = scalar_lea.vmem %s1, %s197
        %s199 = smul.u32 4, %s23
        %s200 = smul.u32 16, %s23
        %s201 = smul.u32 8, %s22
        %s202 = smul.u32 8, %s22
        %p203 = scmp.lt.s32.totalorder %s202, 31
        %s204 = scalar_select %p203, %s202, 31
        %s205 = smul.addr %s204, 2
        %s206 = scalar_lea.vmem %s3, %s205
        %s207 = smul.u32 8, %s22
        %p208 = scmp.eq.s32.totalorder %s23, 0
        // Predicated region
        $region33: #{vgg_forward.5} parent=27 // pred_check
          %p209 = pneg %p208
        $region34: #{vgg_forward.5} parent=27 // pred_check_branch
          %211 = sbr.rel (%p209) target = $region36
        $region35: #{vgg_forward.5} parent=27 // pred_region
          %212 = vst [vmem:[%s206] sm:$0xff] 0.0
          %213 = vst [vmem:[%s206 + $0x8] sm:$0xff] 0.0
        $region36: #{vgg_forward.5} parent=27 // pred_fallthru
          _
        %v214 = vld [vmem:[%s168] sm:$0xff]
        %v215 = vld [vmem:[%s168 + $0x8] sm:$0xff]
        %v216 = vld [vmem:[%s168 + $0x10] sm:$0xff]
        %v217 = vld [vmem:[%s168 + $0x18] sm:$0xff]
        %v218 = vld [vmem:[%s168 + $0x20] sm:$0xff]
        %v219 = vld [vmem:[%s168 + $0x28] sm:$0xff]
        %v220 = vld [vmem:[%s168 + $0x30] sm:$0xff]
        %v221 = vld [vmem:[%s168 + $0x38] sm:$0xff]
        %v222 = vld [vmem:[%s168 + $0x40] sm:$0xff]
        %v223 = vld [vmem:[%s168 + $0x48] sm:$0xff]
        %v224 = vld [vmem:[%s168 + $0x50] sm:$0xff]
        %v225 = vld [vmem:[%s168 + $0x58] sm:$0xff]
        %v226 = vld [vmem:[%s168 + $0x60] sm:$0xff]
        %v227 = vld [vmem:[%s168 + $0x68] sm:$0xff]
        %v228 = vld [vmem:[%s168 + $0x70] sm:$0xff]
        %v229 = vld [vmem:[%s168 + $0x78] sm:$0xff]
        %v230 = vld [vmem:[%s168 + $0x80] sm:$0xff]
        %v231 = vld [vmem:[%s168 + $0x88] sm:$0xff]
        %v232 = vld [vmem:[%s168 + $0x90] sm:$0xff]
        %v233 = vld [vmem:[%s168 + $0x98] sm:$0xff]
        %v234 = vld [vmem:[%s168 + $0xa0] sm:$0xff]
        %v235 = vld [vmem:[%s168 + $0xa8] sm:$0xff]
        %v236 = vld [vmem:[%s168 + $0xb0] sm:$0xff]
        %v237 = vld [vmem:[%s168 + $0xb8] sm:$0xff]
        %v238 = vld [vmem:[%s168 + $0xc0] sm:$0xff]
        %v239 = vld [vmem:[%s168 + $0xc8] sm:$0xff]
        %v240 = vld [vmem:[%s168 + $0xd0] sm:$0xff]
        %v241 = vld [vmem:[%s168 + $0xd8] sm:$0xff]
        %v242 = vld [vmem:[%s168 + $0xe0] sm:$0xff]
        %v243 = vld [vmem:[%s168 + $0xe8] sm:$0xff]
        %v244 = vld [vmem:[%s168 + $0xf0] sm:$0xff]
        %v245 = vld [vmem:[%s168 + $0xf8] sm:$0xff]
        %v246 = vld [vmem:[%s168 + $0x100] sm:$0xff]
        %v247 = vld [vmem:[%s168 + $0x108] sm:$0xff]
        %v248 = vld [vmem:[%s168 + $0x110] sm:$0xff]
        %v249 = vld [vmem:[%s168 + $0x118] sm:$0xff]
        %v250 = vld [vmem:[%s168 + $0x120] sm:$0xff]
        %v251 = vld [vmem:[%s168 + $0x128] sm:$0xff]
        %v252 = vld [vmem:[%s168 + $0x130] sm:$0xff]
        %v253 = vld [vmem:[%s168 + $0x138] sm:$0xff]
        %v254 = vld [vmem:[%s168 + $0x140] sm:$0xff]
        %v255 = vld [vmem:[%s168 + $0x148] sm:$0xff]
        %v256 = vld [vmem:[%s168 + $0x150] sm:$0xff]
        %v257 = vld [vmem:[%s168 + $0x158] sm:$0xff]
        %v258 = vld [vmem:[%s168 + $0x160] sm:$0xff]
        %v259 = vld [vmem:[%s168 + $0x168] sm:$0xff]
        %v260 = vld [vmem:[%s168 + $0x170] sm:$0xff]
        %v261 = vld [vmem:[%s168 + $0x178] sm:$0xff]
        %v262 = vld [vmem:[%s168 + $0x180] sm:$0xff]
        %v263 = vld [vmem:[%s168 + $0x188] sm:$0xff]
        %v264 = vld [vmem:[%s168 + $0x190] sm:$0xff]
        %v265 = vld [vmem:[%s168 + $0x198] sm:$0xff]
        %v266 = vld [vmem:[%s168 + $0x1a0] sm:$0xff]
        %v267 = vld [vmem:[%s168 + $0x1a8] sm:$0xff]
        %v268 = vld [vmem:[%s168 + $0x1b0] sm:$0xff]
        %v269 = vld [vmem:[%s168 + $0x1b8] sm:$0xff]
        %v270 = vld [vmem:[%s168 + $0x1c0] sm:$0xff]
        %v271 = vld [vmem:[%s168 + $0x1c8] sm:$0xff]
        %v272 = vld [vmem:[%s168 + $0x1d0] sm:$0xff]
        %v273 = vld [vmem:[%s168 + $0x1d8] sm:$0xff]
        %v274 = vld [vmem:[%s168 + $0x1e0] sm:$0xff]
        %v275 = vld [vmem:[%s168 + $0x1e8] sm:$0xff]
        %v276 = vld [vmem:[%s168 + $0x1f0] sm:$0xff]
        %v277 = vld [vmem:[%s168 + $0x1f8] sm:$0xff]
        %v278 = vld [vmem:[%s168 + $0x200] sm:$0xff]
        %v279 = vld [vmem:[%s168 + $0x208] sm:$0xff]
        %v280 = vld [vmem:[%s168 + $0x210] sm:$0xff]
        %v281 = vld [vmem:[%s168 + $0x218] sm:$0xff]
        %v282 = vld [vmem:[%s168 + $0x220] sm:$0xff]
        %v283 = vld [vmem:[%s168 + $0x228] sm:$0xff]
        %v284 = vld [vmem:[%s168 + $0x230] sm:$0xff]
        %v285 = vld [vmem:[%s168 + $0x238] sm:$0xff]
        %v286 = vld [vmem:[%s168 + $0x240] sm:$0xff]
        %v287 = vld [vmem:[%s168 + $0x248] sm:$0xff]
        %v288 = vld [vmem:[%s168 + $0x250] sm:$0xff]
        %v289 = vld [vmem:[%s168 + $0x258] sm:$0xff]
        %v290 = vld [vmem:[%s168 + $0x260] sm:$0xff]
        %v291 = vld [vmem:[%s168 + $0x268] sm:$0xff]
        %v292 = vld [vmem:[%s168 + $0x270] sm:$0xff]
        %v293 = vld [vmem:[%s168 + $0x278] sm:$0xff]
        %v294 = vld [vmem:[%s168 + $0x280] sm:$0xff]
        %v295 = vld [vmem:[%s168 + $0x288] sm:$0xff]
        %v296 = vld [vmem:[%s168 + $0x290] sm:$0xff]
        %v297 = vld [vmem:[%s168 + $0x298] sm:$0xff]
        %v298 = vld [vmem:[%s168 + $0x2a0] sm:$0xff]
        %v299 = vld [vmem:[%s168 + $0x2a8] sm:$0xff]
        %v300 = vld [vmem:[%s168 + $0x2b0] sm:$0xff]
        %v301 = vld [vmem:[%s168 + $0x2b8] sm:$0xff]
        %v302 = vld [vmem:[%s168 + $0x2c0] sm:$0xff]
        %v303 = vld [vmem:[%s168 + $0x2c8] sm:$0xff]
        %v304 = vld [vmem:[%s168 + $0x2d0] sm:$0xff]
        %v305 = vld [vmem:[%s168 + $0x2d8] sm:$0xff]
        %v306 = vld [vmem:[%s168 + $0x2e0] sm:$0xff]
        %v307 = vld [vmem:[%s168 + $0x2e8] sm:$0xff]
        %v308 = vld [vmem:[%s168 + $0x2f0] sm:$0xff]
        %v309 = vld [vmem:[%s168 + $0x2f8] sm:$0xff]
        %v310 = vld [vmem:[%s168 + $0x300] sm:$0xff]
        %v311 = vld [vmem:[%s168 + $0x308] sm:$0xff]
        %v312 = vld [vmem:[%s168 + $0x310] sm:$0xff]
        %v313 = vld [vmem:[%s168 + $0x318] sm:$0xff]
        %v314 = vld [vmem:[%s168 + $0x320] sm:$0xff]
        %v315 = vld [vmem:[%s168 + $0x328] sm:$0xff]
        %v316 = vld [vmem:[%s168 + $0x330] sm:$0xff]
        %v317 = vld [vmem:[%s168 + $0x338] sm:$0xff]
        %v318 = vld [vmem:[%s168 + $0x340] sm:$0xff]
        %v319 = vld [vmem:[%s168 + $0x348] sm:$0xff]
        %v320 = vld [vmem:[%s168 + $0x350] sm:$0xff]
        %v321 = vld [vmem:[%s168 + $0x358] sm:$0xff]
        %v322 = vld [vmem:[%s168 + $0x360] sm:$0xff]
        %v323 = vld [vmem:[%s168 + $0x368] sm:$0xff]
        %v324 = vld [vmem:[%s168 + $0x370] sm:$0xff]
        %v325 = vld [vmem:[%s168 + $0x378] sm:$0xff]
        %v326 = vld [vmem:[%s168 + $0x380] sm:$0xff]
        %v327 = vld [vmem:[%s168 + $0x388] sm:$0xff]
        %v328 = vld [vmem:[%s168 + $0x390] sm:$0xff]
        %v329 = vld [vmem:[%s168 + $0x398] sm:$0xff]
        %v330 = vld [vmem:[%s168 + $0x3a0] sm:$0xff]
        %v331 = vld [vmem:[%s168 + $0x3a8] sm:$0xff]
        %v332 = vld [vmem:[%s168 + $0x3b0] sm:$0xff]
        %v333 = vld [vmem:[%s168 + $0x3b8] sm:$0xff]
        %v334 = vld [vmem:[%s168 + $0x3c0] sm:$0xff]
        %v335 = vld [vmem:[%s168 + $0x3c8] sm:$0xff]
        %v336 = vld [vmem:[%s168 + $0x3d0] sm:$0xff]
        %v337 = vld [vmem:[%s168 + $0x3d8] sm:$0xff]
        %v338 = vld [vmem:[%s168 + $0x3e0] sm:$0xff]
        %v339 = vld [vmem:[%s168 + $0x3e8] sm:$0xff]
        %v340 = vld [vmem:[%s168 + $0x3f0] sm:$0xff]
        %v341 = vld [vmem:[%s168 + $0x3f8] sm:$0xff]
        %v342 = vunpack.c.l.s8.bf16 %v214
        %v343 = vunpack.c.l.s8.bf16 %v215
        %v344 = vunpack.c.l.s8.bf16 %v216
        %v345 = vunpack.c.l.s8.bf16 %v217
        %v346 = vunpack.c.l.s8.bf16 %v218
        %v347 = vunpack.c.l.s8.bf16 %v219
        %v348 = vunpack.c.l.s8.bf16 %v220
        %v349 = vunpack.c.l.s8.bf16 %v221
        %v350 = vunpack.c.h.s8.bf16 %v214
        %v351 = vunpack.c.h.s8.bf16 %v215
        %v352 = vunpack.c.h.s8.bf16 %v216
        %v353 = vunpack.c.h.s8.bf16 %v217
        %v354 = vunpack.c.h.s8.bf16 %v218
        %v355 = vunpack.c.h.s8.bf16 %v219
        %v356 = vunpack.c.h.s8.bf16 %v220
        %v357 = vunpack.c.h.s8.bf16 %v221
        %v358 = vunpack.c.l.s8.bf16 %v222
        %v359 = vunpack.c.l.s8.bf16 %v223
        %v360 = vunpack.c.l.s8.bf16 %v224
        %v361 = vunpack.c.l.s8.bf16 %v225
        %v362 = vunpack.c.l.s8.bf16 %v226
        %v363 = vunpack.c.l.s8.bf16 %v227
        %v364 = vunpack.c.l.s8.bf16 %v228
        %v365 = vunpack.c.l.s8.bf16 %v229
        %v366 = vunpack.c.h.s8.bf16 %v222
        %v367 = vunpack.c.h.s8.bf16 %v223
        %v368 = vunpack.c.h.s8.bf16 %v224
        %v369 = vunpack.c.h.s8.bf16 %v225
        %v370 = vunpack.c.h.s8.bf16 %v226
        %v371 = vunpack.c.h.s8.bf16 %v227
        %v372 = vunpack.c.h.s8.bf16 %v228
        %v373 = vunpack.c.h.s8.bf16 %v229
        %v374 = vunpack.c.l.s8.bf16 %v230
        %v375 = vunpack.c.l.s8.bf16 %v231
        %v376 = vunpack.c.l.s8.bf16 %v232
        %v377 = vunpack.c.l.s8.bf16 %v233
        %v378 = vunpack.c.l.s8.bf16 %v234
        %v379 = vunpack.c.l.s8.bf16 %v235
        %v380 = vunpack.c.l.s8.bf16 %v236
        %v381 = vunpack.c.l.s8.bf16 %v237
        %v382 = vunpack.c.h.s8.bf16 %v230
        %v383 = vunpack.c.h.s8.bf16 %v231
        %v384 = vunpack.c.h.s8.bf16 %v232
        %v385 = vunpack.c.h.s8.bf16 %v233
        %v386 = vunpack.c.h.s8.bf16 %v234
        %v387 = vunpack.c.h.s8.bf16 %v235
        %v388 = vunpack.c.h.s8.bf16 %v236
        %v389 = vunpack.c.h.s8.bf16 %v237
        %v390 = vunpack.c.l.s8.bf16 %v238
        %v391 = vunpack.c.l.s8.bf16 %v239
        %v392 = vunpack.c.l.s8.bf16 %v240
        %v393 = vunpack.c.l.s8.bf16 %v241
        %v394 = vunpack.c.l.s8.bf16 %v242
        %v395 = vunpack.c.l.s8.bf16 %v243
        %v396 = vunpack.c.l.s8.bf16 %v244
        %v397 = vunpack.c.l.s8.bf16 %v245
        %v398 = vunpack.c.h.s8.bf16 %v238
        %v399 = vunpack.c.h.s8.bf16 %v239
        %v400 = vunpack.c.h.s8.bf16 %v240
        %v401 = vunpack.c.h.s8.bf16 %v241
        %v402 = vunpack.c.h.s8.bf16 %v242
        %v403 = vunpack.c.h.s8.bf16 %v243
        %v404 = vunpack.c.h.s8.bf16 %v244
        %v405 = vunpack.c.h.s8.bf16 %v245
        %v406 = vunpack.c.l.s8.bf16 %v246
        %v407 = vunpack.c.l.s8.bf16 %v247
        %v408 = vunpack.c.l.s8.bf16 %v248
        %v409 = vunpack.c.l.s8.bf16 %v249
        %v410 = vunpack.c.l.s8.bf16 %v250
        %v411 = vunpack.c.l.s8.bf16 %v251
        %v412 = vunpack.c.l.s8.bf16 %v252
        %v413 = vunpack.c.l.s8.bf16 %v253
        %v414 = vunpack.c.h.s8.bf16 %v246
        %v415 = vunpack.c.h.s8.bf16 %v247
        %v416 = vunpack.c.h.s8.bf16 %v248
        %v417 = vunpack.c.h.s8.bf16 %v249
        %v418 = vunpack.c.h.s8.bf16 %v250
        %v419 = vunpack.c.h.s8.bf16 %v251
        %v420 = vunpack.c.h.s8.bf16 %v252
        %v421 = vunpack.c.h.s8.bf16 %v253
        %v422 = vunpack.c.l.s8.bf16 %v254
        %v423 = vunpack.c.l.s8.bf16 %v255
        %v424 = vunpack.c.l.s8.bf16 %v256
        %v425 = vunpack.c.l.s8.bf16 %v257
        %v426 = vunpack.c.l.s8.bf16 %v258
        %v427 = vunpack.c.l.s8.bf16 %v259
        %v428 = vunpack.c.l.s8.bf16 %v260
        %v429 = vunpack.c.l.s8.bf16 %v261
        %v430 = vunpack.c.h.s8.bf16 %v254
        %v431 = vunpack.c.h.s8.bf16 %v255
        %v432 = vunpack.c.h.s8.bf16 %v256
        %v433 = vunpack.c.h.s8.bf16 %v257
        %v434 = vunpack.c.h.s8.bf16 %v258
        %v435 = vunpack.c.h.s8.bf16 %v259
        %v436 = vunpack.c.h.s8.bf16 %v260
        %v437 = vunpack.c.h.s8.bf16 %v261
        %v438 = vunpack.c.l.s8.bf16 %v262
        %v439 = vunpack.c.l.s8.bf16 %v263
        %v440 = vunpack.c.l.s8.bf16 %v264
        %v441 = vunpack.c.l.s8.bf16 %v265
        %v442 = vunpack.c.l.s8.bf16 %v266
        %v443 = vunpack.c.l.s8.bf16 %v267
        %v444 = vunpack.c.l.s8.bf16 %v268
        %v445 = vunpack.c.l.s8.bf16 %v269
        %v446 = vunpack.c.h.s8.bf16 %v262
        %v447 = vunpack.c.h.s8.bf16 %v263
        %v448 = vunpack.c.h.s8.bf16 %v264
        %v449 = vunpack.c.h.s8.bf16 %v265
        %v450 = vunpack.c.h.s8.bf16 %v266
        %v451 = vunpack.c.h.s8.bf16 %v267
        %v452 = vunpack.c.h.s8.bf16 %v268
        %v453 = vunpack.c.h.s8.bf16 %v269
        %v454 = vunpack.c.l.s8.bf16 %v270
        %v455 = vunpack.c.l.s8.bf16 %v271
        %v456 = vunpack.c.l.s8.bf16 %v272
        %v457 = vunpack.c.l.s8.bf16 %v273
        %v458 = vunpack.c.l.s8.bf16 %v274
        %v459 = vunpack.c.l.s8.bf16 %v275
        %v460 = vunpack.c.l.s8.bf16 %v276
        %v461 = vunpack.c.l.s8.bf16 %v277
        %v462 = vunpack.c.h.s8.bf16 %v270
        %v463 = vunpack.c.h.s8.bf16 %v271
        %v464 = vunpack.c.h.s8.bf16 %v272
        %v465 = vunpack.c.h.s8.bf16 %v273
        %v466 = vunpack.c.h.s8.bf16 %v274
        %v467 = vunpack.c.h.s8.bf16 %v275
        %v468 = vunpack.c.h.s8.bf16 %v276
        %v469 = vunpack.c.h.s8.bf16 %v277
        %v470 = vunpack.c.l.s8.bf16 %v278
        %v471 = vunpack.c.l.s8.bf16 %v279
        %v472 = vunpack.c.l.s8.bf16 %v280
        %v473 = vunpack.c.l.s8.bf16 %v281
        %v474 = vunpack.c.l.s8.bf16 %v282
        %v475 = vunpack.c.l.s8.bf16 %v283
        %v476 = vunpack.c.l.s8.bf16 %v284
        %v477 = vunpack.c.l.s8.bf16 %v285
        %v478 = vunpack.c.h.s8.bf16 %v278
        %v479 = vunpack.c.h.s8.bf16 %v279
        %v480 = vunpack.c.h.s8.bf16 %v280
        %v481 = vunpack.c.h.s8.bf16 %v281
        %v482 = vunpack.c.h.s8.bf16 %v282
        %v483 = vunpack.c.h.s8.bf16 %v283
        %v484 = vunpack.c.h.s8.bf16 %v284
        %v485 = vunpack.c.h.s8.bf16 %v285
        %v486 = vunpack.c.l.s8.bf16 %v286
        %v487 = vunpack.c.l.s8.bf16 %v287
        %v488 = vunpack.c.l.s8.bf16 %v288
        %v489 = vunpack.c.l.s8.bf16 %v289
        %v490 = vunpack.c.l.s8.bf16 %v290
        %v491 = vunpack.c.l.s8.bf16 %v291
        %v492 = vunpack.c.l.s8.bf16 %v292
        %v493 = vunpack.c.l.s8.bf16 %v293
        %v494 = vunpack.c.h.s8.bf16 %v286
        %v495 = vunpack.c.h.s8.bf16 %v287
        %v496 = vunpack.c.h.s8.bf16 %v288
        %v497 = vunpack.c.h.s8.bf16 %v289
        %v498 = vunpack.c.h.s8.bf16 %v290
        %v499 = vunpack.c.h.s8.bf16 %v291
        %v500 = vunpack.c.h.s8.bf16 %v292
        %v501 = vunpack.c.h.s8.bf16 %v293
        %v502 = vunpack.c.l.s8.bf16 %v294
        %v503 = vunpack.c.l.s8.bf16 %v295
        %v504 = vunpack.c.l.s8.bf16 %v296
        %v505 = vunpack.c.l.s8.bf16 %v297
        %v506 = vunpack.c.l.s8.bf16 %v298
        %v507 = vunpack.c.l.s8.bf16 %v299
        %v508 = vunpack.c.l.s8.bf16 %v300
        %v509 = vunpack.c.l.s8.bf16 %v301
        %v510 = vunpack.c.h.s8.bf16 %v294
        %v511 = vunpack.c.h.s8.bf16 %v295
        %v512 = vunpack.c.h.s8.bf16 %v296
        %v513 = vunpack.c.h.s8.bf16 %v297
        %v514 = vunpack.c.h.s8.bf16 %v298
        %v515 = vunpack.c.h.s8.bf16 %v299
        %v516 = vunpack.c.h.s8.bf16 %v300
        %v517 = vunpack.c.h.s8.bf16 %v301
        %v518 = vunpack.c.l.s8.bf16 %v302
        %v519 = vunpack.c.l.s8.bf16 %v303
        %v520 = vunpack.c.l.s8.bf16 %v304
        %v521 = vunpack.c.l.s8.bf16 %v305
        %v522 = vunpack.c.l.s8.bf16 %v306
        %v523 = vunpack.c.l.s8.bf16 %v307
        %v524 = vunpack.c.l.s8.bf16 %v308
        %v525 = vunpack.c.l.s8.bf16 %v309
        %v526 = vunpack.c.h.s8.bf16 %v302
        %v527 = vunpack.c.h.s8.bf16 %v303
        %v528 = vunpack.c.h.s8.bf16 %v304
        %v529 = vunpack.c.h.s8.bf16 %v305
        %v530 = vunpack.c.h.s8.bf16 %v306
        %v531 = vunpack.c.h.s8.bf16 %v307
        %v532 = vunpack.c.h.s8.bf16 %v308
        %v533 = vunpack.c.h.s8.bf16 %v309
        %v534 = vunpack.c.l.s8.bf16 %v310
        %v535 = vunpack.c.l.s8.bf16 %v311
        %v536 = vunpack.c.l.s8.bf16 %v312
        %v537 = vunpack.c.l.s8.bf16 %v313
        %v538 = vunpack.c.l.s8.bf16 %v314
        %v539 = vunpack.c.l.s8.bf16 %v315
        %v540 = vunpack.c.l.s8.bf16 %v316
        %v541 = vunpack.c.l.s8.bf16 %v317
        %v542 = vunpack.c.h.s8.bf16 %v310
        %v543 = vunpack.c.h.s8.bf16 %v311
        %v544 = vunpack.c.h.s8.bf16 %v312
        %v545 = vunpack.c.h.s8.bf16 %v313
        %v546 = vunpack.c.h.s8.bf16 %v314
        %v547 = vunpack.c.h.s8.bf16 %v315
        %v548 = vunpack.c.h.s8.bf16 %v316
        %v549 = vunpack.c.h.s8.bf16 %v317
        %v550 = vunpack.c.l.s8.bf16 %v318
        %v551 = vunpack.c.l.s8.bf16 %v319
        %v552 = vunpack.c.l.s8.bf16 %v320
        %v553 = vunpack.c.l.s8.bf16 %v321
        %v554 = vunpack.c.l.s8.bf16 %v322
        %v555 = vunpack.c.l.s8.bf16 %v323
        %v556 = vunpack.c.l.s8.bf16 %v324
        %v557 = vunpack.c.l.s8.bf16 %v325
        %v558 = vunpack.c.h.s8.bf16 %v318
        %v559 = vunpack.c.h.s8.bf16 %v319
        %v560 = vunpack.c.h.s8.bf16 %v320
        %v561 = vunpack.c.h.s8.bf16 %v321
        %v562 = vunpack.c.h.s8.bf16 %v322
        %v563 = vunpack.c.h.s8.bf16 %v323
        %v564 = vunpack.c.h.s8.bf16 %v324
        %v565 = vunpack.c.h.s8.bf16 %v325
        %v566 = vunpack.c.l.s8.bf16 %v326
        %v567 = vunpack.c.l.s8.bf16 %v327
        %v568 = vunpack.c.l.s8.bf16 %v328
        %v569 = vunpack.c.l.s8.bf16 %v329
        %v570 = vunpack.c.l.s8.bf16 %v330
        %v571 = vunpack.c.l.s8.bf16 %v331
        %v572 = vunpack.c.l.s8.bf16 %v332
        %v573 = vunpack.c.l.s8.bf16 %v333
        %v574 = vunpack.c.h.s8.bf16 %v326
        %v575 = vunpack.c.h.s8.bf16 %v327
        %v576 = vunpack.c.h.s8.bf16 %v328
        %v577 = vunpack.c.h.s8.bf16 %v329
        %v578 = vunpack.c.h.s8.bf16 %v330
        %v579 = vunpack.c.h.s8.bf16 %v331
        %v580 = vunpack.c.h.s8.bf16 %v332
        %v581 = vunpack.c.h.s8.bf16 %v333
        %v582 = vunpack.c.l.s8.bf16 %v334
        %v583 = vunpack.c.l.s8.bf16 %v335
        %v584 = vunpack.c.l.s8.bf16 %v336
        %v585 = vunpack.c.l.s8.bf16 %v337
        %v586 = vunpack.c.l.s8.bf16 %v338
        %v587 = vunpack.c.l.s8.bf16 %v339
        %v588 = vunpack.c.l.s8.bf16 %v340
        %v589 = vunpack.c.l.s8.bf16 %v341
        %v590 = vunpack.c.h.s8.bf16 %v334
        %v591 = vunpack.c.h.s8.bf16 %v335
        %v592 = vunpack.c.h.s8.bf16 %v336
        %v593 = vunpack.c.h.s8.bf16 %v337
        %v594 = vunpack.c.h.s8.bf16 %v338
        %v595 = vunpack.c.h.s8.bf16 %v339
        %v596 = vunpack.c.h.s8.bf16 %v340
        %v597 = vunpack.c.h.s8.bf16 %v341
        %v598 = vld [vmem:[%s198] sm:$0xff]
        %v600 = vcombine.high %v598, %v598
        %v602 = vunpack.c.l.s4 1983009808
        %v603 = vunpack.c.0.s8 %v602
        %v604 = vlaneseq
        %v605 = vshrl.u32 %v604, 7
        %v606 = vsub.s32 %v603, %v605
        %v607 = vrot.slane %v598, %v606
        %v609 = vunpack.c.l.s4 1983009808
        %v610 = vunpack.c.0.s8 %v609
        %v611 = vlaneseq
        %v612 = vshrl.u32 %v611, 7
        %v613 = vsub.s32 %v610, %v612
        %v614 = vrot.slane %v600, %v613
        %v615 = vcombine.high %v607, %v607
        %v616 = vcombine.high %v614, %v614
        %v621 = vpack.c.bf16 %v607, %v607
        %v622 = vpack.c.bf16 %v615, %v615
        %v623 = vpack.c.bf16 %v614, %v614
        %v624 = vpack.c.bf16 %v616, %v616
        %v625 = vld [vmem:[%s206] sm:$0xff]
        %v626 = vld [vmem:[%s206 + $0x8] sm:$0xff]
        %627 = vmatprep.subr.bf16.mxu0 %v343
        %628 = vmatpush1.bf16.msra.mxu0 %v342
        %629 = vmatprep.subr.bf16.mxu0 %v351
        %630 = vmatpush1.bf16.msra.mxu0 %v350
        %631 = vmatprep.subr.bf16.mxu0 %v359
        %632 = vmatpush1.bf16.msra.mxu0 %v358
        %633 = vmatprep.subr.bf16.mxu0 %v367
        %634 = vmatpush1.bf16.msra.mxu0 %v366
        %635 = vmatprep.subr.bf16.mxu0 %v375
        %636 = vmatpush1.bf16.msra.mxu0 %v374
        %637 = vmatprep.subr.bf16.mxu0 %v383
        %638 = vmatpush1.bf16.msra.mxu0 %v382
        %639 = vmatprep.subr.bf16.mxu0 %v391
        %640 = vmatpush1.bf16.msra.mxu0 %v390
        %641 = vmatprep.subr.bf16.mxu0 %v399
        %642 = vmatpush1.bf16.msra.mxu0 %v398
        %643 = vmatprep.subr.bf16.mxu0 %v407
        %644 = vmatpush1.bf16.msra.mxu0 %v406
        %645 = vmatprep.subr.bf16.mxu0 %v415
        %646 = vmatpush1.bf16.msra.mxu0 %v414
        %647 = vmatprep.subr.bf16.mxu0 %v423
        %648 = vmatpush1.bf16.msra.mxu0 %v422
        %649 = vmatprep.subr.bf16.mxu0 %v431
        %650 = vmatpush1.bf16.msra.mxu0 %v430
        %651 = vmatprep.subr.bf16.mxu0 %v439
        %652 = vmatpush1.bf16.msra.mxu0 %v438
        %653 = vmatprep.subr.bf16.mxu0 %v447
        %654 = vmatpush1.bf16.msra.mxu0 %v446
        %655 = vmatprep.subr.bf16.mxu0 %v455
        %656 = vmatpush1.bf16.msra.mxu0 %v454
        %657 = vmatprep.subr.bf16.mxu0 %v463
        %658 = vmatpush1.bf16.msra.mxu0 %v462
        %659 = vmatprep.mubr.bf16.mxu0 %v622
        %660 = vmatmul.mubr.bf16.gmra.mrb[0].mxu0 %v621
        %v661 = vpop.f32.mrb[0].mxu0
        %v662 = vadd.f32 0.0, %v661
        %v663 = vpop.f32.mrb[0].mxu0
        %v664 = vadd.f32 0.0, %v663
        %v665 = vpop.f32.mrb[0].mxu0
        %v666 = vpop.f32.mrb[0].mxu0
        %667 = vdwg.mxu0
        %668 = vmatprep.subr.bf16.mxu0 %v471
        %669 = vmatpush1.bf16.msra.mxu0 %v470
        %670 = vmatprep.subr.bf16.mxu0 %v479
        %671 = vmatpush1.bf16.msra.mxu0 %v478
        %672 = vmatprep.subr.bf16.mxu0 %v487
        %673 = vmatpush1.bf16.msra.mxu0 %v486
        %674 = vmatprep.subr.bf16.mxu0 %v495
        %675 = vmatpush1.bf16.msra.mxu0 %v494
        %676 = vmatprep.subr.bf16.mxu0 %v503
        %677 = vmatpush1.bf16.msra.mxu0 %v502
        %678 = vmatprep.subr.bf16.mxu0 %v511
        %679 = vmatpush1.bf16.msra.mxu0 %v510
        %680 = vmatprep.subr.bf16.mxu0 %v519
        %681 = vmatpush1.bf16.msra.mxu0 %v518
        %682 = vmatprep.subr.bf16.mxu0 %v527
        %683 = vmatpush1.bf16.msra.mxu0 %v526
        %684 = vmatprep.subr.bf16.mxu0 %v535
        %685 = vmatpush1.bf16.msra.mxu0 %v534
        %686 = vmatprep.subr.bf16.mxu0 %v543
        %687 = vmatpush1.bf16.msra.mxu0 %v542
        %688 = vmatprep.subr.bf16.mxu0 %v551
        %689 = vmatpush1.bf16.msra.mxu0 %v550
        %690 = vmatprep.subr.bf16.mxu0 %v559
        %691 = vmatpush1.bf16.msra.mxu0 %v558
        %692 = vmatprep.subr.bf16.mxu0 %v567
        %693 = vmatpush1.bf16.msra.mxu0 %v566
        %694 = vmatprep.subr.bf16.mxu0 %v575
        %695 = vmatpush1.bf16.msra.mxu0 %v574
        %696 = vmatprep.subr.bf16.mxu0 %v583
        %697 = vmatpush1.bf16.msra.mxu0 %v582
        %698 = vmatprep.subr.bf16.mxu0 %v591
        %699 = vmatpush1.bf16.msra.mxu0 %v590
        %700 = vmatprep.mubr.bf16.mxu0 %v624
        %701 = vmatmul.mubr.bf16.gmra.mrb[0].mxu0 %v623
        %v702 = vpop.f32.mrb[0].mxu0
        %v703 = vadd.f32 %v662, %v702
        %v704 = vpop.f32.mrb[0].mxu0
        %v705 = vadd.f32 %v664, %v704
        %v706 = vpop.f32.mrb[0].mxu0
        %v707 = vpop.f32.mrb[0].mxu0
        %708 = vdwg.mxu0
        %709 = vmatprep.subr.bf16.mxu0 %v345
        %710 = vmatpush1.bf16.msra.mxu0 %v344
        %711 = vmatprep.subr.bf16.mxu0 %v353
        %712 = vmatpush1.bf16.msra.mxu0 %v352
        %713 = vmatprep.subr.bf16.mxu0 %v361
        %714 = vmatpush1.bf16.msra.mxu0 %v360
        %715 = vmatprep.subr.bf16.mxu0 %v369
        %716 = vmatpush1.bf16.msra.mxu0 %v368
        %717 = vmatprep.subr.bf16.mxu0 %v377
        %718 = vmatpush1.bf16.msra.mxu0 %v376
        %719 = vmatprep.subr.bf16.mxu0 %v385
        %720 = vmatpush1.bf16.msra.mxu0 %v384
        %721 = vmatprep.subr.bf16.mxu0 %v393
        %722 = vmatpush1.bf16.msra.mxu0 %v392
        %723 = vmatprep.subr.bf16.mxu0 %v401
        %724 = vmatpush1.bf16.msra.mxu0 %v400
        %725 = vmatprep.subr.bf16.mxu0 %v409
        %726 = vmatpush1.bf16.msra.mxu0 %v408
        %727 = vmatprep.subr.bf16.mxu0 %v417
        %728 = vmatpush1.bf16.msra.mxu0 %v416
        %729 = vmatprep.subr.bf16.mxu0 %v425
        %730 = vmatpush1.bf16.msra.mxu0 %v424
        %731 = vmatprep.subr.bf16.mxu0 %v433
        %732 = vmatpush1.bf16.msra.mxu0 %v432
        %733 = vmatprep.subr.bf16.mxu0 %v441
        %734 = vmatpush1.bf16.msra.mxu0 %v440
        %735 = vmatprep.subr.bf16.mxu0 %v449
        %736 = vmatpush1.bf16.msra.mxu0 %v448
        %737 = vmatprep.subr.bf16.mxu0 %v457
        %738 = vmatpush1.bf16.msra.mxu0 %v456
        %739 = vmatprep.subr.bf16.mxu0 %v465
        %740 = vmatpush1.bf16.msra.mxu0 %v464
        %741 = vmatprep.mubr.bf16.mxu0 %v622
        %742 = vmatmul.mubr.bf16.gmra.mrb[0].mxu0 %v621
        %v743 = vpop.f32.mrb[0].mxu0
        %v744 = vadd.f32 0.0, %v743
        %v745 = vpop.f32.mrb[0].mxu0
        %v746 = vadd.f32 0.0, %v745
        %v747 = vpop.f32.mrb[0].mxu0
        %v748 = vpop.f32.mrb[0].mxu0
        %749 = vdwg.mxu0
        %750 = vmatprep.subr.bf16.mxu0 %v473
        %751 = vmatpush1.bf16.msra.mxu0 %v472
        %752 = vmatprep.subr.bf16.mxu0 %v481
        %753 = vmatpush1.bf16.msra.mxu0 %v480
        %754 = vmatprep.subr.bf16.mxu0 %v489
        %755 = vmatpush1.bf16.msra.mxu0 %v488
        %756 = vmatprep.subr.bf16.mxu0 %v497
        %757 = vmatpush1.bf16.msra.mxu0 %v496
        %758 = vmatprep.subr.bf16.mxu0 %v505
        %759 = vmatpush1.bf16.msra.mxu0 %v504
        %760 = vmatprep.subr.bf16.mxu0 %v513
        %761 = vmatpush1.bf16.msra.mxu0 %v512
        %762 = vmatprep.subr.bf16.mxu0 %v521
        %763 = vmatpush1.bf16.msra.mxu0 %v520
        %764 = vmatprep.subr.bf16.mxu0 %v529
        %765 = vmatpush1.bf16.msra.mxu0 %v528
        %766 = vmatprep.subr.bf16.mxu0 %v537
        %767 = vmatpush1.bf16.msra.mxu0 %v536
        %768 = vmatprep.subr.bf16.mxu0 %v545
        %769 = vmatpush1.bf16.msra.mxu0 %v544
        %770 = vmatprep.subr.bf16.mxu0 %v553
        %771 = vmatpush1.bf16.msra.mxu0 %v552
        %772 = vmatprep.subr.bf16.mxu0 %v561
        %773 = vmatpush1.bf16.msra.mxu0 %v560
        %774 = vmatprep.subr.bf16.mxu0 %v569
        %775 = vmatpush1.bf16.msra.mxu0 %v568
        %776 = vmatprep.subr.bf16.mxu0 %v577
        %777 = vmatpush1.bf16.msra.mxu0 %v576
        %778 = vmatprep.subr.bf16.mxu0 %v585
        %779 = vmatpush1.bf16.msra.mxu0 %v584
        %780 = vmatprep.subr.bf16.mxu0 %v593
        %781 = vmatpush1.bf16.msra.mxu0 %v592
        %782 = vmatprep.mubr.bf16.mxu0 %v624
        %783 = vmatmul.mubr.bf16.gmra.mrb[0].mxu0 %v623
        %v784 = vpop.f32.mrb[0].mxu0
        %v785 = vadd.f32 %v744, %v784
        %v786 = vpop.f32.mrb[0].mxu0
        %v787 = vadd.f32 %v746, %v786
        %v788 = vpop.f32.mrb[0].mxu0
        %v789 = vpop.f32.mrb[0].mxu0
        %790 = vdwg.mxu0
        %791 = vmatprep.subr.bf16.mxu0 %v347
        %792 = vmatpush1.bf16.msra.mxu0 %v346
        %793 = vmatprep.subr.bf16.mxu0 %v355
        %794 = vmatpush1.bf16.msra.mxu0 %v354
        %795 = vmatprep.subr.bf16.mxu0 %v363
        %796 = vmatpush1.bf16.msra.mxu0 %v362
        %797 = vmatprep.subr.bf16.mxu0 %v371
        %798 = vmatpush1.bf16.msra.mxu0 %v370
        %799 = vmatprep.subr.bf16.mxu0 %v379
        %800 = vmatpush1.bf16.msra.mxu0 %v378
        %801 = vmatprep.subr.bf16.mxu0 %v387
        %802 = vmatpush1.bf16.msra.mxu0 %v386
        %803 = vmatprep.subr.bf16.mxu0 %v395
        %804 = vmatpush1.bf16.msra.mxu0 %v394
        %805 = vmatprep.subr.bf16.mxu0 %v403
        %806 = vmatpush1.bf16.msra.mxu0 %v402
        %807 = vmatprep.subr.bf16.mxu0 %v411
        %808 = vmatpush1.bf16.msra.mxu0 %v410
        %809 = vmatprep.subr.bf16.mxu0 %v419
        %810 = vmatpush1.bf16.msra.mxu0 %v418
        %811 = vmatprep.subr.bf16.mxu0 %v427
        %812 = vmatpush1.bf16.msra.mxu0 %v426
        %813 = vmatprep.subr.bf16.mxu0 %v435
        %814 = vmatpush1.bf16.msra.mxu0 %v434
        %815 = vmatprep.subr.bf16.mxu0 %v443
        %816 = vmatpush1.bf16.msra.mxu0 %v442
        %817 = vmatprep.subr.bf16.mxu0 %v451
        %818 = vmatpush1.bf16.msra.mxu0 %v450
        %819 = vmatprep.subr.bf16.mxu0 %v459
        %820 = vmatpush1.bf16.msra.mxu0 %v458
        %821 = vmatprep.subr.bf16.mxu0 %v467
        %822 = vmatpush1.bf16.msra.mxu0 %v466
        %823 = vmatprep.mubr.bf16.mxu0 %v622
        %824 = vmatmul.mubr.bf16.gmra.mrb[0].mxu0 %v621
        %v825 = vpop.f32.mrb[0].mxu0
        %v826 = vadd.f32 0.0, %v825
        %v827 = vpop.f32.mrb[0].mxu0
        %v828 = vadd.f32 0.0, %v827
        %v829 = vpop.f32.mrb[0].mxu0
        %v830 = vpop.f32.mrb[0].mxu0
        %831 = vdwg.mxu0
        %832 = vmatprep.subr.bf16.mxu0 %v475
        %833 = vmatpush1.bf16.msra.mxu0 %v474
        %834 = vmatprep.subr.bf16.mxu0 %v483
        %835 = vmatpush1.bf16.msra.mxu0 %v482
        %836 = vmatprep.subr.bf16.mxu0 %v491
        %837 = vmatpush1.bf16.msra.mxu0 %v490
        %838 = vmatprep.subr.bf16.mxu0 %v499
        %839 = vmatpush1.bf16.msra.mxu0 %v498
        %840 = vmatprep.subr.bf16.mxu0 %v507
        %841 = vmatpush1.bf16.msra.mxu0 %v506
        %842 = vmatprep.subr.bf16.mxu0 %v515
        %843 = vmatpush1.bf16.msra.mxu0 %v514
        %844 = vmatprep.subr.bf16.mxu0 %v523
        %845 = vmatpush1.bf16.msra.mxu0 %v522
        %846 = vmatprep.subr.bf16.mxu0 %v531
        %847 = vmatpush1.bf16.msra.mxu0 %v530
        %848 = vmatprep.subr.bf16.mxu0 %v539
        %849 = vmatpush1.bf16.msra.mxu0 %v538
        %850 = vmatprep.subr.bf16.mxu0 %v547
        %851 = vmatpush1.bf16.msra.mxu0 %v546
        %852 = vmatprep.subr.bf16.mxu0 %v555
        %853 = vmatpush1.bf16.msra.mxu0 %v554
        %854 = vmatprep.subr.bf16.mxu0 %v563
        %855 = vmatpush1.bf16.msra.mxu0 %v562
        %856 = vmatprep.subr.bf16.mxu0 %v571
        %857 = vmatpush1.bf16.msra.mxu0 %v570
        %858 = vmatprep.subr.bf16.mxu0 %v579
        %859 = vmatpush1.bf16.msra.mxu0 %v578
        %860 = vmatprep.subr.bf16.mxu0 %v587
        %861 = vmatpush1.bf16.msra.mxu0 %v586
        %862 = vmatprep.subr.bf16.mxu0 %v595
        %863 = vmatpush1.bf16.msra.mxu0 %v594
        %864 = vmatprep.mubr.bf16.mxu0 %v624
        %865 = vmatmul.mubr.bf16.gmra.mrb[0].mxu0 %v623
        %v866 = vpop.f32.mrb[0].mxu0
        %v867 = vadd.f32 %v826, %v866
        %v868 = vpop.f32.mrb[0].mxu0
        %v869 = vadd.f32 %v828, %v868
        %v870 = vpop.f32.mrb[0].mxu0
        %v871 = vpop.f32.mrb[0].mxu0
        %872 = vdwg.mxu0
        %873 = vmatprep.subr.bf16.mxu0 %v349
        %874 = vmatpush1.bf16.msra.mxu0 %v348
        %875 = vmatprep.subr.bf16.mxu0 %v357
        %876 = vmatpush1.bf16.msra.mxu0 %v356
        %877 = vmatprep.subr.bf16.mxu0 %v365
        %878 = vmatpush1.bf16.msra.mxu0 %v364
        %879 = vmatprep.subr.bf16.mxu0 %v373
        %880 = vmatpush1.bf16.msra.mxu0 %v372
        %881 = vmatprep.subr.bf16.mxu0 %v381
        %882 = vmatpush1.bf16.msra.mxu0 %v380
        %883 = vmatprep.subr.bf16.mxu0 %v389
        %884 = vmatpush1.bf16.msra.mxu0 %v388
        %885 = vmatprep.subr.bf16.mxu0 %v397
        %886 = vmatpush1.bf16.msra.mxu0 %v396
        %887 = vmatprep.subr.bf16.mxu0 %v405
        %888 = vmatpush1.bf16.msra.mxu0 %v404
        %889 = vmatprep.subr.bf16.mxu0 %v413
        %890 = vmatpush1.bf16.msra.mxu0 %v412
        %891 = vmatprep.subr.bf16.mxu0 %v421
        %892 = vmatpush1.bf16.msra.mxu0 %v420
        %893 = vmatprep.subr.bf16.mxu0 %v429
        %894 = vmatpush1.bf16.msra.mxu0 %v428
        %895 = vmatprep.subr.bf16.mxu0 %v437
        %896 = vmatpush1.bf16.msra.mxu0 %v436
        %897 = vmatprep.subr.bf16.mxu0 %v445
        %898 = vmatpush1.bf16.msra.mxu0 %v444
        %899 = vmatprep.subr.bf16.mxu0 %v453
        %900 = vmatpush1.bf16.msra.mxu0 %v452
        %901 = vmatprep.subr.bf16.mxu0 %v461
        %902 = vmatpush1.bf16.msra.mxu0 %v460
        %903 = vmatprep.subr.bf16.mxu0 %v469
        %904 = vmatpush1.bf16.msra.mxu0 %v468
        %905 = vmatprep.mubr.bf16.mxu0 %v622
        %906 = vmatmul.mubr.bf16.gmra.mrb[0].mxu0 %v621
        %v907 = vpop.f32.mrb[0].mxu0
        %v908 = vadd.f32 0.0, %v907
        %v909 = vpop.f32.mrb[0].mxu0
        %v910 = vadd.f32 0.0, %v909
        %v911 = vpop.f32.mrb[0].mxu0
        %v912 = vpop.f32.mrb[0].mxu0
        %913 = vdwg.mxu0
        %914 = vmatprep.subr.bf16.mxu0 %v477
        %915 = vmatpush1.bf16.msra.mxu0 %v476
        %916 = vmatprep.subr.bf16.mxu0 %v485
        %917 = vmatpush1.bf16.msra.mxu0 %v484
        %918 = vmatprep.subr.bf16.mxu0 %v493
        %919 = vmatpush1.bf16.msra.mxu0 %v492
        %920 = vmatprep.subr.bf16.mxu0 %v501
        %921 = vmatpush1.bf16.msra.mxu0 %v500
        %922 = vmatprep.subr.bf16.mxu0 %v509
        %923 = vmatpush1.bf16.msra.mxu0 %v508
        %924 = vmatprep.subr.bf16.mxu0 %v517
        %925 = vmatpush1.bf16.msra.mxu0 %v516
        %926 = vmatprep.subr.bf16.mxu0 %v525
        %927 = vmatpush1.bf16.msra.mxu0 %v524
        %928 = vmatprep.subr.bf16.mxu0 %v533
        %929 = vmatpush1.bf16.msra.mxu0 %v532
        %930 = vmatprep.subr.bf16.mxu0 %v541
        %931 = vmatpush1.bf16.msra.mxu0 %v540
        %932 = vmatprep.subr.bf16.mxu0 %v549
        %933 = vmatpush1.bf16.msra.mxu0 %v548
        %934 = vmatprep.subr.bf16.mxu0 %v557
        %935 = vmatpush1.bf16.msra.mxu0 %v556
        %936 = vmatprep.subr.bf16.mxu0 %v565
        %937 = vmatpush1.bf16.msra.mxu0 %v564
        %938 = vmatprep.subr.bf16.mxu0 %v573
        %939 = vmatpush1.bf16.msra.mxu0 %v572
        %940 = vmatprep.subr.bf16.mxu0 %v581
        %941 = vmatpush1.bf16.msra.mxu0 %v580
        %942 = vmatprep.subr.bf16.mxu0 %v589
        %943 = vmatpush1.bf16.msra.mxu0 %v588
        %944 = vmatprep.subr.bf16.mxu0 %v597
        %945 = vmatpush1.bf16.msra.mxu0 %v596
        %946 = vmatprep.mubr.bf16.mxu0 %v624
        %947 = vmatmul.mubr.bf16.gmra.mrb[0].mxu0 %v623
        %v948 = vpop.f32.mrb[0].mxu0
        %v949 = vadd.f32 %v908, %v948
        %v950 = vpop.f32.mrb[0].mxu0
        %v951 = vadd.f32 %v910, %v950
        %v952 = vpop.f32.mrb[0].mxu0
        %v953 = vpop.f32.mrb[0].mxu0
        %954 = vdwg.mxu0
        %v963 = vcombine.low %v703, %v705
        %v964 = vcombine.low %v785, %v787
        %v966 = vunpack.c.l.s4 1983009808
        %v967 = vunpack.c.0.s8 %v966
        %v968 = vlaneseq
        %v969 = vshrl.u32 %v968, 7
        %v970 = vsub.s32 %v967, %v969
        %v971 = vrot.slane %v963, %v970
        %v973 = vunpack.c.l.s4 1983009808
        %v974 = vunpack.c.0.s8 %v973
        %v975 = vlaneseq
        %v976 = vshrl.u32 %v975, 7
        %v977 = vsub.s32 %v974, %v976
        %v978 = vrot.slane %v964, %v977
        %v979 = vcombine.low %v971, %v978
        %v980 = vcombine.low %v867, %v869
        %v981 = vcombine.low %v949, %v951
        %v983 = vunpack.c.l.s4 1983009808
        %v984 = vunpack.c.0.s8 %v983
        %v985 = vlaneseq
        %v986 = vshrl.u32 %v985, 7
        %v987 = vsub.s32 %v984, %v986
        %v988 = vrot.slane %v980, %v987
        %v990 = vunpack.c.l.s4 1983009808
        %v991 = vunpack.c.0.s8 %v990
        %v992 = vlaneseq
        %v993 = vshrl.u32 %v992, 7
        %v994 = vsub.s32 %v991, %v993
        %v995 = vrot.slane %v981, %v994
        %v996 = vcombine.low %v988, %v995
        %v999 = vadd.f32 %v625, %v979
        %v1000 = vadd.f32 %v626, %v996
        %1001 = vst [vmem:[%s206] sm:$0xff] %v999
        %1002 = vst [vmem:[%s206 + $0x8] sm:$0xff] %v1000
        // Predicated region
        $region37: #{vgg_forward.5} parent=27 // pred_check
          %p1003 = pneg %p208
        $region38: #{vgg_forward.5} parent=27 // pred_check_branch
          %1005 = sbr.rel (%p1003) target = $region40
        $region39: #{vgg_forward.5} parent=27 // pred_region
          %v1006 = vld [vmem:[%s206] sm:$0xff]
          %v1007 = vld [vmem:[%s206 + $0x8] sm:$0xff]
          %s1008 = sld [smem:[#allocation3]]
          %v1009 = vstv %s1008
          %v1010 = vmul.f32 %v1006, %v1009
          %v1011 = vmul.f32 %v1007, %v1009
          %v1012 = vmax.f32 %v1010, 0.0
          %v1013 = vmax.f32 %v1011, 0.0
          %1014 = vst [vmem:[%s206] sm:$0xff] %v1012
          %1015 = vst [vmem:[%s206 + $0x8] sm:$0xff] %v1013
        $region40: #{vgg_forward.5} parent=27 // pred_fallthru
          _
        %s1016 = smul.u32 8, %s22
        %p1017 = scmp.lt.s32.totalorder %s1016, 31
        %s1018 = scalar_select %p1017, %s1016, 31
        %s1019 = smul.addr %s1018, 2
        %s1020 = scalar_lea.vmem %s3, %s1019
        // Predicated region
        $region41: #{vgg_forward.5} parent=27 // pred_check
          %p1021 = pneg %p102
        $region42: #{vgg_forward.5} parent=27 // pred_check_branch
          %1023 = sbr.rel (%p1021) target = $region44
        $region43: #{vgg_forward.5} parent=27 // pred_region
          %s1024 = smul.u32 8, %s22
        $region44: #{vgg_forward.5} parent=27 // pred_fallthru
          _
      $region28: #{vgg_forward.5} parent=5 // pred_fallthru
        _
      %p1025 = scmp.le.s32.totalorder 2, %s13
      // Predicated region
      $region45: #{vgg_forward.5} parent=5 // pred_check
        %p1026 = pneg %p1025
      $region46: #{vgg_forward.5} parent=5 // pred_check_branch
        %1028 = sbr.rel (%p1026) target = $region48
      $region47: #{vgg_forward.5} parent=5 // pred_region
        %s1029 = ssub.s32 %s13, 2
        // Predicated region
        $region49: #{vgg_forward.5} parent=47 // pred_check
          %p1030 = pneg %p108
        $region50: #{vgg_forward.5} parent=47 // pred_check_branch
          %1032 = sbr.rel (%p1030) target = $region52
        $region51: #{vgg_forward.5} parent=47 // pred_region
          %s1033 = smul.u32 8, %s24
          %p1034 = scmp.lt.s32.totalorder %s1033, 31
          %s1035 = scalar_select %p1034, %s1033, 31
          %s1036 = smul.addr %s1035, 2
          %s1037 = scalar_lea.vmem %s3, %s1036
        $region52: #{vgg_forward.5} parent=47 // pred_fallthru
          _
      $region48: #{vgg_forward.5} parent=5 // pred_fallthru
        _
    $region6: #{vgg_forward.5} parent=1 // loop_footer
      %s17 = sadd.s32 1, %s13
    $region7: #{vgg_forward.5} parent=1 // loop_footer_branch
      %12 = sbr.rel target = $region3
    $region8: #{vgg_forward.5} parent=1 // loop_exit
      _
    %1038 = vsyncpa [#allocation5], 1
    %s1039 = scalar_lea.sflag [#allocation5], 1
    %1040 = vsyncpa %s1039, 1

// kernel: vgg_forward.6
$region0: #{vgg_forward.6}
  #allocation0 [shape = 'u32[]', space=smem, size = 0x4, offset = 0x4, fixed_abs, tag = 'smem constant byte address 0x4 - core index']
  #allocation1 [shape = 'u32[144,128]{1,0:T(1,128)}', space=vmem, size = 0x12000, scoped, tag = 'internal scratch']
  #allocation2 [shape = 's32[1]{0}', space=sflag, size = 0x4, scoped, tag = 'scoped memory for vgg_forward.6']
  #allocation3 [shape = 'f32[1]{0:T(128)S(6)}', space=smem, size = 0x200, scoped, tag = 'prefetched SMEM operand 0']
  %s0 = inlined_call_operand.<no memory space> [shape: f32[1], index: 0, kind: input, shape index: {}]
  %s1 = inlined_call_operand.vmem [shape: f32[2,4096], index: 1, kind: input, shape index: {}]
  %s2 = inlined_call_operand.hbm [shape: s8[4096,4096], index: 2, kind: input, shape index: {}]
  %s3 = inlined_call_operand.vmem [shape: f32[2,4096], index: 3, kind: output, shape index: {}]
  %s4 = sld [smem:[#allocation0]]
  $region53: #{vgg_forward.6} parent=0
    _
  %s6 = ssub.s32 1, %s4
  %s7 = scalar_select 0, %s6, %s4
  %8 = sst [smem:[#allocation3]] %s0
  $region1: #{vgg_forward.6} parent=0
    #allocation4 [shape = 'u8[2097152]{0}', space=vmem, size = 0x200000, scoped, tag = 'input window, operand 2']
    #allocation5 [shape = 's32[2]{0}', space=sflag, size = 0x8, scoped, tag = 'scoped memory for vgg_forward.6']
    %9 = vsyncpa [#allocation5], 0
    %s10 = scalar_lea.sflag [#allocation5], 1
    %11 = vsyncpa %s10, 0
    loop: start=0, step=1, limit=18
    $region2: #{vgg_forward.6} parent=1 // loop_pre_header
      _
    $region3: #{vgg_forward.6} parent=1 // loop_header
      %s13 = sphi 0, %s17
      %p14 = scmp.ge.s32.totalorder %s13, 18
      %s20 = sphi 0, %s32
      %s21 = sphi 0, %s28
      %s22 = sphi 0, %s20
      %s23 = sphi 0, %s21
      %s24 = sphi 0, %s22
      %s25 = sphi 0, %s23
      %s35 = sphi 0, %s37
      %s38 = sphi 0, %s35
      %s39 = sphi 0, %s38
      %s55 = sphi 0, %s39
      %s63 = sphi 0, %s65
      %s66 = sphi 0, %s63
      %s67 = sphi 0, %s66
      %s83 = sphi 0, %s67
      %s89 = sphi 0, %s91
      %s92 = sphi 0, %s89
      %s93 = sphi 0, %s92
      %s109 = sphi 0, %s93
    $region4: #{vgg_forward.6} parent=1 // loop_header_branch
      %16 = sbr.rel (%p14) target = $region8
    $region5: #{vgg_forward.6} parent=1 // loop_body
      %s18 = ssub.s32 %s13, 1
      %s19 = ssub.s32 %s13, 2
      %s26 = sadd.s32 1, %s21
      %p27 = scmp.ge.s32.totalorder %s26, 4
      %s28 = scalar_select %p27, 0, %s26
      %s29 = sadd.s32 1, %s20
      %s30 = scalar_select %p27, %s29, %s20
      %p31 = scmp.ge.s32.totalorder %s30, 4
      %s32 = scalar_select %p31, 0, %s30
      %s33 = ssub.s32 %s21, %s28
      %p34 = scmp.eq.s32.totalorder %s33, 0
      %s36 = sadd.s32 %s35, 1
      %s37 = scalar_select %p34, %s35, %s36
      %p40 = pneg %p34
      %p41 = scmp.eq.s32.totalorder %s13, 15
      %p42 = por %p40, %p41
      %p43 = scmp.ne.s32.totalorder %s35, %s38
      %p44 = scmp.eq.s32.totalorder %s13, 0
      %p45 = por %p43, %p44
      %p46 = scmp.ne.s32.totalorder %s35, %s38
      %p47 = scmp.eq.s32.totalorder %s18, 15
      %p48 = por %p46, %p47
      %p49 = scmp.ne.s32.totalorder %s38, %s39
      %p50 = scmp.eq.s32.totalorder %s18, 0
      %p51 = por %p49, %p50
      %p52 = scmp.ne.s32.totalorder %s38, %s39
      %p53 = scmp.eq.s32.totalorder %s19, 15
      %p54 = por %p52, %p53
      %p56 = scmp.ne.s32.totalorder %s39, %s55
      %p57 = scmp.eq.s32.totalorder %s19, 0
      %p58 = por %p56, %p57
      %s59 = ssub.s32 %s21, %s28
      %s60 = ssub.s32 %s20, %s32
      %s61 = sor.u32 %s59, %s60
      %p62 = scmp.eq.s32.totalorder %s61, 0
      %s64 = sadd.s32 %s63, 1
      %s65 = scalar_select %p62, %s63, %s64
      %p68 = pneg %p62
      %p69 = scmp.eq.s32.totalorder %s13, 15
      %p70 = por %p68, %p69
      %p71 = scmp.ne.s32.totalorder %s63, %s66
      %p72 = scmp.eq.s32.totalorder %s13, 0
      %p73 = por %p71, %p72
      %p74 = scmp.ne.s32.totalorder %s63, %s66
      %p75 = scmp.eq.s32.totalorder %s18, 15
      %p76 = por %p74, %p75
      %p77 = scmp.ne.s32.totalorder %s66, %s67
      %p78 = scmp.eq.s32.totalorder %s18, 0
      %p79 = por %p77, %p78
      %p80 = scmp.ne.s32.totalorder %s66, %s67
      %p81 = scmp.eq.s32.totalorder %s19, 15
      %p82 = por %p80, %p81
      %p84 = scmp.ne.s32.totalorder %s67, %s83
      %p85 = scmp.eq.s32.totalorder %s19, 0
      %p86 = por %p84, %p85
      %s87 = ssub.s32 %s20, %s32
      %p88 = scmp.eq.s32.totalorder %s87, 0
      %s90 = sadd.s32 %s89, 1
      %s91 = scalar_select %p88, %s89, %s90
      %p94 = pneg %p88
      %p95 = scmp.eq.s32.totalorder %s13, 15
      %p96 = por %p94, %p95
      %p97 = scmp.ne.s32.totalorder %s89, %s92
      %p98 = scmp.eq.s32.totalorder %s13, 0
      %p99 = por %p97, %p98
      %p100 = scmp.ne.s32.totalorder %s89, %s92
      %p101 = scmp.eq.s32.totalorder %s18, 15
      %p102 = por %p100, %p101
      %p103 = scmp.ne.s32.totalorder %s92, %s93
      %p104 = scmp.eq.s32.totalorder %s18, 0
      %p105 = por %p103, %p104
      %p106 = scmp.ne.s32.totalorder %s92, %s93
      %p107 = scmp.eq.s32.totalorder %s19, 15
      %p108 = por %p106, %p107
      %p110 = scmp.ne.s32.totalorder %s93, %s109
      %p111 = scmp.eq.s32.totalorder %s19, 0
      %p112 = por %p110, %p111
      %p113 = scmp.le.s32.totalorder 1, %s13
      %p114 = scmp.lt.s32.totalorder %s13, 17
      %p115 = pnand %p113, %p114
      %p116 = pneg %p115
      // Predicated region
      $region9: #{vgg_forward.6} parent=5 // pred_check
        _
      $region10: #{vgg_forward.6} parent=5 // pred_check_branch
        %118 = sbr.rel (%p115) target = $region12
      $region11: #{vgg_forward.6} parent=5 // pred_region
        %s119 = ssub.s32 %s13, 1
      $region12: #{vgg_forward.6} parent=5 // pred_fallthru
        _
      %p120 = scmp.lt.s32.totalorder %s13, 16
      // Predicated region
      $region13: #{vgg_forward.6} parent=5 // pred_check
        %p121 = pneg %p120
      $region14: #{vgg_forward.6} parent=5 // pred_check_branch
        %123 = sbr.rel (%p121) target = $region16
      $region15: #{vgg_forward.6} parent=5 // pred_region
        // Predicated region
        $region17: #{vgg_forward.6} parent=15 // pred_check
          %p124 = pneg %p45
        $region18: #{vgg_forward.6} parent=15 // pred_check_branch
          %126 = sbr.rel (%p124) target = $region20
        $region19: #{vgg_forward.6} parent=15 // pred_region
          %s127 = smul.u32 8, %s21
          %p128 = scmp.lt.s32.totalorder %s127, 31
          %s129 = scalar_select %p128, %s127, 31
          %s130 = smul.addr %s129, 2
          %s131 = scalar_lea.vmem %s1, %s130
          %s132 = smul.u32 8, %s21
        $region20: #{vgg_forward.6} parent=15 // pred_fallthru
          _
        // Predicated region
        $region21: #{vgg_forward.6} parent=15 // pred_check
          %p133 = pneg %p73
        $region22: #{vgg_forward.6} parent=15 // pred_check_branch
          %135 = sbr.rel (%p133) target = $region24
        $region23: #{vgg_forward.6} parent=15 // pred_region
          %s136 = sand.u32 %s63, 1
          %s137 = scalar_lea.sflag [#allocation5], %s136
          %s138 = sand.u32 %s63, 1
          %s139 = smul.addr %s138, 2048
          %s140 = scalar_lea.vmem [#allocation4], %s139
          %s141 = smul.u32 32, %s21
          %s142 = smul.u32 8, %s20
          %s144 = ssub.s32 32768, 32768
          %145 = vsyncadd %s137, %s144
          %s146 = smul.addr %s141, 32
          %s147 = sadd.s32 %s142, %s146
          %s148 = smul.addr %s147, 128
          %s149 = scalar_lea.hbm %s2, %s148
          %s150 = sshll.u32 %s140, 4
          %s151 = int_to_ptr.vmem [resolvable:$true] %s150
          %156 = dma.hbm_to_vmem [thread:$0]  %s149, 32768, %s151, %s137, 4096, 1024, 64
        $region24: #{vgg_forward.6} parent=15 // pred_fallthru
          _
      $region16: #{vgg_forward.6} parent=5 // pred_fallthru
        _
      %p157 = scmp.le.s32.totalorder 1, %s13
      %p158 = scmp.lt.s32.totalorder %s13, 17
      %p159 = pnand %p157, %p158
      %p160 = pneg %p159
      // Predicated region
      $region25: #{vgg_forward.6} parent=5 // pred_check
        _
      $region26: #{vgg_forward.6} parent=5 // pred_check_branch
        %162 = sbr.rel (%p159) target = $region28
      $region27: #{vgg_forward.6} parent=5 // pred_region
        %s163 = ssub.s32 %s13, 1
        %s164 = sand.u32 %s66, 1
        %s165 = scalar_lea.sflag [#allocation5], %s164
        %s166 = sand.u32 %s66, 1
        %s167 = smul.addr %s166, 2048
        %s168 = scalar_lea.vmem [#allocation4], %s167
        // Predicated region
        $region29: #{vgg_forward.6} parent=27 // pred_check
          %p169 = pneg %p79
        $region30: #{vgg_forward.6} parent=27 // pred_check_branch
          %171 = sbr.rel (%p169) target = $region32
        $region31: #{vgg_forward.6} parent=27 // pred_region
          %172 = dma.done %s165, 32768
        $region32: #{vgg_forward.6} parent=27 // pred_fallthru
          _
        %s173 = smul.u32 8, %s23
        %p174 = scmp.lt.s32.totalorder %s173, 31
        %s175 = scalar_select %p174, %s173, 31
        %s176 = smul.addr %s175, 2
        %s177 = scalar_lea.vmem %s1, %s176
        %p178 = pneg %p51
        %p179 = pneg %p48
        %s180 = sand.u32 %s66, 1
        %s181 = scalar_lea.sflag [#allocation5], %s180
        %s182 = sand.u32 %s66, 1
        %s183 = smul.addr %s182, 2048
        %s184 = scalar_lea.vmem [#allocation4], %s183
        %p185 = pneg %p79
        %p186 = pneg %p76
        %p187 = pneg %p105
        %p188 = pneg %p102
        %s189 = smul.u32 8, %s22
        %p190 = scmp.lt.s32.totalorder %s189, 31
        %s191 = scalar_select %p190, %s189, 31
        %s192 = smul.addr %s191, 2
        %s193 = scalar_lea.vmem %s3, %s192
        %s194 = smul.u32 8, %s23
        %p195 = scmp.lt.s32.totalorder %s194, 31
        %s196 = scalar_select %p195, %s194, 31
        %s197 = smul.addr %s196, 2
        %s198 = scalar_lea.vmem %s1, %s197
        %s199 = smul.u32 8, %s23
        %s200 = smul.u32 32, %s23
        %s201 = smul.u32 8, %s22
        %s202 = smul.u32 8, %s22
        %p203 = scmp.lt.s32.totalorder %s202, 31
        %s204 = scalar_select %p203, %s202, 31
        %s205 = smul.addr %s204, 2
        %s206 = scalar_lea.vmem %s3, %s205
        %s207 = smul.u32 8, %s22
        %p208 = scmp.eq.s32.totalorder %s23, 0
        // Predicated region
        $region33: #{vgg_forward.6} parent=27 // pred_check
          %p209 = pneg %p208
        $region34: #{vgg_forward.6} parent=27 // pred_check_branch
          %211 = sbr.rel (%p209) target = $region36
        $region35: #{vgg_forward.6} parent=27 // pred_region
          %212 = vst [vmem:[%s206] sm:$0xff] 0.0
          %213 = vst [vmem:[%s206 + $0x8] sm:$0xff] 0.0
        $region36: #{vgg_forward.6} parent=27 // pred_fallthru
          _
        %v214 = vld [vmem:[%s168] sm:$0xff]
        %v215 = vld [vmem:[%s168 + $0x8] sm:$0xff]
        %v216 = vld [vmem:[%s168 + $0x10] sm:$0xff]
        %v217 = vld [vmem:[%s168 + $0x18] sm:$0xff]
        %v218 = vld [vmem:[%s168 + $0x20] sm:$0xff]
        %v219 = vld [vmem:[%s168 + $0x28] sm:$0xff]
        %v220 = vld [vmem:[%s168 + $0x30] sm:$0xff]
        %v221 = vld [vmem:[%s168 + $0x38] sm:$0xff]
        %v222 = vld [vmem:[%s168 + $0x40] sm:$0xff]
        %v223 = vld [vmem:[%s168 + $0x48] sm:$0xff]
        %v224 = vld [vmem:[%s168 + $0x50] sm:$0xff]
        %v225 = vld [vmem:[%s168 + $0x58] sm:$0xff]
        %v226 = vld [vmem:[%s168 + $0x60] sm:$0xff]
        %v227 = vld [vmem:[%s168 + $0x68] sm:$0xff]
        %v228 = vld [vmem:[%s168 + $0x70] sm:$0xff]
        %v229 = vld [vmem:[%s168 + $0x78] sm:$0xff]
        %v230 = vld [vmem:[%s168 + $0x80] sm:$0xff]
        %v231 = vld [vmem:[%s168 + $0x88] sm:$0xff]
        %v232 = vld [vmem:[%s168 + $0x90] sm:$0xff]
        %v233 = vld [vmem:[%s168 + $0x98] sm:$0xff]
        %v234 = vld [vmem:[%s168 + $0xa0] sm:$0xff]
        %v235 = vld [vmem:[%s168 + $0xa8] sm:$0xff]
        %v236 = vld [vmem:[%s168 + $0xb0] sm:$0xff]
        %v237 = vld [vmem:[%s168 + $0xb8] sm:$0xff]
        %v238 = vld [vmem:[%s168 + $0xc0] sm:$0xff]
        %v239 = vld [vmem:[%s168 + $0xc8] sm:$0xff]
        %v240 = vld [vmem:[%s168 + $0xd0] sm:$0xff]
        %v241 = vld [vmem:[%s168 + $0xd8] sm:$0xff]
        %v242 = vld [vmem:[%s168 + $0xe0] sm:$0xff]
        %v243 = vld [vmem:[%s168 + $0xe8] sm:$0xff]
        %v244 = vld [vmem:[%s168 + $0xf0] sm:$0xff]
        %v245 = vld [vmem:[%s168 + $0xf8] sm:$0xff]
        %v246 = vld [vmem:[%s168 + $0x100] sm:$0xff]
        %v247 = vld [vmem:[%s168 + $0x108] sm:$0xff]
        %v248 = vld [vmem:[%s168 + $0x110] sm:$0xff]
        %v249 = vld [vmem:[%s168 + $0x118] sm:$0xff]
        %v250 = vld [vmem:[%s168 + $0x120] sm:$0xff]
        %v251 = vld [vmem:[%s168 + $0x128] sm:$0xff]
        %v252 = vld [vmem:[%s168 + $0x130] sm:$0xff]
        %v253 = vld [vmem:[%s168 + $0x138] sm:$0xff]
        %v254 = vld [vmem:[%s168 + $0x140] sm:$0xff]
        %v255 = vld [vmem:[%s168 + $0x148] sm:$0xff]
        %v256 = vld [vmem:[%s168 + $0x150] sm:$0xff]
        %v257 = vld [vmem:[%s168 + $0x158] sm:$0xff]
        %v258 = vld [vmem:[%s168 + $0x160] sm:$0xff]
        %v259 = vld [vmem:[%s168 + $0x168] sm:$0xff]
        %v260 = vld [vmem:[%s168 + $0x170] sm:$0xff]
        %v261 = vld [vmem:[%s168 + $0x178] sm:$0xff]
        %v262 = vld [vmem:[%s168 + $0x180] sm:$0xff]
        %v263 = vld [vmem:[%s168 + $0x188] sm:$0xff]
        %v264 = vld [vmem:[%s168 + $0x190] sm:$0xff]
        %v265 = vld [vmem:[%s168 + $0x198] sm:$0xff]
        %v266 = vld [vmem:[%s168 + $0x1a0] sm:$0xff]
        %v267 = vld [vmem:[%s168 + $0x1a8] sm:$0xff]
        %v268 = vld [vmem:[%s168 + $0x1b0] sm:$0xff]
        %v269 = vld [vmem:[%s168 + $0x1b8] sm:$0xff]
        %v270 = vld [vmem:[%s168 + $0x1c0] sm:$0xff]
        %v271 = vld [vmem:[%s168 + $0x1c8] sm:$0xff]
        %v272 = vld [vmem:[%s168 + $0x1d0] sm:$0xff]
        %v273 = vld [vmem:[%s168 + $0x1d8] sm:$0xff]
        %v274 = vld [vmem:[%s168 + $0x1e0] sm:$0xff]
        %v275 = vld [vmem:[%s168 + $0x1e8] sm:$0xff]
        %v276 = vld [vmem:[%s168 + $0x1f0] sm:$0xff]
        %v277 = vld [vmem:[%s168 + $0x1f8] sm:$0xff]
        %v278 = vld [vmem:[%s168 + $0x200] sm:$0xff]
        %v279 = vld [vmem:[%s168 + $0x208] sm:$0xff]
        %v280 = vld [vmem:[%s168 + $0x210] sm:$0xff]
        %v281 = vld [vmem:[%s168 + $0x218] sm:$0xff]
        %v282 = vld [vmem:[%s168 + $0x220] sm:$0xff]
        %v283 = vld [vmem:[%s168 + $0x228] sm:$0xff]
        %v284 = vld [vmem:[%s168 + $0x230] sm:$0xff]
        %v285 = vld [vmem:[%s168 + $0x238] sm:$0xff]
        %v286 = vld [vmem:[%s168 + $0x240] sm:$0xff]
        %v287 = vld [vmem:[%s168 + $0x248] sm:$0xff]
        %v288 = vld [vmem:[%s168 + $0x250] sm:$0xff]
        %v289 = vld [vmem:[%s168 + $0x258] sm:$0xff]
        %v290 = vld [vmem:[%s168 + $0x260] sm:$0xff]
        %v291 = vld [vmem:[%s168 + $0x268] sm:$0xff]
        %v292 = vld [vmem:[%s168 + $0x270] sm:$0xff]
        %v293 = vld [vmem:[%s168 + $0x278] sm:$0xff]
        %v294 = vld [vmem:[%s168 + $0x280] sm:$0xff]
        %v295 = vld [vmem:[%s168 + $0x288] sm:$0xff]
        %v296 = vld [vmem:[%s168 + $0x290] sm:$0xff]
        %v297 = vld [vmem:[%s168 + $0x298] sm:$0xff]
        %v298 = vld [vmem:[%s168 + $0x2a0] sm:$0xff]
        %v299 = vld [vmem:[%s168 + $0x2a8] sm:$0xff]
        %v300 = vld [vmem:[%s168 + $0x2b0] sm:$0xff]
        %v301 = vld [vmem:[%s168 + $0x2b8] sm:$0xff]
        %v302 = vld [vmem:[%s168 + $0x2c0] sm:$0xff]
        %v303 = vld [vmem:[%s168 + $0x2c8] sm:$0xff]
        %v304 = vld [vmem:[%s168 + $0x2d0] sm:$0xff]
        %v305 = vld [vmem:[%s168 + $0x2d8] sm:$0xff]
        %v306 = vld [vmem:[%s168 + $0x2e0] sm:$0xff]
        %v307 = vld [vmem:[%s168 + $0x2e8] sm:$0xff]
        %v308 = vld [vmem:[%s168 + $0x2f0] sm:$0xff]
        %v309 = vld [vmem:[%s168 + $0x2f8] sm:$0xff]
        %v310 = vld [vmem:[%s168 + $0x300] sm:$0xff]
        %v311 = vld [vmem:[%s168 + $0x308] sm:$0xff]
        %v312 = vld [vmem:[%s168 + $0x310] sm:$0xff]
        %v313 = vld [vmem:[%s168 + $0x318] sm:$0xff]
        %v314 = vld [vmem:[%s168 + $0x320] sm:$0xff]
        %v315 = vld [vmem:[%s168 + $0x328] sm:$0xff]
        %v316 = vld [vmem:[%s168 + $0x330] sm:$0xff]
        %v317 = vld [vmem:[%s168 + $0x338] sm:$0xff]
        %v318 = vld [vmem:[%s168 + $0x340] sm:$0xff]
        %v319 = vld [vmem:[%s168 + $0x348] sm:$0xff]
        %v320 = vld [vmem:[%s168 + $0x350] sm:$0xff]
        %v321 = vld [vmem:[%s168 + $0x358] sm:$0xff]
        %v322 = vld [vmem:[%s168 + $0x360] sm:$0xff]
        %v323 = vld [vmem:[%s168 + $0x368] sm:$0xff]
        %v324 = vld [vmem:[%s168 + $0x370] sm:$0xff]
        %v325 = vld [vmem:[%s168 + $0x378] sm:$0xff]
        %v326 = vld [vmem:[%s168 + $0x380] sm:$0xff]
        %v327 = vld [vmem:[%s168 + $0x388] sm:$0xff]
        %v328 = vld [vmem:[%s168 + $0x390] sm:$0xff]
        %v329 = vld [vmem:[%s168 + $0x398] sm:$0xff]
        %v330 = vld [vmem:[%s168 + $0x3a0] sm:$0xff]
        %v331 = vld [vmem:[%s168 + $0x3a8] sm:$0xff]
        %v332 = vld [vmem:[%s168 + $0x3b0] sm:$0xff]
        %v333 = vld [vmem:[%s168 + $0x3b8] sm:$0xff]
        %v334 = vld [vmem:[%s168 + $0x3c0] sm:$0xff]
        %v335 = vld [vmem:[%s168 + $0x3c8] sm:$0xff]
        %v336 = vld [vmem:[%s168 + $0x3d0] sm:$0xff]
        %v337 = vld [vmem:[%s168 + $0x3d8] sm:$0xff]
        %v338 = vld [vmem:[%s168 + $0x3e0] sm:$0xff]
        %v339 = vld [vmem:[%s168 + $0x3e8] sm:$0xff]
        %v340 = vld [vmem:[%s168 + $0x3f0] sm:$0xff]
        %v341 = vld [vmem:[%s168 + $0x3f8] sm:$0xff]
        %v342 = vld [vmem:[%s168 + $0x400] sm:$0xff]
        %v343 = vld [vmem:[%s168 + $0x408] sm:$0xff]
        %v344 = vld [vmem:[%s168 + $0x410] sm:$0xff]
        %v345 = vld [vmem:[%s168 + $0x418] sm:$0xff]
        %v346 = vld [vmem:[%s168 + $0x420] sm:$0xff]
        %v347 = vld [vmem:[%s168 + $0x428] sm:$0xff]
        %v348 = vld [vmem:[%s168 + $0x430] sm:$0xff]
        %v349 = vld [vmem:[%s168 + $0x438] sm:$0xff]
        %v350 = vld [vmem:[%s168 + $0x440] sm:$0xff]
        %v351 = vld [vmem:[%s168 + $0x448] sm:$0xff]
        %v352 = vld [vmem:[%s168 + $0x450] sm:$0xff]
        %v353 = vld [vmem:[%s168 + $0x458] sm:$0xff]
        %v354 = vld [vmem:[%s168 + $0x460] sm:$0xff]
        %v355 = vld [vmem:[%s168 + $0x468] sm:$0xff]
        %v356 = vld [vmem:[%s168 + $0x470] sm:$0xff]
        %v357 = vld [vmem:[%s168 + $0x478] sm:$0xff]
        %v358 = vld [vmem:[%s168 + $0x480] sm:$0xff]
        %v359 = vld [vmem:[%s168 + $0x488] sm:$0xff]
        %v360 = vld [vmem:[%s168 + $0x490] sm:$0xff]
        %v361 = vld [vmem:[%s168 + $0x498] sm:$0xff]
        %v362 = vld [vmem:[%s168 + $0x4a0] sm:$0xff]
        %v363 = vld [vmem:[%s168 + $0x4a8] sm:$0xff]
        %v364 = vld [vmem:[%s168 + $0x4b0] sm:$0xff]
        %v365 = vld [vmem:[%s168 + $0x4b8] sm:$0xff]
        %v366 = vld [vmem:[%s168 + $0x4c0] sm:$0xff]
        %v367 = vld [vmem:[%s168 + $0x4c8] sm:$0xff]
        %v368 = vld [vmem:[%s168 + $0x4d0] sm:$0xff]
        %v369 = vld [vmem:[%s168 + $0x4d8] sm:$0xff]
        %v370 = vld [vmem:[%s168 + $0x4e0] sm:$0xff]
        %v371 = vld [vmem:[%s168 + $0x4e8] sm:$0xff]
        %v372 = vld [vmem:[%s168 + $0x4f0] sm:$0xff]
        %v373 = vld [vmem:[%s168 + $0x4f8] sm:$0xff]
        %v374 = vld [vmem:[%s168 + $0x500] sm:$0xff]
        %v375 = vld [vmem:[%s168 + $0x508] sm:$0xff]
        %v376 = vld [vmem:[%s168 + $0x510] sm:$0xff]
        %v377 = vld [vmem:[%s168 + $0x518] sm:$0xff]
        %v378 = vld [vmem:[%s168 + $0x520] sm:$0xff]
        %v379 = vld [vmem:[%s168 + $0x528] sm:$0xff]
        %v380 = vld [vmem:[%s168 + $0x530] sm:$0xff]
        %v381 = vld [vmem:[%s168 + $0x538] sm:$0xff]
        %v382 = vld [vmem:[%s168 + $0x540] sm:$0xff]
        %v383 = vld [vmem:[%s168 + $0x548] sm:$0xff]
        %v384 = vld [vmem:[%s168 + $0x550] sm:$0xff]
        %v385 = vld [vmem:[%s168 + $0x558] sm:$0xff]
        %v386 = vld [vmem:[%s168 + $0x560] sm:$0xff]
        %v387 = vld [vmem:[%s168 + $0x568] sm:$0xff]
        %v388 = vld [vmem:[%s168 + $0x570] sm:$0xff]
        %v389 = vld [vmem:[%s168 + $0x578] sm:$0xff]
        %v390 = vld [vmem:[%s168 + $0x580] sm:$0xff]
        %v391 = vld [vmem:[%s168 + $0x588] sm:$0xff]
        %v392 = vld [vmem:[%s168 + $0x590] sm:$0xff]
        %v393 = vld [vmem:[%s168 + $0x598] sm:$0xff]
        %v394 = vld [vmem:[%s168 + $0x5a0] sm:$0xff]
        %v395 = vld [vmem:[%s168 + $0x5a8] sm:$0xff]
        %v396 = vld [vmem:[%s168 + $0x5b0] sm:$0xff]
        %v397 = vld [vmem:[%s168 + $0x5b8] sm:$0xff]
        %v398 = vld [vmem:[%s168 + $0x5c0] sm:$0xff]
        %v399 = vld [vmem:[%s168 + $0x5c8] sm:$0xff]
        %v400 = vld [vmem:[%s168 + $0x5d0] sm:$0xff]
        %v401 = vld [vmem:[%s168 + $0x5d8] sm:$0xff]
        %v402 = vld [vmem:[%s168 + $0x5e0] sm:$0xff]
        %v403 = vld [vmem:[%s168 + $0x5e8] sm:$0xff]
        %v404 = vld [vmem:[%s168 + $0x5f0] sm:$0xff]
        %v405 = vld [vmem:[%s168 + $0x5f8] sm:$0xff]
        %v406 = vld [vmem:[%s168 + $0x600] sm:$0xff]
        %v407 = vld [vmem:[%s168 + $0x608] sm:$0xff]
        %v408 = vld [vmem:[%s168 + $0x610] sm:$0xff]
        %v409 = vld [vmem:[%s168 + $0x618] sm:$0xff]
        %v410 = vld [vmem:[%s168 + $0x620] sm:$0xff]
        %v411 = vld [vmem:[%s168 + $0x628] sm:$0xff]
        %v412 = vld [vmem:[%s168 + $0x630] sm:$0xff]
        %v413 = vld [vmem:[%s168 + $0x638] sm:$0xff]
        %v414 = vld [vmem:[%s168 + $0x640] sm:$0xff]
        %v415 = vld [vmem:[%s168 + $0x648] sm:$0xff]
        %v416 = vld [vmem:[%s168 + $0x650] sm:$0xff]
        %v417 = vld [vmem:[%s168 + $0x658] sm:$0xff]
        %v418 = vld [vmem:[%s168 + $0x660] sm:$0xff]
        %v419 = vld [vmem:[%s168 + $0x668] sm:$0xff]
        %v420 = vld [vmem:[%s168 + $0x670] sm:$0xff]
        %v421 = vld [vmem:[%s168 + $0x678] sm:$0xff]
        %v422 = vld [vmem:[%s168 + $0x680] sm:$0xff]
        %v423 = vld [vmem:[%s168 + $0x688] sm:$0xff]
        %v424 = vld [vmem:[%s168 + $0x690] sm:$0xff]
        %v425 = vld [vmem:[%s168 + $0x698] sm:$0xff]
        %v426 = vld [vmem:[%s168 + $0x6a0] sm:$0xff]
        %v427 = vld [vmem:[%s168 + $0x6a8] sm:$0xff]
        %v428 = vld [vmem:[%s168 + $0x6b0] sm:$0xff]
        %v429 = vld [vmem:[%s168 + $0x6b8] sm:$0xff]
        %v430 = vld [vmem:[%s168 + $0x6c0] sm:$0xff]
        %v431 = vld [vmem:[%s168 + $0x6c8] sm:$0xff]
        %v432 = vld [vmem:[%s168 + $0x6d0] sm:$0xff]
        %v433 = vld [vmem:[%s168 + $0x6d8] sm:$0xff]
        %v434 = vld [vmem:[%s168 + $0x6e0] sm:$0xff]
        %v435 = vld [vmem:[%s168 + $0x6e8] sm:$0xff]
        %v436 = vld [vmem:[%s168 + $0x6f0] sm:$0xff]
        %v437 = vld [vmem:[%s168 + $0x6f8] sm:$0xff]
        %v438 = vld [vmem:[%s168 + $0x700] sm:$0xff]
        %v439 = vld [vmem:[%s168 + $0x708] sm:$0xff]
        %v440 = vld [vmem:[%s168 + $0x710] sm:$0xff]
        %v441 = vld [vmem:[%s168 + $0x718] sm:$0xff]
        %v442 = vld [vmem:[%s168 + $0x720] sm:$0xff]
        %v443 = vld [vmem:[%s168 + $0x728] sm:$0xff]
        %v444 = vld [vmem:[%s168 + $0x730] sm:$0xff]
        %v445 = vld [vmem:[%s168 + $0x738] sm:$0xff]
        %v446 = vld [vmem:[%s168 + $0x740] sm:$0xff]
        %v447 = vld [vmem:[%s168 + $0x748] sm:$0xff]
        %v448 = vld [vmem:[%s168 + $0x750] sm:$0xff]
        %v449 = vld [vmem:[%s168 + $0x758] sm:$0xff]
        %v450 = vld [vmem:[%s168 + $0x760] sm:$0xff]
        %v451 = vld [vmem:[%s168 + $0x768] sm:$0xff]
        %v452 = vld [vmem:[%s168 + $0x770] sm:$0xff]
        %v453 = vld [vmem:[%s168 + $0x778] sm:$0xff]
        %v454 = vld [vmem:[%s168 + $0x780] sm:$0xff]
        %v455 = vld [vmem:[%s168 + $0x788] sm:$0xff]
        %v456 = vld [vmem:[%s168 + $0x790] sm:$0xff]
        %v457 = vld [vmem:[%s168 + $0x798] sm:$0xff]
        %v458 = vld [vmem:[%s168 + $0x7a0] sm:$0xff]
        %v459 = vld [vmem:[%s168 + $0x7a8] sm:$0xff]
        %v460 = vld [vmem:[%s168 + $0x7b0] sm:$0xff]
        %v461 = vld [vmem:[%s168 + $0x7b8] sm:$0xff]
        %v462 = vld [vmem:[%s168 + $0x7c0] sm:$0xff]
        %v463 = vld [vmem:[%s168 + $0x7c8] sm:$0xff]
        %v464 = vld [vmem:[%s168 + $0x7d0] sm:$0xff]
        %v465 = vld [vmem:[%s168 + $0x7d8] sm:$0xff]
        %v466 = vld [vmem:[%s168 + $0x7e0] sm:$0xff]
        %v467 = vld [vmem:[%s168 + $0x7e8] sm:$0xff]
        %v468 = vld [vmem:[%s168 + $0x7f0] sm:$0xff]
        %v469 = vld [vmem:[%s168 + $0x7f8] sm:$0xff]
        %v470 = vunpack.c.l.s8.bf16 %v214
        %v471 = vunpack.c.l.s8.bf16 %v215
        %v472 = vunpack.c.l.s8.bf16 %v216
        %v473 = vunpack.c.l.s8.bf16 %v217
        %v474 = vunpack.c.l.s8.bf16 %v218
        %v475 = vunpack.c.l.s8.bf16 %v219
        %v476 = vunpack.c.l.s8.bf16 %v220
        %v477 = vunpack.c.l.s8.bf16 %v221
        %v478 = vunpack.c.h.s8.bf16 %v214
        %v479 = vunpack.c.h.s8.bf16 %v215
        %v480 = vunpack.c.h.s8.bf16 %v216
        %v481 = vunpack.c.h.s8.bf16 %v217
        %v482 = vunpack.c.h.s8.bf16 %v218
        %v483 = vunpack.c.h.s8.bf16 %v219
        %v484 = vunpack.c.h.s8.bf16 %v220
        %v485 = vunpack.c.h.s8.bf16 %v221
        %v486 = vunpack.c.l.s8.bf16 %v222
        %v487 = vunpack.c.l.s8.bf16 %v223
        %v488 = vunpack.c.l.s8.bf16 %v224
        %v489 = vunpack.c.l.s8.bf16 %v225
        %v490 = vunpack.c.l.s8.bf16 %v226
        %v491 = vunpack.c.l.s8.bf16 %v227
        %v492 = vunpack.c.l.s8.bf16 %v228
        %v493 = vunpack.c.l.s8.bf16 %v229
        %v494 = vunpack.c.h.s8.bf16 %v222
        %v495 = vunpack.c.h.s8.bf16 %v223
        %v496 = vunpack.c.h.s8.bf16 %v224
        %v497 = vunpack.c.h.s8.bf16 %v225
        %v498 = vunpack.c.h.s8.bf16 %v226
        %v499 = vunpack.c.h.s8.bf16 %v227
        %v500 = vunpack.c.h.s8.bf16 %v228
        %v501 = vunpack.c.h.s8.bf16 %v229
        %v502 = vunpack.c.l.s8.bf16 %v230
        %v503 = vunpack.c.l.s8.bf16 %v231
        %v504 = vunpack.c.l.s8.bf16 %v232
        %v505 = vunpack.c.l.s8.bf16 %v233
        %v506 = vunpack.c.l.s8.bf16 %v234
        %v507 = vunpack.c.l.s8.bf16 %v235
        %v508 = vunpack.c.l.s8.bf16 %v236
        %v509 = vunpack.c.l.s8.bf16 %v237
        %v510 = vunpack.c.h.s8.bf16 %v230
        %v511 = vunpack.c.h.s8.bf16 %v231
        %v512 = vunpack.c.h.s8.bf16 %v232
        %v513 = vunpack.c.h.s8.bf16 %v233
        %v514 = vunpack.c.h.s8.bf16 %v234
        %v515 = vunpack.c.h.s8.bf16 %v235
        %v516 = vunpack.c.h.s8.bf16 %v236
        %v517 = vunpack.c.h.s8.bf16 %v237
        %v518 = vunpack.c.l.s8.bf16 %v238
        %v519 = vunpack.c.l.s8.bf16 %v239
        %v520 = vunpack.c.l.s8.bf16 %v240
        %v521 = vunpack.c.l.s8.bf16 %v241
        %v522 = vunpack.c.l.s8.bf16 %v242
        %v523 = vunpack.c.l.s8.bf16 %v243
        %v524 = vunpack.c.l.s8.bf16 %v244
        %v525 = vunpack.c.l.s8.bf16 %v245
        %v526 = vunpack.c.h.s8.bf16 %v238
        %v527 = vunpack.c.h.s8.bf16 %v239
        %v528 = vunpack.c.h.s8.bf16 %v240
        %v529 = vunpack.c.h.s8.bf16 %v241
        %v530 = vunpack.c.h.s8.bf16 %v242
        %v531 = vunpack.c.h.s8.bf16 %v243
        %v532 = vunpack.c.h.s8.bf16 %v244
        %v533 = vunpack.c.h.s8.bf16 %v245
        %v534 = vunpack.c.l.s8.bf16 %v246
        %v535 = vunpack.c.l.s8.bf16 %v247
        %v536 = vunpack.c.l.s8.bf16 %v248
        %v537 = vunpack.c.l.s8.bf16 %v249
        %v538 = vunpack.c.l.s8.bf16 %v250
        %v539 = vunpack.c.l.s8.bf16 %v251
        %v540 = vunpack.c.l.s8.bf16 %v252
        %v541 = vunpack.c.l.s8.bf16 %v253
        %v542 = vunpack.c.h.s8.bf16 %v246
        %v543 = vunpack.c.h.s8.bf16 %v247
        %v544 = vunpack.c.h.s8.bf16 %v248
        %v545 = vunpack.c.h.s8.bf16 %v249
        %v546 = vunpack.c.h.s8.bf16 %v250
        %v547 = vunpack.c.h.s8.bf16 %v251
        %v548 = vunpack.c.h.s8.bf16 %v252
        %v549 = vunpack.c.h.s8.bf16 %v253
        %v550 = vunpack.c.l.s8.bf16 %v254
        %v551 = vunpack.c.l.s8.bf16 %v255
        %v552 = vunpack.c.l.s8.bf16 %v256
        %v553 = vunpack.c.l.s8.bf16 %v257
        %v554 = vunpack.c.l.s8.bf16 %v258
        %v555 = vunpack.c.l.s8.bf16 %v259
        %v556 = vunpack.c.l.s8.bf16 %v260
        %v557 = vunpack.c.l.s8.bf16 %v261
        %v558 = vunpack.c.h.s8.bf16 %v254
        %v559 = vunpack.c.h.s8.bf16 %v255
        %v560 = vunpack.c.h.s8.bf16 %v256
        %v561 = vunpack.c.h.s8.bf16 %v257
        %v562 = vunpack.c.h.s8.bf16 %v258
        %v563 = vunpack.c.h.s8.bf16 %v259
        %v564 = vunpack.c.h.s8.bf16 %v260
        %v565 = vunpack.c.h.s8.bf16 %v261
        %v566 = vunpack.c.l.s8.bf16 %v262
        %v567 = vunpack.c.l.s8.bf16 %v263
        %v568 = vunpack.c.l.s8.bf16 %v264
        %v569 = vunpack.c.l.s8.bf16 %v265
        %v570 = vunpack.c.l.s8.bf16 %v266
        %v571 = vunpack.c.l.s8.bf16 %v267
        %v572 = vunpack.c.l.s8.bf16 %v268
        %v573 = vunpack.c.l.s8.bf16 %v269
        %v574 = vunpack.c.h.s8.bf16 %v262
        %v575 = vunpack.c.h.s8.bf16 %v263
        %v576 = vunpack.c.h.s8.bf16 %v264
        %v577 = vunpack.c.h.s8.bf16 %v265
        %v578 = vunpack.c.h.s8.bf16 %v266
        %v579 = vunpack.c.h.s8.bf16 %v267
        %v580 = vunpack.c.h.s8.bf16 %v268
        %v581 = vunpack.c.h.s8.bf16 %v269
        %v582 = vunpack.c.l.s8.bf16 %v270
        %v583 = vunpack.c.l.s8.bf16 %v271
        %v584 = vunpack.c.l.s8.bf16 %v272
        %v585 = vunpack.c.l.s8.bf16 %v273
        %v586 = vunpack.c.l.s8.bf16 %v274
        %v587 = vunpack.c.l.s8.bf16 %v275
        %v588 = vunpack.c.l.s8.bf16 %v276
        %v589 = vunpack.c.l.s8.bf16 %v277
        %v590 = vunpack.c.h.s8.bf16 %v270
        %v591 = vunpack.c.h.s8.bf16 %v271
        %v592 = vunpack.c.h.s8.bf16 %v272
        %v593 = vunpack.c.h.s8.bf16 %v273
        %v594 = vunpack.c.h.s8.bf16 %v274
        %v595 = vunpack.c.h.s8.bf16 %v275
        %v596 = vunpack.c.h.s8.bf16 %v276
        %v597 = vunpack.c.h.s8.bf16 %v277
        %v598 = vunpack.c.l.s8.bf16 %v278
        %v599 = vunpack.c.l.s8.bf16 %v279
        %v600 = vunpack.c.l.s8.bf16 %v280
        %v601 = vunpack.c.l.s8.bf16 %v281
        %v602 = vunpack.c.l.s8.bf16 %v282
        %v603 = vunpack.c.l.s8.bf16 %v283
        %v604 = vunpack.c.l.s8.bf16 %v284
        %v605 = vunpack.c.l.s8.bf16 %v285
        %v606 = vunpack.c.h.s8.bf16 %v278
        %v607 = vunpack.c.h.s8.bf16 %v279
        %v608 = vunpack.c.h.s8.bf16 %v280
        %v609 = vunpack.c.h.s8.bf16 %v281
        %v610 = vunpack.c.h.s8.bf16 %v282
        %v611 = vunpack.c.h.s8.bf16 %v283
        %v612 = vunpack.c.h.s8.bf16 %v284
        %v613 = vunpack.c.h.s8.bf16 %v285
        %v614 = vunpack.c.l.s8.bf16 %v286
        %v615 = vunpack.c.l.s8.bf16 %v287
        %v616 = vunpack.c.l.s8.bf16 %v288
        %v617 = vunpack.c.l.s8.bf16 %v289
        %v618 = vunpack.c.l.s8.bf16 %v290
        %v619 = vunpack.c.l.s8.bf16 %v291
        %v620 = vunpack.c.l.s8.bf16 %v292
        %v621 = vunpack.c.l.s8.bf16 %v293
        %v622 = vunpack.c.h.s8.bf16 %v286
        %v623 = vunpack.c.h.s8.bf16 %v287
        %v624 = vunpack.c.h.s8.bf16 %v288
        %v625 = vunpack.c.h.s8.bf16 %v289
        %v626 = vunpack.c.h.s8.bf16 %v290
        %v627 = vunpack.c.h.s8.bf16 %v291
        %v628 = vunpack.c.h.s8.bf16 %v292
        %v629 = vunpack.c.h.s8.bf16 %v293
        %v630 = vunpack.c.l.s8.bf16 %v294
        %v631 = vunpack.c.l.s8.bf16 %v295
        %v632 = vunpack.c.l.s8.bf16 %v296
        %v633 = vunpack.c.l.s8.bf16 %v297
        %v634 = vunpack.c.l.s8.bf16 %v298
        %v635 = vunpack.c.l.s8.bf16 %v299
        %v636 = vunpack.c.l.s8.bf16 %v300
        %v637 = vunpack.c.l.s8.bf16 %v301
        %v638 = vunpack.c.h.s8.bf16 %v294
        %v639 = vunpack.c.h.s8.bf16 %v295
        %v640 = vunpack.c.h.s8.bf16 %v296
        %v641 = vunpack.c.h.s8.bf16 %v297
        %v642 = vunpack.c.h.s8.bf16 %v298
        %v643 = vunpack.c.h.s8.bf16 %v299
        %v644 = vunpack.c.h.s8.bf16 %v300
        %v645 = vunpack.c.h.s8.bf16 %v301
        %v646 = vunpack.c.l.s8.bf16 %v302
        %v647 = vunpack.c.l.s8.bf16 %v303
        %v648 = vunpack.c.l.s8.bf16 %v304
        %v649 = vunpack.c.l.s8.bf16 %v305
        %v650 = vunpack.c.l.s8.bf16 %v306
        %v651 = vunpack.c.l.s8.bf16 %v307
        %v652 = vunpack.c.l.s8.bf16 %v308
        %v653 = vunpack.c.l.s8.bf16 %v309
        %v654 = vunpack.c.h.s8.bf16 %v302
        %v655 = vunpack.c.h.s8.bf16 %v303
        %v656 = vunpack.c.h.s8.bf16 %v304
        %v657 = vunpack.c.h.s8.bf16 %v305
        %v658 = vunpack.c.h.s8.bf16 %v306
        %v659 = vunpack.c.h.s8.bf16 %v307
        %v660 = vunpack.c.h.s8.bf16 %v308
        %v661 = vunpack.c.h.s8.bf16 %v309
        %v662 = vunpack.c.l.s8.bf16 %v310
        %v663 = vunpack.c.l.s8.bf16 %v311
        %v664 = vunpack.c.l.s8.bf16 %v312
        %v665 = vunpack.c.l.s8.bf16 %v313
        %v666 = vunpack.c.l.s8.bf16 %v314
        %v667 = vunpack.c.l.s8.bf16 %v315
        %v668 = vunpack.c.l.s8.bf16 %v316
        %v669 = vunpack.c.l.s8.bf16 %v317
        %v670 = vunpack.c.h.s8.bf16 %v310
        %v671 = vunpack.c.h.s8.bf16 %v311
        %v672 = vunpack.c.h.s8.bf16 %v312
        %v673 = vunpack.c.h.s8.bf16 %v313
        %v674 = vunpack.c.h.s8.bf16 %v314
        %v675 = vunpack.c.h.s8.bf16 %v315
        %v676 = vunpack.c.h.s8.bf16 %v316
        %v677 = vunpack.c.h.s8.bf16 %v317
        %v678 = vunpack.c.l.s8.bf16 %v318
        %v679 = vunpack.c.l.s8.bf16 %v319
        %v680 = vunpack.c.l.s8.bf16 %v320
        %v681 = vunpack.c.l.s8.bf16 %v321
        %v682 = vunpack.c.l.s8.bf16 %v322
        %v683 = vunpack.c.l.s8.bf16 %v323
        %v684 = vunpack.c.l.s8.bf16 %v324
        %v685 = vunpack.c.l.s8.bf16 %v325
        %v686 = vunpack.c.h.s8.bf16 %v318
        %v687 = vunpack.c.h.s8.bf16 %v319
        %v688 = vunpack.c.h.s8.bf16 %v320
        %v689 = vunpack.c.h.s8.bf16 %v321
        %v690 = vunpack.c.h.s8.bf16 %v322
        %v691 = vunpack.c.h.s8.bf16 %v323
        %v692 = vunpack.c.h.s8.bf16 %v324
        %v693 = vunpack.c.h.s8.bf16 %v325
        %v694 = vunpack.c.l.s8.bf16 %v326
        %v695 = vunpack.c.l.s8.bf16 %v327
        %v696 = vunpack.c.l.s8.bf16 %v328
        %v697 = vunpack.c.l.s8.bf16 %v329
        %v698 = vunpack.c.l.s8.bf16 %v330
        %v699 = vunpack.c.l.s8.bf16 %v331
        %v700 = vunpack.c.l.s8.bf16 %v332
        %v701 = vunpack.c.l.s8.bf16 %v333
        %v702 = vunpack.c.h.s8.bf16 %v326
        %v703 = vunpack.c.h.s8.bf16 %v327
        %v704 = vunpack.c.h.s8.bf16 %v328
        %v705 = vunpack.c.h.s8.bf16 %v329
        %v706 = vunpack.c.h.s8.bf16 %v330
        %v707 = vunpack.c.h.s8.bf16 %v331
        %v708 = vunpack.c.h.s8.bf16 %v332
        %v709 = vunpack.c.h.s8.bf16 %v333
        %v710 = vunpack.c.l.s8.bf16 %v334
        %v711 = vunpack.c.l.s8.bf16 %v335
        %v712 = vunpack.c.l.s8.bf16 %v336
        %v713 = vunpack.c.l.s8.bf16 %v337
        %v714 = vunpack.c.l.s8.bf16 %v338
        %v715 = vunpack.c.l.s8.bf16 %v339
        %v716 = vunpack.c.l.s8.bf16 %v340
        %v717 = vunpack.c.l.s8.bf16 %v341
        %v718 = vunpack.c.h.s8.bf16 %v334
        %v719 = vunpack.c.h.s8.bf16 %v335
        %v720 = vunpack.c.h.s8.bf16 %v336
        %v721 = vunpack.c.h.s8.bf16 %v337
        %v722 = vunpack.c.h.s8.bf16 %v338
        %v723 = vunpack.c.h.s8.bf16 %v339
        %v724 = vunpack.c.h.s8.bf16 %v340
        %v725 = vunpack.c.h.s8.bf16 %v341
        %v726 = vunpack.c.l.s8.bf16 %v342
        %v727 = vunpack.c.l.s8.bf16 %v343
        %v728 = vunpack.c.l.s8.bf16 %v344
        %v729 = vunpack.c.l.s8.bf16 %v345
        %v730 = vunpack.c.l.s8.bf16 %v346
        %v731 = vunpack.c.l.s8.bf16 %v347
        %v732 = vunpack.c.l.s8.bf16 %v348
        %v733 = vunpack.c.l.s8.bf16 %v349
        %v734 = vunpack.c.h.s8.bf16 %v342
        %v735 = vunpack.c.h.s8.bf16 %v343
        %v736 = vunpack.c.h.s8.bf16 %v344
        %v737 = vunpack.c.h.s8.bf16 %v345
        %v738 = vunpack.c.h.s8.bf16 %v346
        %v739 = vunpack.c.h.s8.bf16 %v347
        %v740 = vunpack.c.h.s8.bf16 %v348
        %v741 = vunpack.c.h.s8.bf16 %v349
        %v742 = vunpack.c.l.s8.bf16 %v350
        %v743 = vunpack.c.l.s8.bf16 %v351
        %v744 = vunpack.c.l.s8.bf16 %v352
        %v745 = vunpack.c.l.s8.bf16 %v353
        %v746 = vunpack.c.l.s8.bf16 %v354
        %v747 = vunpack.c.l.s8.bf16 %v355
        %v748 = vunpack.c.l.s8.bf16 %v356
        %v749 = vunpack.c.l.s8.bf16 %v357
        %v750 = vunpack.c.h.s8.bf16 %v350
        %v751 = vunpack.c.h.s8.bf16 %v351
        %v752 = vunpack.c.h.s8.bf16 %v352
        %v753 = vunpack.c.h.s8.bf16 %v353
        %v754 = vunpack.c.h.s8.bf16 %v354
        %v755 = vunpack.c.h.s8.bf16 %v355
        %v756 = vunpack.c.h.s8.bf16 %v356
        %v757 = vunpack.c.h.s8.bf16 %v357
        %v758 = vunpack.c.l.s8.bf16 %v358
        %v759 = vunpack.c.l.s8.bf16 %v359
        %v760 = vunpack.c.l.s8.bf16 %v360
        %v761 = vunpack.c.l.s8.bf16 %v361
        %v762 = vunpack.c.l.s8.bf16 %v362
        %v763 = vunpack.c.l.s8.bf16 %v363
        %v764 = vunpack.c.l.s8.bf16 %v364
        %v765 = vunpack.c.l.s8.bf16 %v365
        %v766 = vunpack.c.h.s8.bf16 %v358
        %v767 = vunpack.c.h.s8.bf16 %v359
        %v768 = vunpack.c.h.s8.bf16 %v360
        %v769 = vunpack.c.h.s8.bf16 %v361
        %v770 = vunpack.c.h.s8.bf16 %v362
        %v771 = vunpack.c.h.s8.bf16 %v363
        %v772 = vunpack.c.h.s8.bf16 %v364
        %v773 = vunpack.c.h.s8.bf16 %v365
        %v774 = vunpack.c.l.s8.bf16 %v366
        %v775 = vunpack.c.l.s8.bf16 %v367
        %v776 = vunpack.c.l.s8.bf16 %v368
        %v777 = vunpack.c.l.s8.bf16 %v369
        %v778 = vunpack.c.l.s8.bf16 %v370
        %v779 = vunpack.c.l.s8.bf16 %v371
        %v780 = vunpack.c.l.s8.bf16 %v372
        %v781 = vunpack.c.l.s8.bf16 %v373
        %v782 = vunpack.c.h.s8.bf16 %v366
        %v783 = vunpack.c.h.s8.bf16 %v367
        %v784 = vunpack.c.h.s8.bf16 %v368
        %v785 = vunpack.c.h.s8.bf16 %v369
        %v786 = vunpack.c.h.s8.bf16 %v370
        %v787 = vunpack.c.h.s8.bf16 %v371
        %v788 = vunpack.c.h.s8.bf16 %v372
        %v789 = vunpack.c.h.s8.bf16 %v373
        %v790 = vunpack.c.l.s8.bf16 %v374
        %v791 = vunpack.c.l.s8.bf16 %v375
        %v792 = vunpack.c.l.s8.bf16 %v376
        %v793 = vunpack.c.l.s8.bf16 %v377
        %v794 = vunpack.c.l.s8.bf16 %v378
        %v795 = vunpack.c.l.s8.bf16 %v379
        %v796 = vunpack.c.l.s8.bf16 %v380
        %v797 = vunpack.c.l.s8.bf16 %v381
        %v798 = vunpack.c.h.s8.bf16 %v374
        %v799 = vunpack.c.h.s8.bf16 %v375
        %v800 = vunpack.c.h.s8.bf16 %v376
        %v801 = vunpack.c.h.s8.bf16 %v377
        %v802 = vunpack.c.h.s8.bf16 %v378
        %v803 = vunpack.c.h.s8.bf16 %v379
        %v804 = vunpack.c.h.s8.bf16 %v380
        %v805 = vunpack.c.h.s8.bf16 %v381
        %v806 = vunpack.c.l.s8.bf16 %v382
        %v807 = vunpack.c.l.s8.bf16 %v383
        %v808 = vunpack.c.l.s8.bf16 %v384
        %v809 = vunpack.c.l.s8.bf16 %v385
        %v810 = vunpack.c.l.s8.bf16 %v386
        %v811 = vunpack.c.l.s8.bf16 %v387
        %v812 = vunpack.c.l.s8.bf16 %v388
        %v813 = vunpack.c.l.s8.bf16 %v389
        %v814 = vunpack.c.h.s8.bf16 %v382
        %v815 = vunpack.c.h.s8.bf16 %v383
        %v816 = vunpack.c.h.s8.bf16 %v384
        %v817 = vunpack.c.h.s8.bf16 %v385
        %v818 = vunpack.c.h.s8.bf16 %v386
        %v819 = vunpack.c.h.s8.bf16 %v387
        %v820 = vunpack.c.h.s8.bf16 %v388
        %v821 = vunpack.c.h.s8.bf16 %v389
        %v822 = vunpack.c.l.s8.bf16 %v390
        %v823 = vunpack.c.l.s8.bf16 %v391
        %v824 = vunpack.c.l.s8.bf16 %v392
        %v825 = vunpack.c.l.s8.bf16 %v393
        %v826 = vunpack.c.l.s8.bf16 %v394
        %v827 = vunpack.c.l.s8.bf16 %v395
        %v828 = vunpack.c.l.s8.bf16 %v396
        %v829 = vunpack.c.l.s8.bf16 %v397
        %v830 = vunpack.c.h.s8.bf16 %v390
        %v831 = vunpack.c.h.s8.bf16 %v391
        %v832 = vunpack.c.h.s8.bf16 %v392
        %v833 = vunpack.c.h.s8.bf16 %v393
        %v834 = vunpack.c.h.s8.bf16 %v394
        %v835 = vunpack.c.h.s8.bf16 %v395
        %v836 = vunpack.c.h.s8.bf16 %v396
        %v837 = vunpack.c.h.s8.bf16 %v397
        %v838 = vunpack.c.l.s8.bf16 %v398
        %v839 = vunpack.c.l.s8.bf16 %v399
        %v840 = vunpack.c.l.s8.bf16 %v400
        %v841 = vunpack.c.l.s8.bf16 %v401
        %v842 = vunpack.c.l.s8.bf16 %v402
        %v843 = vunpack.c.l.s8.bf16 %v403
        %v844 = vunpack.c.l.s8.bf16 %v404
        %v845 = vunpack.c.l.s8.bf16 %v405
        %v846 = vunpack.c.h.s8.bf16 %v398
        %v847 = vunpack.c.h.s8.bf16 %v399
        %v848 = vunpack.c.h.s8.bf16 %v400
        %v849 = vunpack.c.h.s8.bf16 %v401
        %v850 = vunpack.c.h.s8.bf16 %v402
        %v851 = vunpack.c.h.s8.bf16 %v403
        %v852 = vunpack.c.h.s8.bf16 %v404
        %v853 = vunpack.c.h.s8.bf16 %v405
        %v854 = vunpack.c.l.s8.bf16 %v406
        %v855 = vunpack.c.l.s8.bf16 %v407
        %v856 = vunpack.c.l.s8.bf16 %v408
        %v857 = vunpack.c.l.s8.bf16 %v409
        %v858 = vunpack.c.l.s8.bf16 %v410
        %v859 = vunpack.c.l.s8.bf16 %v411
        %v860 = vunpack.c.l.s8.bf16 %v412
        %v861 = vunpack.c.l.s8.bf16 %v413
        %v862 = vunpack.c.h.s8.bf16 %v406
        %v863 = vunpack.c.h.s8.bf16 %v407
        %v864 = vunpack.c.h.s8.bf16 %v408
        %v865 = vunpack.c.h.s8.bf16 %v409
        %v866 = vunpack.c.h.s8.bf16 %v410
        %v867 = vunpack.c.h.s8.bf16 %v411
        %v868 = vunpack.c.h.s8.bf16 %v412
        %v869 = vunpack.c.h.s8.bf16 %v413
        %v870 = vunpack.c.l.s8.bf16 %v414
        %v871 = vunpack.c.l.s8.bf16 %v415
        %v872 = vunpack.c.l.s8.bf16 %v416
        %v873 = vunpack.c.l.s8.bf16 %v417
        %v874 = vunpack.c.l.s8.bf16 %v418
        %v875 = vunpack.c.l.s8.bf16 %v419
        %v876 = vunpack.c.l.s8.bf16 %v420
        %v877 = vunpack.c.l.s8.bf16 %v421
        %v878 = vunpack.c.h.s8.bf16 %v414
        %v879 = vunpack.c.h.s8.bf16 %v415
        %v880 = vunpack.c.h.s8.bf16 %v416
        %v881 = vunpack.c.h.s8.bf16 %v417
        %v882 = vunpack.c.h.s8.bf16 %v418
        %v883 = vunpack.c.h.s8.bf16 %v419
        %v884 = vunpack.c.h.s8.bf16 %v420
        %v885 = vunpack.c.h.s8.bf16 %v421
        %v886 = vunpack.c.l.s8.bf16 %v422
        %v887 = vunpack.c.l.s8.bf16 %v423
        %v888 = vunpack.c.l.s8.bf16 %v424
        %v889 = vunpack.c.l.s8.bf16 %v425
        %v890 = vunpack.c.l.s8.bf16 %v426
        %v891 = vunpack.c.l.s8.bf16 %v427
        %v892 = vunpack.c.l.s8.bf16 %v428
        %v893 = vunpack.c.l.s8.bf16 %v429
        %v894 = vunpack.c.h.s8.bf16 %v422
        %v895 = vunpack.c.h.s8.bf16 %v423
        %v896 = vunpack.c.h.s8.bf16 %v424
        %v897 = vunpack.c.h.s8.bf16 %v425
        %v898 = vunpack.c.h.s8.bf16 %v426
        %v899 = vunpack.c.h.s8.bf16 %v427
        %v900 = vunpack.c.h.s8.bf16 %v428
        %v901 = vunpack.c.h.s8.bf16 %v429
        %v902 = vunpack.c.l.s8.bf16 %v430
        %v903 = vunpack.c.l.s8.bf16 %v431
        %v904 = vunpack.c.l.s8.bf16 %v432
        %v905 = vunpack.c.l.s8.bf16 %v433
        %v906 = vunpack.c.l.s8.bf16 %v434
        %v907 = vunpack.c.l.s8.bf16 %v435
        %v908 = vunpack.c.l.s8.bf16 %v436
        %v909 = vunpack.c.l.s8.bf16 %v437
        %v910 = vunpack.c.h.s8.bf16 %v430
        %v911 = vunpack.c.h.s8.bf16 %v431
        %v912 = vunpack.c.h.s8.bf16 %v432
        %v913 = vunpack.c.h.s8.bf16 %v433
        %v914 = vunpack.c.h.s8.bf16 %v434
        %v915 = vunpack.c.h.s8.bf16 %v435
        %v916 = vunpack.c.h.s8.bf16 %v436
        %v917 = vunpack.c.h.s8.bf16 %v437
        %v918 = vunpack.c.l.s8.bf16 %v438
        %v919 = vunpack.c.l.s8.bf16 %v439
        %v920 = vunpack.c.l.s8.bf16 %v440
        %v921 = vunpack.c.l.s8.bf16 %v441
        %v922 = vunpack.c.l.s8.bf16 %v442
        %v923 = vunpack.c.l.s8.bf16 %v443
        %v924 = vunpack.c.l.s8.bf16 %v444
        %v925 = vunpack.c.l.s8.bf16 %v445
        %v926 = vunpack.c.h.s8.bf16 %v438
        %v927 = vunpack.c.h.s8.bf16 %v439
        %v928 = vunpack.c.h.s8.bf16 %v440
        %v929 = vunpack.c.h.s8.bf16 %v441
        %v930 = vunpack.c.h.s8.bf16 %v442
        %v931 = vunpack.c.h.s8.bf16 %v443
        %v932 = vunpack.c.h.s8.bf16 %v444
        %v933 = vunpack.c.h.s8.bf16 %v445
        %v934 = vunpack.c.l.s8.bf16 %v446
        %v935 = vunpack.c.l.s8.bf16 %v447
        %v936 = vunpack.c.l.s8.bf16 %v448
        %v937 = vunpack.c.l.s8.bf16 %v449
        %v938 = vunpack.c.l.s8.bf16 %v450
        %v939 = vunpack.c.l.s8.bf16 %v451
        %v940 = vunpack.c.l.s8.bf16 %v452
        %v941 = vunpack.c.l.s8.bf16 %v453
        %v942 = vunpack.c.h.s8.bf16 %v446
        %v943 = vunpack.c.h.s8.bf16 %v447
        %v944 = vunpack.c.h.s8.bf16 %v448
        %v945 = vunpack.c.h.s8.bf16 %v449
        %v946 = vunpack.c.h.s8.bf16 %v450
        %v947 = vunpack.c.h.s8.bf16 %v451
        %v948 = vunpack.c.h.s8.bf16 %v452
        %v949 = vunpack.c.h.s8.bf16 %v453
        %v950 = vunpack.c.l.s8.bf16 %v454
        %v951 = vunpack.c.l.s8.bf16 %v455
        %v952 = vunpack.c.l.s8.bf16 %v456
        %v953 = vunpack.c.l.s8.bf16 %v457
        %v954 = vunpack.c.l.s8.bf16 %v458
        %v955 = vunpack.c.l.s8.bf16 %v459
        %v956 = vunpack.c.l.s8.bf16 %v460
        %v957 = vunpack.c.l.s8.bf16 %v461
        %v958 = vunpack.c.h.s8.bf16 %v454
        %v959 = vunpack.c.h.s8.bf16 %v455
        %v960 = vunpack.c.h.s8.bf16 %v456
        %v961 = vunpack.c.h.s8.bf16 %v457
        %v962 = vunpack.c.h.s8.bf16 %v458
        %v963 = vunpack.c.h.s8.bf16 %v459
        %v964 = vunpack.c.h.s8.bf16 %v460
        %v965 = vunpack.c.h.s8.bf16 %v461
        %v966 = vunpack.c.l.s8.bf16 %v462
        %v967 = vunpack.c.l.s8.bf16 %v463
        %v968 = vunpack.c.l.s8.bf16 %v464
        %v969 = vunpack.c.l.s8.bf16 %v465
        %v970 = vunpack.c.l.s8.bf16 %v466
        %v971 = vunpack.c.l.s8.bf16 %v467
        %v972 = vunpack.c.l.s8.bf16 %v468
        %v973 = vunpack.c.l.s8.bf16 %v469
        %v974 = vunpack.c.h.s8.bf16 %v462
        %v975 = vunpack.c.h.s8.bf16 %v463
        %v976 = vunpack.c.h.s8.bf16 %v464
        %v977 = vunpack.c.h.s8.bf16 %v465
        %v978 = vunpack.c.h.s8.bf16 %v466
        %v979 = vunpack.c.h.s8.bf16 %v467
        %v980 = vunpack.c.h.s8.bf16 %v468
        %v981 = vunpack.c.h.s8.bf16 %v469
        %v982 = vld [vmem:[%s198] sm:$0xff]
        %v983 = vld [vmem:[%s198 + $0x8] sm:$0xff]
        %v986 = vcombine.high %v982, %v982
        %v988 = vunpack.c.l.s4 1983009808
        %v989 = vunpack.c.0.s8 %v988
        %v990 = vlaneseq
        %v991 = vshrl.u32 %v990, 7
        %v992 = vsub.s32 %v989, %v991
        %v993 = vrot.slane %v982, %v992
        %v995 = vunpack.c.l.s4 1983009808
        %v996 = vunpack.c.0.s8 %v995
        %v997 = vlaneseq
        %v998 = vshrl.u32 %v997, 7
        %v999 = vsub.s32 %v996, %v998
        %v1000 = vrot.slane %v986, %v999
        %v1001 = vcombine.high %v993, %v993
        %v1002 = vcombine.high %v1000, %v1000
        %v1003 = vcombine.high %v983, %v983
        %v1005 = vunpack.c.l.s4 1983009808
        %v1006 = vunpack.c.0.s8 %v1005
        %v1007 = vlaneseq
        %v1008 = vshrl.u32 %v1007, 7
        %v1009 = vsub.s32 %v1006, %v1008
        %v1010 = vrot.slane %v983, %v1009
        %v1012 = vunpack.c.l.s4 1983009808
        %v1013 = vunpack.c.0.s8 %v1012
        %v1014 = vlaneseq
        %v1015 = vshrl.u32 %v1014, 7
        %v1016 = vsub.s32 %v1013, %v1015
        %v1017 = vrot.slane %v1003, %v1016
        %v1018 = vcombine.high %v1010, %v1010
        %v1019 = vcombine.high %v1017, %v1017
        %v1028 = vpack.c.bf16 %v993, %v993
        %v1029 = vpack.c.bf16 %v1001, %v1001
        %v1030 = vpack.c.bf16 %v1000, %v1000
        %v1031 = vpack.c.bf16 %v1002, %v1002
        %v1032 = vpack.c.bf16 %v1010, %v1010
        %v1033 = vpack.c.bf16 %v1018, %v1018
        %v1034 = vpack.c.bf16 %v1017, %v1017
        %v1035 = vpack.c.bf16 %v1019, %v1019
        %v1036 = vld [vmem:[%s206] sm:$0xff]
        %v1037 = vld [vmem:[%s206 + $0x8] sm:$0xff]
        %1038 = vmatprep.subr.bf16.mxu0 %v471
        %1039 = vmatpush1.bf16.msra.mxu0 %v470
        %1040 = vmatprep.subr.bf16.mxu0 %v479
        %1041 = vmatpush1.bf16.msra.mxu0 %v478
        %1042 = vmatprep.subr.bf16.mxu0 %v487
        %1043 = vmatpush1.bf16.msra.mxu0 %v486
        %1044 = vmatprep.subr.bf16.mxu0 %v495
        %1045 = vmatpush1.bf16.msra.mxu0 %v494
        %1046 = vmatprep.subr.bf16.mxu0 %v503
        %1047 = vmatpush1.bf16.msra.mxu0 %v502
        %1048 = vmatprep.subr.bf16.mxu0 %v511
        %1049 = vmatpush1.bf16.msra.mxu0 %v510
        %1050 = vmatprep.subr.bf16.mxu0 %v519
        %1051 = vmatpush1.bf16.msra.mxu0 %v518
        %1052 = vmatprep.subr.bf16.mxu0 %v527
        %1053 = vmatpush1.bf16.msra.mxu0 %v526
        %1054 = vmatprep.subr.bf16.mxu0 %v535
        %1055 = vmatpush1.bf16.msra.mxu0 %v534
        %1056 = vmatprep.subr.bf16.mxu0 %v543
        %1057 = vmatpush1.bf16.msra.mxu0 %v542
        %1058 = vmatprep.subr.bf16.mxu0 %v551
        %1059 = vmatpush1.bf16.msra.mxu0 %v550
        %1060 = vmatprep.subr.bf16.mxu0 %v559
        %1061 = vmatpush1.bf16.msra.mxu0 %v558
        %1062 = vmatprep.subr.bf16.mxu0 %v567
        %1063 = vmatpush1.bf16.msra.mxu0 %v566
        %1064 = vmatprep.subr.bf16.mxu0 %v575
        %1065 = vmatpush1.bf16.msra.mxu0 %v574
        %1066 = vmatprep.subr.bf16.mxu0 %v583
        %1067 = vmatpush1.bf16.msra.mxu0 %v582
        %1068 = vmatprep.subr.bf16.mxu0 %v591
        %1069 = vmatpush1.bf16.msra.mxu0 %v590
        %1070 = vmatprep.mubr.bf16.mxu0 %v1029
        %1071 = vmatmul.mubr.bf16.gmra.mrb[0].mxu0 %v1028
        %v1072 = vpop.f32.mrb[0].mxu0
        %v1073 = vadd.f32 0.0, %v1072
        %v1074 = vpop.f32.mrb[0].mxu0
        %v1075 = vadd.f32 0.0, %v1074
        %v1076 = vpop.f32.mrb[0].mxu0
        %v1077 = vpop.f32.mrb[0].mxu0
        %1078 = vdwg.mxu0
        %1079 = vmatprep.subr.bf16.mxu0 %v599
        %1080 = vmatpush1.bf16.msra.mxu0 %v598
        %1081 = vmatprep.subr.bf16.mxu0 %v607
        %1082 = vmatpush1.bf16.msra.mxu0 %v606
        %1083 = vmatprep.subr.bf16.mxu0 %v615
        %1084 = vmatpush1.bf16.msra.mxu0 %v614
        %1085 = vmatprep.subr.bf16.mxu0 %v623
        %1086 = vmatpush1.bf16.msra.mxu0 %v622
        %1087 = vmatprep.subr.bf16.mxu0 %v631
        %1088 = vmatpush1.bf16.msra.mxu0 %v630
        %1089 = vmatprep.subr.bf16.mxu0 %v639
        %1090 = vmatpush1.bf16.msra.mxu0 %v638
        %1091 = vmatprep.subr.bf16.mxu0 %v647
        %1092 = vmatpush1.bf16.msra.mxu0 %v646
        %1093 = vmatprep.subr.bf16.mxu0 %v655
        %1094 = vmatpush1.bf16.msra.mxu0 %v654
        %1095 = vmatprep.subr.bf16.mxu0 %v663
        %1096 = vmatpush1.bf16.msra.mxu0 %v662
        %1097 = vmatprep.subr.bf16.mxu0 %v671
        %1098 = vmatpush1.bf16.msra.mxu0 %v670
        %1099 = vmatprep.subr.bf16.mxu0 %v679
        %1100 = vmatpush1.bf16.msra.mxu0 %v678
        %1101 = vmatprep.subr.bf16.mxu0 %v687
        %1102 = vmatpush1.bf16.msra.mxu0 %v686
        %1103 = vmatprep.subr.bf16.mxu0 %v695
        %1104 = vmatpush1.bf16.msra.mxu0 %v694
        %1105 = vmatprep.subr.bf16.mxu0 %v703
        %1106 = vmatpush1.bf16.msra.mxu0 %v702
        %1107 = vmatprep.subr.bf16.mxu0 %v711
        %1108 = vmatpush1.bf16.msra.mxu0 %v710
        %1109 = vmatprep.subr.bf16.mxu0 %v719
        %1110 = vmatpush1.bf16.msra.mxu0 %v718
        %1111 = vmatprep.mubr.bf16.mxu0 %v1031
        %1112 = vmatmul.mubr.bf16.gmra.mrb[0].mxu0 %v1030
        %v1113 = vpop.f32.mrb[0].mxu0
        %v1114 = vadd.f32 %v1073, %v1113
        %v1115 = vpop.f32.mrb[0].mxu0
        %v1116 = vadd.f32 %v1075, %v1115
        %v1117 = vpop.f32.mrb[0].mxu0
        %v1118 = vpop.f32.mrb[0].mxu0
        %1119 = vdwg.mxu0
        %1120 = vmatprep.subr.bf16.mxu0 %v727
        %1121 = vmatpush1.bf16.msra.mxu0 %v726
        %1122 = vmatprep.subr.bf16.mxu0 %v735
        %1123 = vmatpush1.bf16.msra.mxu0 %v734
        %1124 = vmatprep.subr.bf16.mxu0 %v743
        %1125 = vmatpush1.bf16.msra.mxu0 %v742
        %1126 = vmatprep.subr.bf16.mxu0 %v751
        %1127 = vmatpush1.bf16.msra.mxu0 %v750
        %1128 = vmatprep.subr.bf16.mxu0 %v759
        %1129 = vmatpush1.bf16.msra.mxu0 %v758
        %1130 = vmatprep.subr.bf16.mxu0 %v767
        %1131 = vmatpush1.bf16.msra.mxu0 %v766
        %1132 = vmatprep.subr.bf16.mxu0 %v775
        %1133 = vmatpush1.bf16.msra.mxu0 %v774
        %1134 = vmatprep.subr.bf16.mxu0 %v783
        %1135 = vmatpush1.bf16.msra.mxu0 %v782
        %1136 = vmatprep.subr.bf16.mxu0 %v791
        %1137 = vmatpush1.bf16.msra.mxu0 %v790
        %1138 = vmatprep.subr.bf16.mxu0 %v799
        %1139 = vmatpush1.bf16.msra.mxu0 %v798
        %1140 = vmatprep.subr.bf16.mxu0 %v807
        %1141 = vmatpush1.bf16.msra.mxu0 %v806
        %1142 = vmatprep.subr.bf16.mxu0 %v815
        %1143 = vmatpush1.bf16.msra.mxu0 %v814
        %1144 = vmatprep.subr.bf16.mxu0 %v823
        %1145 = vmatpush1.bf16.msra.mxu0 %v822
        %1146 = vmatprep.subr.bf16.mxu0 %v831
        %1147 = vmatpush1.bf16.msra.mxu0 %v830
        %1148 = vmatprep.subr.bf16.mxu0 %v839
        %1149 = vmatpush1.bf16.msra.mxu0 %v838
        %1150 = vmatprep.subr.bf16.mxu0 %v847
        %1151 = vmatpush1.bf16.msra.mxu0 %v846
        %1152 = vmatprep.mubr.bf16.mxu0 %v1033
        %1153 = vmatmul.mubr.bf16.gmra.mrb[0].mxu0 %v1032
        %v1154 = vpop.f32.mrb[0].mxu0
        %v1155 = vadd.f32 %v1114, %v1154
        %v1156 = vpop.f32.mrb[0].mxu0
        %v1157 = vadd.f32 %v1116, %v1156
        %v1158 = vpop.f32.mrb[0].mxu0
        %v1159 = vpop.f32.mrb[0].mxu0
        %1160 = vdwg.mxu0
        %1161 = vmatprep.subr.bf16.mxu0 %v855
        %1162 = vmatpush1.bf16.msra.mxu0 %v854
        %1163 = vmatprep.subr.bf16.mxu0 %v863
        %1164 = vmatpush1.bf16.msra.mxu0 %v862
        %1165 = vmatprep.subr.bf16.mxu0 %v871
        %1166 = vmatpush1.bf16.msra.mxu0 %v870
        %1167 = vmatprep.subr.bf16.mxu0 %v879
        %1168 = vmatpush1.bf16.msra.mxu0 %v878
        %1169 = vmatprep.subr.bf16.mxu0 %v887
        %1170 = vmatpush1.bf16.msra.mxu0 %v886
        %1171 = vmatprep.subr.bf16.mxu0 %v895
        %1172 = vmatpush1.bf16.msra.mxu0 %v894
        %1173 = vmatprep.subr.bf16.mxu0 %v903
        %1174 = vmatpush1.bf16.msra.mxu0 %v902
        %1175 = vmatprep.subr.bf16.mxu0 %v911
        %1176 = vmatpush1.bf16.msra.mxu0 %v910
        %1177 = vmatprep.subr.bf16.mxu0 %v919
        %1178 = vmatpush1.bf16.msra.mxu0 %v918
        %1179 = vmatprep.subr.bf16.mxu0 %v927
        %1180 = vmatpush1.bf16.msra.mxu0 %v926
        %1181 = vmatprep.subr.bf16.mxu0 %v935
        %1182 = vmatpush1.bf16.msra.mxu0 %v934
        %1183 = vmatprep.subr.bf16.mxu0 %v943
        %1184 = vmatpush1.bf16.msra.mxu0 %v942
        %1185 = vmatprep.subr.bf16.mxu0 %v951
        %1186 = vmatpush1.bf16.msra.mxu0 %v950
        %1187 = vmatprep.subr.bf16.mxu0 %v959
        %1188 = vmatpush1.bf16.msra.mxu0 %v958
        %1189 = vmatprep.subr.bf16.mxu0 %v967
        %1190 = vmatpush1.bf16.msra.mxu0 %v966
        %1191 = vmatprep.subr.bf16.mxu0 %v975
        %1192 = vmatpush1.bf16.msra.mxu0 %v974
        %1193 = vmatprep.mubr.bf16.mxu0 %v1035
        %1194 = vmatmul.mubr.bf16.gmra.mrb[0].mxu0 %v1034
        %v1195 = vpop.f32.mrb[0].mxu0
        %v1196 = vadd.f32 %v1155, %v1195
        %v1197 = vpop.f32.mrb[0].mxu0
        %v1198 = vadd.f32 %v1157, %v1197
        %v1199 = vpop.f32.mrb[0].mxu0
        %v1200 = vpop.f32.mrb[0].mxu0
        %1201 = vdwg.mxu0
        %1202 = vmatprep.subr.bf16.mxu0 %v473
        %1203 = vmatpush1.bf16.msra.mxu0 %v472
        %1204 = vmatprep.subr.bf16.mxu0 %v481
        %1205 = vmatpush1.bf16.msra.mxu0 %v480
        %1206 = vmatprep.subr.bf16.mxu0 %v489
        %1207 = vmatpush1.bf16.msra.mxu0 %v488
        %1208 = vmatprep.subr.bf16.mxu0 %v497
        %1209 = vmatpush1.bf16.msra.mxu0 %v496
        %1210 = vmatprep.subr.bf16.mxu0 %v505
        %1211 = vmatpush1.bf16.msra.mxu0 %v504
        %1212 = vmatprep.subr.bf16.mxu0 %v513
        %1213 = vmatpush1.bf16.msra.mxu0 %v512
        %1214 = vmatprep.subr.bf16.mxu0 %v521
        %1215 = vmatpush1.bf16.msra.mxu0 %v520
        %1216 = vmatprep.subr.bf16.mxu0 %v529
        %1217 = vmatpush1.bf16.msra.mxu0 %v528
        %1218 = vmatprep.subr.bf16.mxu0 %v537
        %1219 = vmatpush1.bf16.msra.mxu0 %v536
        %1220 = vmatprep.subr.bf16.mxu0 %v545
        %1221 = vmatpush1.bf16.msra.mxu0 %v544
        %1222 = vmatprep.subr.bf16.mxu0 %v553
        %1223 = vmatpush1.bf16.msra.mxu0 %v552
        %1224 = vmatprep.subr.bf16.mxu0 %v561
        %1225 = vmatpush1.bf16.msra.mxu0 %v560
        %1226 = vmatprep.subr.bf16.mxu0 %v569
        %1227 = vmatpush1.bf16.msra.mxu0 %v568
        %1228 = vmatprep.subr.bf16.mxu0 %v577
        %1229 = vmatpush1.bf16.msra.mxu0 %v576
        %1230 = vmatprep.subr.bf16.mxu0 %v585
        %1231 = vmatpush1.bf16.msra.mxu0 %v584
        %1232 = vmatprep.subr.bf16.mxu0 %v593
        %1233 = vmatpush1.bf16.msra.mxu0 %v592
        %1234 = vmatprep.mubr.bf16.mxu0 %v1029
        %1235 = vmatmul.mubr.bf16.gmra.mrb[0].mxu0 %v1028
        %v1236 = vpop.f32.mrb[0].mxu0
        %v1237 = vadd.f32 0.0, %v1236
        %v1238 = vpop.f32.mrb[0].mxu0
        %v1239 = vadd.f32 0.0, %v1238
        %v1240 = vpop.f32.mrb[0].mxu0
        %v1241 = vpop.f32.mrb[0].mxu0
        %1242 = vdwg.mxu0
        %1243 = vmatprep.subr.bf16.mxu0 %v601
        %1244 = vmatpush1.bf16.msra.mxu0 %v600
        %1245 = vmatprep.subr.bf16.mxu0 %v609
        %1246 = vmatpush1.bf16.msra.mxu0 %v608
        %1247 = vmatprep.subr.bf16.mxu0 %v617
        %1248 = vmatpush1.bf16.msra.mxu0 %v616
        %1249 = vmatprep.subr.bf16.mxu0 %v625
        %1250 = vmatpush1.bf16.msra.mxu0 %v624
        %1251 = vmatprep.subr.bf16.mxu0 %v633
        %1252 = vmatpush1.bf16.msra.mxu0 %v632
        %1253 = vmatprep.subr.bf16.mxu0 %v641
        %1254 = vmatpush1.bf16.msra.mxu0 %v640
        %1255 = vmatprep.subr.bf16.mxu0 %v649
        %1256 = vmatpush1.bf16.msra.mxu0 %v648
        %1257 = vmatprep.subr.bf16.mxu0 %v657
        %1258 = vmatpush1.bf16.msra.mxu0 %v656
        %1259 = vmatprep.subr.bf16.mxu0 %v665
        %1260 = vmatpush1.bf16.msra.mxu0 %v664
        %1261 = vmatprep.subr.bf16.mxu0 %v673
        %1262 = vmatpush1.bf16.msra.mxu0 %v672
        %1263 = vmatprep.subr.bf16.mxu0 %v681
        %1264 = vmatpush1.bf16.msra.mxu0 %v680
        %1265 = vmatprep.subr.bf16.mxu0 %v689
        %1266 = vmatpush1.bf16.msra.mxu0 %v688
        %1267 = vmatprep.subr.bf16.mxu0 %v697
        %1268 = vmatpush1.bf16.msra.mxu0 %v696
        %1269 = vmatprep.subr.bf16.mxu0 %v705
        %1270 = vmatpush1.bf16.msra.mxu0 %v704
        %1271 = vmatprep.subr.bf16.mxu0 %v713
        %1272 = vmatpush1.bf16.msra.mxu0 %v712
        %1273 = vmatprep.subr.bf16.mxu0 %v721
        %1274 = vmatpush1.bf16.msra.mxu0 %v720
        %1275 = vmatprep.mubr.bf16.mxu0 %v1031
        %1276 = vmatmul.mubr.bf16.gmra.mrb[0].mxu0 %v1030
        %v1277 = vpop.f32.mrb[0].mxu0
        %v1278 = vadd.f32 %v1237, %v1277
        %v1279 = vpop.f32.mrb[0].mxu0
        %v1280 = vadd.f32 %v1239, %v1279
        %v1281 = vpop.f32.mrb[0].mxu0
        %v1282 = vpop.f32.mrb[0].mxu0
        %1283 = vdwg.mxu0
        %1284 = vmatprep.subr.bf16.mxu0 %v729
        %1285 = vmatpush1.bf16.msra.mxu0 %v728
        %1286 = vmatprep.subr.bf16.mxu0 %v737
        %1287 = vmatpush1.bf16.msra.mxu0 %v736
        %1288 = vmatprep.subr.bf16.mxu0 %v745
        %1289 = vmatpush1.bf16.msra.mxu0 %v744
        %1290 = vmatprep.subr.bf16.mxu0 %v753
        %1291 = vmatpush1.bf16.msra.mxu0 %v752
        %1292 = vmatprep.subr.bf16.mxu0 %v761
        %1293 = vmatpush1.bf16.msra.mxu0 %v760
        %1294 = vmatprep.subr.bf16.mxu0 %v769
        %1295 = vmatpush1.bf16.msra.mxu0 %v768
        %1296 = vmatprep.subr.bf16.mxu0 %v777
        %1297 = vmatpush1.bf16.msra.mxu0 %v776
        %1298 = vmatprep.subr.bf16.mxu0 %v785
        %1299 = vmatpush1.bf16.msra.mxu0 %v784
        %1300 = vmatprep.subr.bf16.mxu0 %v793
        %1301 = vmatpush1.bf16.msra.mxu0 %v792
        %1302 = vmatprep.subr.bf16.mxu0 %v801
        %1303 = vmatpush1.bf16.msra.mxu0 %v800
        %1304 = vmatprep.subr.bf16.mxu0 %v809
        %1305 = vmatpush1.bf16.msra.mxu0 %v808
        %1306 = vmatprep.subr.bf16.mxu0 %v817
        %1307 = vmatpush1.bf16.msra.mxu0 %v816
        %1308 = vmatprep.subr.bf16.mxu0 %v825
        %1309 = vmatpush1.bf16.msra.mxu0 %v824
        %1310 = vmatprep.subr.bf16.mxu0 %v833
        %1311 = vmatpush1.bf16.msra.mxu0 %v832
        %1312 = vmatprep.subr.bf16.mxu0 %v841
        %1313 = vmatpush1.bf16.msra.mxu0 %v840
        %1314 = vmatprep.subr.bf16.mxu0 %v849
        %1315 = vmatpush1.bf16.msra.mxu0 %v848
        %1316 = vmatprep.mubr.bf16.mxu0 %v1033
        %1317 = vmatmul.mubr.bf16.gmra.mrb[0].mxu0 %v1032
        %v1318 = vpop.f32.mrb[0].mxu0
        %v1319 = vadd.f32 %v1278, %v1318
        %v1320 = vpop.f32.mrb[0].mxu0
        %v1321 = vadd.f32 %v1280, %v1320
        %v1322 = vpop.f32.mrb[0].mxu0
        %v1323 = vpop.f32.mrb[0].mxu0
        %1324 = vdwg.mxu0
        %1325 = vmatprep.subr.bf16.mxu0 %v857
        %1326 = vmatpush1.bf16.msra.mxu0 %v856
        %1327 = vmatprep.subr.bf16.mxu0 %v865
        %1328 = vmatpush1.bf16.msra.mxu0 %v864
        %1329 = vmatprep.subr.bf16.mxu0 %v873
        %1330 = vmatpush1.bf16.msra.mxu0 %v872
        %1331 = vmatprep.subr.bf16.mxu0 %v881
        %1332 = vmatpush1.bf16.msra.mxu0 %v880
        %1333 = vmatprep.subr.bf16.mxu0 %v889
        %1334 = vmatpush1.bf16.msra.mxu0 %v888
        %1335 = vmatprep.subr.bf16.mxu0 %v897
        %1336 = vmatpush1.bf16.msra.mxu0 %v896
        %1337 = vmatprep.subr.bf16.mxu0 %v905
        %1338 = vmatpush1.bf16.msra.mxu0 %v904
        %1339 = vmatprep.subr.bf16.mxu0 %v913
        %1340 = vmatpush1.bf16.msra.mxu0 %v912
        %1341 = vmatprep.subr.bf16.mxu0 %v921
        %1342 = vmatpush1.bf16.msra.mxu0 %v920
        %1343 = vmatprep.subr.bf16.mxu0 %v929
        %1344 = vmatpush1.bf16.msra.mxu0 %v928
        %1345 = vmatprep.subr.bf16.mxu0 %v937
        %1346 = vmatpush1.bf16.msra.mxu0 %v936
        %1347 = vmatprep.subr.bf16.mxu0 %v945
        %1348 = vmatpush1.bf16.msra.mxu0 %v944
        %1349 = vmatprep.subr.bf16.mxu0 %v953
        %1350 = vmatpush1.bf16.msra.mxu0 %v952
        %1351 = vmatprep.subr.bf16.mxu0 %v961
        %1352 = vmatpush1.bf16.msra.mxu0 %v960
        %1353 = vmatprep.subr.bf16.mxu0 %v969
        %1354 = vmatpush1.bf16.msra.mxu0 %v968
        %1355 = vmatprep.subr.bf16.mxu0 %v977
        %1356 = vmatpush1.bf16.msra.mxu0 %v976
        %1357 = vmatprep.mubr.bf16.mxu0 %v1035
        %1358 = vmatmul.mubr.bf16.gmra.mrb[0].mxu0 %v1034
        %v1359 = vpop.f32.mrb[0].mxu0
        %v1360 = vadd.f32 %v1319, %v1359
        %v1361 = vpop.f32.mrb[0].mxu0
        %v1362 = vadd.f32 %v1321, %v1361
        %v1363 = vpop.f32.mrb[0].mxu0
        %v1364 = vpop.f32.mrb[0].mxu0
        %1365 = vdwg.mxu0
        %1366 = vmatprep.subr.bf16.mxu0 %v475
        %1367 = vmatpush1.bf16.msra.mxu0 %v474
        %1368 = vmatprep.subr.bf16.mxu0 %v483
        %1369 = vmatpush1.bf16.msra.mxu0 %v482
        %1370 = vmatprep.subr.bf16.mxu0 %v491
        %1371 = vmatpush1.bf16.msra.mxu0 %v490
        %1372 = vmatprep.subr.bf16.mxu0 %v499
        %1373 = vmatpush1.bf16.msra.mxu0 %v498
        %1374 = vmatprep.subr.bf16.mxu0 %v507
        %1375 = vmatpush1.bf16.msra.mxu0 %v506
        %1376 = vmatprep.subr.bf16.mxu0 %v515
        %1377 = vmatpush1.bf16.msra.mxu0 %v514
        %1378 = vmatprep.subr.bf16.mxu0 %v523
        %1379 = vmatpush1.bf16.msra.mxu0 %v522
        %1380 = vmatprep.subr.bf16.mxu0 %v531
        %1381 = vmatpush1.bf16.msra.mxu0 %v530
        %1382 = vmatprep.subr.bf16.mxu0 %v539
        %1383 = vmatpush1.bf16.msra.mxu0 %v538
        %1384 = vmatprep.subr.bf16.mxu0 %v547
        %1385 = vmatpush1.bf16.msra.mxu0 %v546
        %1386 = vmatprep.subr.bf16.mxu0 %v555
        %1387 = vmatpush1.bf16.msra.mxu0 %v554
        %1388 = vmatprep.subr.bf16.mxu0 %v563
        %1389 = vmatpush1.bf16.msra.mxu0 %v562
        %1390 = vmatprep.subr.bf16.mxu0 %v571
        %1391 = vmatpush1.bf16.msra.mxu0 %v570
        %1392 = vmatprep.subr.bf16.mxu0 %v579
        %1393 = vmatpush1.bf16.msra.mxu0 %v578
        %1394 = vmatprep.subr.bf16.mxu0 %v587
        %1395 = vmatpush1.bf16.msra.mxu0 %v586
        %1396 = vmatprep.subr.bf16.mxu0 %v595
        %1397 = vmatpush1.bf16.msra.mxu0 %v594
        %1398 = vmatprep.mubr.bf16.mxu0 %v1029
        %1399 = vmatmul.mubr.bf16.gmra.mrb[0].mxu0 %v1028
        %v1400 = vpop.f32.mrb[0].mxu0
        %v1401 = vadd.f32 0.0, %v1400
        %v1402 = vpop.f32.mrb[0].mxu0
        %v1403 = vadd.f32 0.0, %v1402
        %v1404 = vpop.f32.mrb[0].mxu0
        %v1405 = vpop.f32.mrb[0].mxu0
        %1406 = vdwg.mxu0
        %1407 = vmatprep.subr.bf16.mxu0 %v603
        %1408 = vmatpush1.bf16.msra.mxu0 %v602
        %1409 = vmatprep.subr.bf16.mxu0 %v611
        %1410 = vmatpush1.bf16.msra.mxu0 %v610
        %1411 = vmatprep.subr.bf16.mxu0 %v619
        %1412 = vmatpush1.bf16.msra.mxu0 %v618
        %1413 = vmatprep.subr.bf16.mxu0 %v627
        %1414 = vmatpush1.bf16.msra.mxu0 %v626
        %1415 = vmatprep.subr.bf16.mxu0 %v635
        %1416 = vmatpush1.bf16.msra.mxu0 %v634
        %1417 = vmatprep.subr.bf16.mxu0 %v643
        %1418 = vmatpush1.bf16.msra.mxu0 %v642
        %1419 = vmatprep.subr.bf16.mxu0 %v651
        %1420 = vmatpush1.bf16.msra.mxu0 %v650
        %1421 = vmatprep.subr.bf16.mxu0 %v659
        %1422 = vmatpush1.bf16.msra.mxu0 %v658
        %1423 = vmatprep.subr.bf16.mxu0 %v667
        %1424 = vmatpush1.bf16.msra.mxu0 %v666
        %1425 = vmatprep.subr.bf16.mxu0 %v675
        %1426 = vmatpush1.bf16.msra.mxu0 %v674
        %1427 = vmatprep.subr.bf16.mxu0 %v683
        %1428 = vmatpush1.bf16.msra.mxu0 %v682
        %1429 = vmatprep.subr.bf16.mxu0 %v691
        %1430 = vmatpush1.bf16.msra.mxu0 %v690
        %1431 = vmatprep.subr.bf16.mxu0 %v699
        %1432 = vmatpush1.bf16.msra.mxu0 %v698
        %1433 = vmatprep.subr.bf16.mxu0 %v707
        %1434 = vmatpush1.bf16.msra.mxu0 %v706
        %1435 = vmatprep.subr.bf16.mxu0 %v715
        %1436 = vmatpush1.bf16.msra.mxu0 %v714
        %1437 = vmatprep.subr.bf16.mxu0 %v723
        %1438 = vmatpush1.bf16.msra.mxu0 %v722
        %1439 = vmatprep.mubr.bf16.mxu0 %v1031
        %1440 = vmatmul.mubr.bf16.gmra.mrb[0].mxu0 %v1030
        %v1441 = vpop.f32.mrb[0].mxu0
        %v1442 = vadd.f32 %v1401, %v1441
        %v1443 = vpop.f32.mrb[0].mxu0
        %v1444 = vadd.f32 %v1403, %v1443
        %v1445 = vpop.f32.mrb[0].mxu0
        %v1446 = vpop.f32.mrb[0].mxu0
        %1447 = vdwg.mxu0
        %1448 = vmatprep.subr.bf16.mxu0 %v731
        %1449 = vmatpush1.bf16.msra.mxu0 %v730
        %1450 = vmatprep.subr.bf16.mxu0 %v739
        %1451 = vmatpush1.bf16.msra.mxu0 %v738
        %1452 = vmatprep.subr.bf16.mxu0 %v747
        %1453 = vmatpush1.bf16.msra.mxu0 %v746
        %1454 = vmatprep.subr.bf16.mxu0 %v755
        %1455 = vmatpush1.bf16.msra.mxu0 %v754
        %1456 = vmatprep.subr.bf16.mxu0 %v763
        %1457 = vmatpush1.bf16.msra.mxu0 %v762
        %1458 = vmatprep.subr.bf16.mxu0 %v771
        %1459 = vmatpush1.bf16.msra.mxu0 %v770
        %1460 = vmatprep.subr.bf16.mxu0 %v779
        %1461 = vmatpush1.bf16.msra.mxu0 %v778
        %1462 = vmatprep.subr.bf16.mxu0 %v787
        %1463 = vmatpush1.bf16.msra.mxu0 %v786
        %1464 = vmatprep.subr.bf16.mxu0 %v795
        %1465 = vmatpush1.bf16.msra.mxu0 %v794
        %1466 = vmatprep.subr.bf16.mxu0 %v803
        %1467 = vmatpush1.bf16.msra.mxu0 %v802
        %1468 = vmatprep.subr.bf16.mxu0 %v811
        %1469 = vmatpush1.bf16.msra.mxu0 %v810
        %1470 = vmatprep.subr.bf16.mxu0 %v819
        %1471 = vmatpush1.bf16.msra.mxu0 %v818
        %1472 = vmatprep.subr.bf16.mxu0 %v827
        %1473 = vmatpush1.bf16.msra.mxu0 %v826
        %1474 = vmatprep.subr.bf16.mxu0 %v835
        %1475 = vmatpush1.bf16.msra.mxu0 %v834
        %1476 = vmatprep.subr.bf16.mxu0 %v843
        %1477 = vmatpush1.bf16.msra.mxu0 %v842
        %1478 = vmatprep.subr.bf16.mxu0 %v851
        %1479 = vmatpush1.bf16.msra.mxu0 %v850
        %1480 = vmatprep.mubr.bf16.mxu0 %v1033
        %1481 = vmatmul.mubr.bf16.gmra.mrb[0].mxu0 %v1032
        %v1482 = vpop.f32.mrb[0].mxu0
        %v1483 = vadd.f32 %v1442, %v1482
        %v1484 = vpop.f32.mrb[0].mxu0
        %v1485 = vadd.f32 %v1444, %v1484
        %v1486 = vpop.f32.mrb[0].mxu0
        %v1487 = vpop.f32.mrb[0].mxu0
        %1488 = vdwg.mxu0
        %1489 = vmatprep.subr.bf16.mxu0 %v859
        %1490 = vmatpush1.bf16.msra.mxu0 %v858
        %1491 = vmatprep.subr.bf16.mxu0 %v867
        %1492 = vmatpush1.bf16.msra.mxu0 %v866
        %1493 = vmatprep.subr.bf16.mxu0 %v875
        %1494 = vmatpush1.bf16.msra.mxu0 %v874
        %1495 = vmatprep.subr.bf16.mxu0 %v883
        %1496 = vmatpush1.bf16.msra.mxu0 %v882
        %1497 = vmatprep.subr.bf16.mxu0 %v891
        %1498 = vmatpush1.bf16.msra.mxu0 %v890
        %1499 = vmatprep.subr.bf16.mxu0 %v899
        %1500 = vmatpush1.bf16.msra.mxu0 %v898
        %1501 = vmatprep.subr.bf16.mxu0 %v907
        %1502 = vmatpush1.bf16.msra.mxu0 %v906
        %1503 = vmatprep.subr.bf16.mxu0 %v915
        %1504 = vmatpush1.bf16.msra.mxu0 %v914
        %1505 = vmatprep.subr.bf16.mxu0 %v923
        %1506 = vmatpush1.bf16.msra.mxu0 %v922
        %1507 = vmatprep.subr.bf16.mxu0 %v931
        %1508 = vmatpush1.bf16.msra.mxu0 %v930
        %1509 = vmatprep.subr.bf16.mxu0 %v939
        %1510 = vmatpush1.bf16.msra.mxu0 %v938
        %1511 = vmatprep.subr.bf16.mxu0 %v947
        %1512 = vmatpush1.bf16.msra.mxu0 %v946
        %1513 = vmatprep.subr.bf16.mxu0 %v955
        %1514 = vmatpush1.bf16.msra.mxu0 %v954
        %1515 = vmatprep.subr.bf16.mxu0 %v963
        %1516 = vmatpush1.bf16.msra.mxu0 %v962
        %1517 = vmatprep.subr.bf16.mxu0 %v971
        %1518 = vmatpush1.bf16.msra.mxu0 %v970
        %1519 = vmatprep.subr.bf16.mxu0 %v979
        %1520 = vmatpush1.bf16.msra.mxu0 %v978
        %1521 = vmatprep.mubr.bf16.mxu0 %v1035
        %1522 = vmatmul.mubr.bf16.gmra.mrb[0].mxu0 %v1034
        %v1523 = vpop.f32.mrb[0].mxu0
        %v1524 = vadd.f32 %v1483, %v1523
        %v1525 = vpop.f32.mrb[0].mxu0
        %v1526 = vadd.f32 %v1485, %v1525
        %v1527 = vpop.f32.mrb[0].mxu0
        %v1528 = vpop.f32.mrb[0].mxu0
        %1529 = vdwg.mxu0
        %1530 = vmatprep.subr.bf16.mxu0 %v477
        %1531 = vmatpush1.bf16.msra.mxu0 %v476
        %1532 = vmatprep.subr.bf16.mxu0 %v485
        %1533 = vmatpush1.bf16.msra.mxu0 %v484
        %1534 = vmatprep.subr.bf16.mxu0 %v493
        %1535 = vmatpush1.bf16.msra.mxu0 %v492
        %1536 = vmatprep.subr.bf16.mxu0 %v501
        %1537 = vmatpush1.bf16.msra.mxu0 %v500
        %1538 = vmatprep.subr.bf16.mxu0 %v509
        %1539 = vmatpush1.bf16.msra.mxu0 %v508
        %1540 = vmatprep.subr.bf16.mxu0 %v517
        %1541 = vmatpush1.bf16.msra.mxu0 %v516
        %1542 = vmatprep.subr.bf16.mxu0 %v525
        %1543 = vmatpush1.bf16.msra.mxu0 %v524
        %1544 = vmatprep.subr.bf16.mxu0 %v533
        %1545 = vmatpush1.bf16.msra.mxu0 %v532
        %1546 = vmatprep.subr.bf16.mxu0 %v541
        %1547 = vmatpush1.bf16.msra.mxu0 %v540
        %1548 = vmatprep.subr.bf16.mxu0 %v549
        %1549 = vmatpush1.bf16.msra.mxu0 %v548
        %1550 = vmatprep.subr.bf16.mxu0 %v557
        %1551 = vmatpush1.bf16.msra.mxu0 %v556
        %1552 = vmatprep.subr.bf16.mxu0 %v565
        %1553 = vmatpush1.bf16.msra.mxu0 %v564
        %1554 = vmatprep.subr.bf16.mxu0 %v573
        %1555 = vmatpush1.bf16.msra.mxu0 %v572
        %1556 = vmatprep.subr.bf16.mxu0 %v581
        %1557 = vmatpush1.bf16.msra.mxu0 %v580
        %1558 = vmatprep.subr.bf16.mxu0 %v589
        %1559 = vmatpush1.bf16.msra.mxu0 %v588
        %1560 = vmatprep.subr.bf16.mxu0 %v597
        %1561 = vmatpush1.bf16.msra.mxu0 %v596
        %1562 = vmatprep.mubr.bf16.mxu0 %v1029
        %1563 = vmatmul.mubr.bf16.gmra.mrb[0].mxu0 %v1028
        %v1564 = vpop.f32.mrb[0].mxu0
        %v1565 = vadd.f32 0.0, %v1564
        %v1566 = vpop.f32.mrb[0].mxu0
        %v1567 = vadd.f32 0.0, %v1566
        %v1568 = vpop.f32.mrb[0].mxu0
        %v1569 = vpop.f32.mrb[0].mxu0
        %1570 = vdwg.mxu0
        %1571 = vmatprep.subr.bf16.mxu0 %v605
        %1572 = vmatpush1.bf16.msra.mxu0 %v604
        %1573 = vmatprep.subr.bf16.mxu0 %v613
        %1574 = vmatpush1.bf16.msra.mxu0 %v612
        %1575 = vmatprep.subr.bf16.mxu0 %v621
        %1576 = vmatpush1.bf16.msra.mxu0 %v620
        %1577 = vmatprep.subr.bf16.mxu0 %v629
        %1578 = vmatpush1.bf16.msra.mxu0 %v628
        %1579 = vmatprep.subr.bf16.mxu0 %v637
        %1580 = vmatpush1.bf16.msra.mxu0 %v636
        %1581 = vmatprep.subr.bf16.mxu0 %v645
        %1582 = vmatpush1.bf16.msra.mxu0 %v644
        %1583 = vmatprep.subr.bf16.mxu0 %v653
        %1584 = vmatpush1.bf16.msra.mxu0 %v652
        %1585 = vmatprep.subr.bf16.mxu0 %v661
        %1586 = vmatpush1.bf16.msra.mxu0 %v660
        %1587 = vmatprep.subr.bf16.mxu0 %v669
        %1588 = vmatpush1.bf16.msra.mxu0 %v668
        %1589 = vmatprep.subr.bf16.mxu0 %v677
        %1590 = vmatpush1.bf16.msra.mxu0 %v676
        %1591 = vmatprep.subr.bf16.mxu0 %v685
        %1592 = vmatpush1.bf16.msra.mxu0 %v684
        %1593 = vmatprep.subr.bf16.mxu0 %v693
        %1594 = vmatpush1.bf16.msra.mxu0 %v692
        %1595 = vmatprep.subr.bf16.mxu0 %v701
        %1596 = vmatpush1.bf16.msra.mxu0 %v700
        %1597 = vmatprep.subr.bf16.mxu0 %v709
        %1598 = vmatpush1.bf16.msra.mxu0 %v708
        %1599 = vmatprep.subr.bf16.mxu0 %v717
        %1600 = vmatpush1.bf16.msra.mxu0 %v716
        %1601 = vmatprep.subr.bf16.mxu0 %v725
        %1602 = vmatpush1.bf16.msra.mxu0 %v724
        %1603 = vmatprep.mubr.bf16.mxu0 %v1031
        %1604 = vmatmul.mubr.bf16.gmra.mrb[0].mxu0 %v1030
        %v1605 = vpop.f32.mrb[0].mxu0
        %v1606 = vadd.f32 %v1565, %v1605
        %v1607 = vpop.f32.mrb[0].mxu0
        %v1608 = vadd.f32 %v1567, %v1607
        %v1609 = vpop.f32.mrb[0].mxu0
        %v1610 = vpop.f32.mrb[0].mxu0
        %1611 = vdwg.mxu0
        %1612 = vmatprep.subr.bf16.mxu0 %v733
        %1613 = vmatpush1.bf16.msra.mxu0 %v732
        %1614 = vmatprep.subr.bf16.mxu0 %v741
        %1615 = vmatpush1.bf16.msra.mxu0 %v740
        %1616 = vmatprep.subr.bf16.mxu0 %v749
        %1617 = vmatpush1.bf16.msra.mxu0 %v748
        %1618 = vmatprep.subr.bf16.mxu0 %v757
        %1619 = vmatpush1.bf16.msra.mxu0 %v756
        %1620 = vmatprep.subr.bf16.mxu0 %v765
        %1621 = vmatpush1.bf16.msra.mxu0 %v764
        %1622 = vmatprep.subr.bf16.mxu0 %v773
        %1623 = vmatpush1.bf16.msra.mxu0 %v772
        %1624 = vmatprep.subr.bf16.mxu0 %v781
        %1625 = vmatpush1.bf16.msra.mxu0 %v780
        %1626 = vmatprep.subr.bf16.mxu0 %v789
        %1627 = vmatpush1.bf16.msra.mxu0 %v788
        %1628 = vmatprep.subr.bf16.mxu0 %v797
        %1629 = vmatpush1.bf16.msra.mxu0 %v796
        %1630 = vmatprep.subr.bf16.mxu0 %v805
        %1631 = vmatpush1.bf16.msra.mxu0 %v804
        %1632 = vmatprep.subr.bf16.mxu0 %v813
        %1633 = vmatpush1.bf16.msra.mxu0 %v812
        %1634 = vmatprep.subr.bf16.mxu0 %v821
        %1635 = vmatpush1.bf16.msra.mxu0 %v820
        %1636 = vmatprep.subr.bf16.mxu0 %v829
        %1637 = vmatpush1.bf16.msra.mxu0 %v828
        %1638 = vmatprep.subr.bf16.mxu0 %v837
        %1639 = vmatpush1.bf16.msra.mxu0 %v836
        %1640 = vmatprep.subr.bf16.mxu0 %v845
        %1641 = vmatpush1.bf16.msra.mxu0 %v844
        %1642 = vmatprep.subr.bf16.mxu0 %v853
        %1643 = vmatpush1.bf16.msra.mxu0 %v852
        %1644 = vmatprep.mubr.bf16.mxu0 %v1033
        %1645 = vmatmul.mubr.bf16.gmra.mrb[0].mxu0 %v1032
        %v1646 = vpop.f32.mrb[0].mxu0
        %v1647 = vadd.f32 %v1606, %v1646
        %v1648 = vpop.f32.mrb[0].mxu0
        %v1649 = vadd.f32 %v1608, %v1648
        %v1650 = vpop.f32.mrb[0].mxu0
        %v1651 = vpop.f32.mrb[0].mxu0
        %1652 = vdwg.mxu0
        %1653 = vmatprep.subr.bf16.mxu0 %v861
        %1654 = vmatpush1.bf16.msra.mxu0 %v860
        %1655 = vmatprep.subr.bf16.mxu0 %v869
        %1656 = vmatpush1.bf16.msra.mxu0 %v868
        %1657 = vmatprep.subr.bf16.mxu0 %v877
        %1658 = vmatpush1.bf16.msra.mxu0 %v876
        %1659 = vmatprep.subr.bf16.mxu0 %v885
        %1660 = vmatpush1.bf16.msra.mxu0 %v884
        %1661 = vmatprep.subr.bf16.mxu0 %v893
        %1662 = vmatpush1.bf16.msra.mxu0 %v892
        %1663 = vmatprep.subr.bf16.mxu0 %v901
        %1664 = vmatpush1.bf16.msra.mxu0 %v900
        %1665 = vmatprep.subr.bf16.mxu0 %v909
        %1666 = vmatpush1.bf16.msra.mxu0 %v908
        %1667 = vmatprep.subr.bf16.mxu0 %v917
        %1668 = vmatpush1.bf16.msra.mxu0 %v916
        %1669 = vmatprep.subr.bf16.mxu0 %v925
        %1670 = vmatpush1.bf16.msra.mxu0 %v924
        %1671 = vmatprep.subr.bf16.mxu0 %v933
        %1672 = vmatpush1.bf16.msra.mxu0 %v932
        %1673 = vmatprep.subr.bf16.mxu0 %v941
        %1674 = vmatpush1.bf16.msra.mxu0 %v940
        %1675 = vmatprep.subr.bf16.mxu0 %v949
        %1676 = vmatpush1.bf16.msra.mxu0 %v948
        %1677 = vmatprep.subr.bf16.mxu0 %v957
        %1678 = vmatpush1.bf16.msra.mxu0 %v956
        %1679 = vmatprep.subr.bf16.mxu0 %v965
        %1680 = vmatpush1.bf16.msra.mxu0 %v964
        %1681 = vmatprep.subr.bf16.mxu0 %v973
        %1682 = vmatpush1.bf16.msra.mxu0 %v972
        %1683 = vmatprep.subr.bf16.mxu0 %v981
        %1684 = vmatpush1.bf16.msra.mxu0 %v980
        %1685 = vmatprep.mubr.bf16.mxu0 %v1035
        %1686 = vmatmul.mubr.bf16.gmra.mrb[0].mxu0 %v1034
        %v1687 = vpop.f32.mrb[0].mxu0
        %v1688 = vadd.f32 %v1647, %v1687
        %v1689 = vpop.f32.mrb[0].mxu0
        %v1690 = vadd.f32 %v1649, %v1689
        %v1691 = vpop.f32.mrb[0].mxu0
        %v1692 = vpop.f32.mrb[0].mxu0
        %1693 = vdwg.mxu0
        %v1702 = vcombine.low %v1196, %v1198
        %v1703 = vcombine.low %v1360, %v1362
        %v1705 = vunpack.c.l.s4 1983009808
        %v1706 = vunpack.c.0.s8 %v1705
        %v1707 = vlaneseq
        %v1708 = vshrl.u32 %v1707, 7
        %v1709 = vsub.s32 %v1706, %v1708
        %v1710 = vrot.slane %v1702, %v1709
        %v1712 = vunpack.c.l.s4 1983009808
        %v1713 = vunpack.c.0.s8 %v1712
        %v1714 = vlaneseq
        %v1715 = vshrl.u32 %v1714, 7
        %v1716 = vsub.s32 %v1713, %v1715
        %v1717 = vrot.slane %v1703, %v1716
        %v1718 = vcombine.low %v1710, %v1717
        %v1719 = vcombine.low %v1524, %v1526
        %v1720 = vcombine.low %v1688, %v1690
        %v1722 = vunpack.c.l.s4 1983009808
        %v1723 = vunpack.c.0.s8 %v1722
        %v1724 = vlaneseq
        %v1725 = vshrl.u32 %v1724, 7
        %v1726 = vsub.s32 %v1723, %v1725
        %v1727 = vrot.slane %v1719, %v1726
        %v1729 = vunpack.c.l.s4 1983009808
        %v1730 = vunpack.c.0.s8 %v1729
        %v1731 = vlaneseq
        %v1732 = vshrl.u32 %v1731, 7
        %v1733 = vsub.s32 %v1730, %v1732
        %v1734 = vrot.slane %v1720, %v1733
        %v1735 = vcombine.low %v1727, %v1734
        %v1738 = vadd.f32 %v1036, %v1718
        %v1739 = vadd.f32 %v1037, %v1735
        %1740 = vst [vmem:[%s206] sm:$0xff] %v1738
        %1741 = vst [vmem:[%s206 + $0x8] sm:$0xff] %v1739
        %p1742 = scmp.eq.s32.totalorder %s23, 3
        // Predicated region
        $region37: #{vgg_forward.6} parent=27 // pred_check
          %p1743 = pneg %p1742
        $region38: #{vgg_forward.6} parent=27 // pred_check_branch
          %1745 = sbr.rel (%p1743) target = $region40
        $region39: #{vgg_forward.6} parent=27 // pred_region
          %v1746 = vld [vmem:[%s206] sm:$0xff]
          %v1747 = vld [vmem:[%s206 + $0x8] sm:$0xff]
          %s1748 = sld [smem:[#allocation3]]
          %v1749 = vstv %s1748
          %v1750 = vmul.f32 %v1746, %v1749
          %v1751 = vmul.f32 %v1747, %v1749
          %v1752 = vmax.f32 %v1750, 0.0
          %v1753 = vmax.f32 %v1751, 0.0
          %1754 = vst [vmem:[%s206] sm:$0xff] %v1752
          %1755 = vst [vmem:[%s206 + $0x8] sm:$0xff] %v1753
        $region40: #{vgg_forward.6} parent=27 // pred_fallthru
          _
        %s1756 = smul.u32 8, %s22
        %p1757 = scmp.lt.s32.totalorder %s1756, 31
        %s1758 = scalar_select %p1757, %s1756, 31
        %s1759 = smul.addr %s1758, 2
        %s1760 = scalar_lea.vmem %s3, %s1759
        // Predicated region
        $region41: #{vgg_forward.6} parent=27 // pred_check
          %p1761 = pneg %p102
        $region42: #{vgg_forward.6} parent=27 // pred_check_branch
          %1763 = sbr.rel (%p1761) target = $region44
        $region43: #{vgg_forward.6} parent=27 // pred_region
          %s1764 = smul.u32 8, %s22
        $region44: #{vgg_forward.6} parent=27 // pred_fallthru
          _
      $region28: #{vgg_forward.6} parent=5 // pred_fallthru
        _
      %p1765 = scmp.le.s32.totalorder 2, %s13
      // Predicated region
      $region45: #{vgg_forward.6} parent=5 // pred_check
        %p1766 = pneg %p1765
      $region46: #{vgg_forward.6} parent=5 // pred_check_branch
        %1768 = sbr.rel (%p1766) target = $region48
      $region47: #{vgg_forward.6} parent=5 // pred_region
        %s1769 = ssub.s32 %s13, 2
        // Predicated region
        $region49: #{vgg_forward.6} parent=47 // pred_check
          %p1770 = pneg %p108
        $region50: #{vgg_forward.6} parent=47 // pred_check_branch
          %1772 = sbr.rel (%p1770) target = $region52
        $region51: #{vgg_forward.6} parent=47 // pred_region
          %s1773 = smul.u32 8, %s24
          %p1774 = scmp.lt.s32.totalorder %s1773, 31
          %s1775 = scalar_select %p1774, %s1773, 31
          %s1776 = smul.addr %s1775, 2
          %s1777 = scalar_lea.vmem %s3, %s1776
        $region52: #{vgg_forward.6} parent=47 // pred_fallthru
          _
      $region48: #{vgg_forward.6} parent=5 // pred_fallthru
        _
    $region6: #{vgg_forward.6} parent=1 // loop_footer
      %s17 = sadd.s32 1, %s13
    $region7: #{vgg_forward.6} parent=1 // loop_footer_branch
      %12 = sbr.rel target = $region3
    $region8: #{vgg_forward.6} parent=1 // loop_exit
      _
    %1778 = vsyncpa [#allocation5], 1
    %s1779 = scalar_lea.sflag [#allocation5], 1
    %1780 = vsyncpa %s1779, 1

// kernel: vgg_forward.7
$region0: #{vgg_forward.7}
  #allocation0 [shape = 'u32[]', space=smem, size = 0x4, offset = 0x4, fixed_abs, tag = 'smem constant byte address 0x4 - core index']
  #allocation1 [shape = 'u32[144,128]{1,0:T(1,128)}', space=vmem, size = 0x12000, scoped, tag = 'internal scratch']
  #allocation2 [shape = 's32[1]{0}', space=sflag, size = 0x4, scoped, tag = 'scoped memory for vgg_forward.7']
  #allocation3 [shape = 'f32[1]{0:T(128)S(6)}', space=smem, size = 0x200, scoped, tag = 'prefetched SMEM operand 0']
  %s0 = inlined_call_operand.<no memory space> [shape: f32[1], index: 0, kind: input, shape index: {}]
  %s1 = inlined_call_operand.vmem [shape: f32[2,4096], index: 1, kind: input, shape index: {}]
  %s2 = inlined_call_operand.vmem [shape: s8[4096,128], index: 2, kind: input, shape index: {}]
  %s3 = inlined_call_operand.hbm [shape: f32[2,128], index: 3, kind: output, shape index: {}]
  %s4 = sld [smem:[#allocation0]]
  $region49: #{vgg_forward.7} parent=0
    _
  %s6 = ssub.s32 1, %s4
  %s7 = scalar_select 0, %s6, %s4
  %8 = sst [smem:[#allocation3]] %s0
  $region1: #{vgg_forward.7} parent=0
    #allocation4 [shape = 'u8[1024]{0}', space=vmem, size = 0x400, scoped, tag = 'output window, operand 0, single buffered']
    #allocation5 [shape = 's32[2]{0}', space=sflag, size = 0x8, scoped, tag = 'scoped memory for vgg_forward.7']
    %9 = vsyncpa [#allocation5], 0
    loop: start=0, step=1, limit=6
    $region2: #{vgg_forward.7} parent=1 // loop_pre_header
      _
    $region3: #{vgg_forward.7} parent=1 // loop_header
      %s11 = sphi 0, %s15
      %p12 = scmp.ge.s32.totalorder %s11, 6
      %s18 = sphi 0, %s30
      %s19 = sphi 0, %s26
      %s20 = sphi 0, %s18
      %s21 = sphi 0, %s19
      %s22 = sphi 0, %s20
      %s23 = sphi 0, %s21
      %s33 = sphi 0, %s35
      %s36 = sphi 0, %s33
      %s37 = sphi 0, %s36
      %s53 = sphi 0, %s37
      %s61 = sphi 0, %s63
      %s64 = sphi 0, %s61
      %s65 = sphi 0, %s64
      %s81 = sphi 0, %s65
      %s87 = sphi 0, %s89
      %s90 = sphi 0, %s87
      %s91 = sphi 0, %s90
      %s107 = sphi 0, %s91
    $region4: #{vgg_forward.7} parent=1 // loop_header_branch
      %14 = sbr.rel (%p12) target = $region8
    $region5: #{vgg_forward.7} parent=1 // loop_body
      %s16 = ssub.s32 %s11, 1
      %s17 = ssub.s32 %s11, 2
      %s24 = sadd.s32 1, %s19
      %p25 = scmp.ge.s32.totalorder %s24, 4
      %s26 = scalar_select %p25, 0, %s24
      %s27 = sadd.s32 1, %s18
      %s28 = scalar_select %p25, %s27, %s18
      %p29 = scmp.ge.s32.totalorder %s28, 1
      %s30 = scalar_select %p29, 0, %s28
      %s31 = ssub.s32 %s19, %s26
      %p32 = scmp.eq.s32.totalorder %s31, 0
      %s34 = sadd.s32 %s33, 1
      %s35 = scalar_select %p32, %s33, %s34
      %p38 = pneg %p32
      %p39 = scmp.eq.s32.totalorder %s11, 3
      %p40 = por %p38, %p39
      %p41 = scmp.ne.s32.totalorder %s33, %s36
      %p42 = scmp.eq.s32.totalorder %s11, 0
      %p43 = por %p41, %p42
      %p44 = scmp.ne.s32.totalorder %s33, %s36
      %p45 = scmp.eq.s32.totalorder %s16, 3
      %p46 = por %p44, %p45
      %p47 = scmp.ne.s32.totalorder %s36, %s37
      %p48 = scmp.eq.s32.totalorder %s16, 0
      %p49 = por %p47, %p48
      %p50 = scmp.ne.s32.totalorder %s36, %s37
      %p51 = scmp.eq.s32.totalorder %s17, 3
      %p52 = por %p50, %p51
      %p54 = scmp.ne.s32.totalorder %s37, %s53
      %p55 = scmp.eq.s32.totalorder %s17, 0
      %p56 = por %p54, %p55
      %s57 = ssub.s32 %s19, %s26
      %s58 = ssub.s32 %s18, %s30
      %s59 = sor.u32 %s57, %s58
      %p60 = scmp.eq.s32.totalorder %s59, 0
      %s62 = sadd.s32 %s61, 1
      %s63 = scalar_select %p60, %s61, %s62
      %p66 = pneg %p60
      %p67 = scmp.eq.s32.totalorder %s11, 3
      %p68 = por %p66, %p67
      %p69 = scmp.ne.s32.totalorder %s61, %s64
      %p70 = scmp.eq.s32.totalorder %s11, 0
      %p71 = por %p69, %p70
      %p72 = scmp.ne.s32.totalorder %s61, %s64
      %p73 = scmp.eq.s32.totalorder %s16, 3
      %p74 = por %p72, %p73
      %p75 = scmp.ne.s32.totalorder %s64, %s65
      %p76 = scmp.eq.s32.totalorder %s16, 0
      %p77 = por %p75, %p76
      %p78 = scmp.ne.s32.totalorder %s64, %s65
      %p79 = scmp.eq.s32.totalorder %s17, 3
      %p80 = por %p78, %p79
      %p82 = scmp.ne.s32.totalorder %s65, %s81
      %p83 = scmp.eq.s32.totalorder %s17, 0
      %p84 = por %p82, %p83
      %s85 = ssub.s32 %s18, %s30
      %p86 = scmp.eq.s32.totalorder %s85, 0
      %s88 = sadd.s32 %s87, 1
      %s89 = scalar_select %p86, %s87, %s88
      %p92 = pneg %p86
      %p93 = scmp.eq.s32.totalorder %s11, 3
      %p94 = por %p92, %p93
      %p95 = scmp.ne.s32.totalorder %s87, %s90
      %p96 = scmp.eq.s32.totalorder %s11, 0
      %p97 = por %p95, %p96
      %p98 = scmp.ne.s32.totalorder %s87, %s90
      %p99 = scmp.eq.s32.totalorder %s16, 3
      %p100 = por %p98, %p99
      %p101 = scmp.ne.s32.totalorder %s90, %s91
      %p102 = scmp.eq.s32.totalorder %s16, 0
      %p103 = por %p101, %p102
      %p104 = scmp.ne.s32.totalorder %s90, %s91
      %p105 = scmp.eq.s32.totalorder %s17, 3
      %p106 = por %p104, %p105
      %p108 = scmp.ne.s32.totalorder %s91, %s107
      %p109 = scmp.eq.s32.totalorder %s17, 0
      %p110 = por %p108, %p109
      %p111 = scmp.le.s32.totalorder 1, %s11
      %p112 = scmp.lt.s32.totalorder %s11, 5
      %p113 = pnand %p111, %p112
      %p114 = pneg %p113
      // Predicated region
      $region9: #{vgg_forward.7} parent=5 // pred_check
        _
      $region10: #{vgg_forward.7} parent=5 // pred_check_branch
        %116 = sbr.rel (%p113) target = $region12
      $region11: #{vgg_forward.7} parent=5 // pred_region
        %s117 = ssub.s32 %s11, 1
      $region12: #{vgg_forward.7} parent=5 // pred_fallthru
        _
      %p118 = scmp.lt.s32.totalorder %s11, 4
      // Predicated region
      $region13: #{vgg_forward.7} parent=5 // pred_check
        %p119 = pneg %p118
      $region14: #{vgg_forward.7} parent=5 // pred_check_branch
        %121 = sbr.rel (%p119) target = $region16
      $region15: #{vgg_forward.7} parent=5 // pred_region
        // Predicated region
        $region17: #{vgg_forward.7} parent=15 // pred_check
          %p122 = pneg %p43
        $region18: #{vgg_forward.7} parent=15 // pred_check_branch
          %124 = sbr.rel (%p122) target = $region20
        $region19: #{vgg_forward.7} parent=15 // pred_region
          %s125 = smul.u32 8, %s19
          %p126 = scmp.lt.s32.totalorder %s125, 31
          %s127 = scalar_select %p126, %s125, 31
          %s128 = smul.addr %s127, 2
          %s129 = scalar_lea.vmem %s1, %s128
          %s130 = smul.u32 8, %s19
        $region20: #{vgg_forward.7} parent=15 // pred_fallthru
          _
        // Predicated region
        $region21: #{vgg_forward.7} parent=15 // pred_check
          %p131 = pneg %p71
        $region22: #{vgg_forward.7} parent=15 // pred_check_branch
          %133 = sbr.rel (%p131) target = $region24
        $region23: #{vgg_forward.7} parent=15 // pred_region
          %s134 = smul.u32 32, %s19
          %p135 = scmp.lt.s32.totalorder %s134, 127
          %s136 = scalar_select %p135, %s134, 127
          %p137 = scmp.lt.s32.totalorder %s18, 0
          %s138 = scalar_select %p137, %s18, 0
          %s139 = sadd.s32 %s138, %s136
          %s140 = smul.addr %s139, 8
          %s141 = scalar_lea.vmem %s2, %s140
          %s142 = smul.u32 32, %s19
        $region24: #{vgg_forward.7} parent=15 // pred_fallthru
          _
      $region16: #{vgg_forward.7} parent=5 // pred_fallthru
        _
      %p143 = scmp.le.s32.totalorder 1, %s11
      %p144 = scmp.lt.s32.totalorder %s11, 5
      %p145 = pnand %p143, %p144
      %p146 = pneg %p145
      // Predicated region
      $region25: #{vgg_forward.7} parent=5 // pred_check
        _
      $region26: #{vgg_forward.7} parent=5 // pred_check_branch
        %148 = sbr.rel (%p145) target = $region28
      $region27: #{vgg_forward.7} parent=5 // pred_region
        %s149 = ssub.s32 %s11, 1
        %s150 = smul.u32 8, %s21
        %p151 = scmp.lt.s32.totalorder %s150, 31
        %s152 = scalar_select %p151, %s150, 31
        %s153 = smul.addr %s152, 2
        %s154 = scalar_lea.vmem %s1, %s153
        %p155 = pneg %p49
        %p156 = pneg %p46
        %s157 = smul.u32 32, %s21
        %p158 = scmp.lt.s32.totalorder %s157, 127
        %s159 = scalar_select %p158, %s157, 127
        %p160 = scmp.lt.s32.totalorder %s20, 0
        %s161 = scalar_select %p160, %s20, 0
        %s162 = sadd.s32 %s161, %s159
        %s163 = smul.addr %s162, 8
        %s164 = scalar_lea.vmem %s2, %s163
        %p165 = pneg %p77
        %p166 = pneg %p74
        %p167 = pneg %p103
        %p168 = pneg %p100
        %s169 = smul.u32 8, %s21
        %p170 = scmp.lt.s32.totalorder %s169, 31
        %s171 = scalar_select %p170, %s169, 31
        %s172 = smul.addr %s171, 2
        %s173 = scalar_lea.vmem %s1, %s172
        %s174 = smul.u32 8, %s21
        %s175 = smul.u32 32, %s21
        %p176 = scmp.lt.s32.totalorder %s175, 127
        %s177 = scalar_select %p176, %s175, 127
        %p178 = scmp.lt.s32.totalorder %s20, 0
        %s179 = scalar_select %p178, %s20, 0
        %s180 = sadd.s32 %s179, %s177
        %s181 = smul.addr %s180, 8
        %s182 = scalar_lea.vmem %s2, %s181
        %s183 = smul.u32 32, %s21
        %p185 = scmp.eq.s32.totalorder %s21, 0
        // Predicated region
        $region29: #{vgg_forward.7} parent=27 // pred_check
          %p186 = pneg %p185
        $region30: #{vgg_forward.7} parent=27 // pred_check_branch
          %188 = sbr.rel (%p186) target = $region32
        $region31: #{vgg_forward.7} parent=27 // pred_region
          %189 = vst [vmem:[#allocation4] sm:$0x3] 0.0
        $region32: #{vgg_forward.7} parent=27 // pred_fallthru
          _
        %v190 = vld [vmem:[%s182] sm:$0xff]
        %v191 = vld [vmem:[%s182 + $0x8] sm:$0xff]
        %v192 = vld [vmem:[%s182 + $0x10] sm:$0xff]
        %v193 = vld [vmem:[%s182 + $0x18] sm:$0xff]
        %v194 = vld [vmem:[%s182 + $0x20] sm:$0xff]
        %v195 = vld [vmem:[%s182 + $0x28] sm:$0xff]
        %v196 = vld [vmem:[%s182 + $0x30] sm:$0xff]
        %v197 = vld [vmem:[%s182 + $0x38] sm:$0xff]
        %v198 = vld [vmem:[%s182 + $0x40] sm:$0xff]
        %v199 = vld [vmem:[%s182 + $0x48] sm:$0xff]
        %v200 = vld [vmem:[%s182 + $0x50] sm:$0xff]
        %v201 = vld [vmem:[%s182 + $0x58] sm:$0xff]
        %v202 = vld [vmem:[%s182 + $0x60] sm:$0xff]
        %v203 = vld [vmem:[%s182 + $0x68] sm:$0xff]
        %v204 = vld [vmem:[%s182 + $0x70] sm:$0xff]
        %v205 = vld [vmem:[%s182 + $0x78] sm:$0xff]
        %v206 = vld [vmem:[%s182 + $0x80] sm:$0xff]
        %v207 = vld [vmem:[%s182 + $0x88] sm:$0xff]
        %v208 = vld [vmem:[%s182 + $0x90] sm:$0xff]
        %v209 = vld [vmem:[%s182 + $0x98] sm:$0xff]
        %v210 = vld [vmem:[%s182 + $0xa0] sm:$0xff]
        %v211 = vld [vmem:[%s182 + $0xa8] sm:$0xff]
        %v212 = vld [vmem:[%s182 + $0xb0] sm:$0xff]
        %v213 = vld [vmem:[%s182 + $0xb8] sm:$0xff]
        %v214 = vld [vmem:[%s182 + $0xc0] sm:$0xff]
        %v215 = vld [vmem:[%s182 + $0xc8] sm:$0xff]
        %v216 = vld [vmem:[%s182 + $0xd0] sm:$0xff]
        %v217 = vld [vmem:[%s182 + $0xd8] sm:$0xff]
        %v218 = vld [vmem:[%s182 + $0xe0] sm:$0xff]
        %v219 = vld [vmem:[%s182 + $0xe8] sm:$0xff]
        %v220 = vld [vmem:[%s182 + $0xf0] sm:$0xff]
        %v221 = vld [vmem:[%s182 + $0xf8] sm:$0xff]
        %v222 = vunpack.c.l.s8.bf16 %v190
        %v223 = vunpack.c.h.s8.bf16 %v190
        %v224 = vunpack.c.l.s8.bf16 %v191
        %v225 = vunpack.c.h.s8.bf16 %v191
        %v226 = vunpack.c.l.s8.bf16 %v192
        %v227 = vunpack.c.h.s8.bf16 %v192
        %v228 = vunpack.c.l.s8.bf16 %v193
        %v229 = vunpack.c.h.s8.bf16 %v193
        %v230 = vunpack.c.l.s8.bf16 %v194
        %v231 = vunpack.c.h.s8.bf16 %v194
        %v232 = vunpack.c.l.s8.bf16 %v195
        %v233 = vunpack.c.h.s8.bf16 %v195
        %v234 = vunpack.c.l.s8.bf16 %v196
        %v235 = vunpack.c.h.s8.bf16 %v196
        %v236 = vunpack.c.l.s8.bf16 %v197
        %v237 = vunpack.c.h.s8.bf16 %v197
        %v238 = vunpack.c.l.s8.bf16 %v198
        %v239 = vunpack.c.h.s8.bf16 %v198
        %v240 = vunpack.c.l.s8.bf16 %v199
        %v241 = vunpack.c.h.s8.bf16 %v199
        %v242 = vunpack.c.l.s8.bf16 %v200
        %v243 = vunpack.c.h.s8.bf16 %v200
        %v244 = vunpack.c.l.s8.bf16 %v201
        %v245 = vunpack.c.h.s8.bf16 %v201
        %v246 = vunpack.c.l.s8.bf16 %v202
        %v247 = vunpack.c.h.s8.bf16 %v202
        %v248 = vunpack.c.l.s8.bf16 %v203
        %v249 = vunpack.c.h.s8.bf16 %v203
        %v250 = vunpack.c.l.s8.bf16 %v204
        %v251 = vunpack.c.h.s8.bf16 %v204
        %v252 = vunpack.c.l.s8.bf16 %v205
        %v253 = vunpack.c.h.s8.bf16 %v205
        %v254 = vunpack.c.l.s8.bf16 %v206
        %v255 = vunpack.c.h.s8.bf16 %v206
        %v256 = vunpack.c.l.s8.bf16 %v207
        %v257 = vunpack.c.h.s8.bf16 %v207
        %v258 = vunpack.c.l.s8.bf16 %v208
        %v259 = vunpack.c.h.s8.bf16 %v208
        %v260 = vunpack.c.l.s8.bf16 %v209
        %v261 = vunpack.c.h.s8.bf16 %v209
        %v262 = vunpack.c.l.s8.bf16 %v210
        %v263 = vunpack.c.h.s8.bf16 %v210
        %v264 = vunpack.c.l.s8.bf16 %v211
        %v265 = vunpack.c.h.s8.bf16 %v211
        %v266 = vunpack.c.l.s8.bf16 %v212
        %v267 = vunpack.c.h.s8.bf16 %v212
        %v268 = vunpack.c.l.s8.bf16 %v213
        %v269 = vunpack.c.h.s8.bf16 %v213
        %v270 = vunpack.c.l.s8.bf16 %v214
        %v271 = vunpack.c.h.s8.bf16 %v214
        %v272 = vunpack.c.l.s8.bf16 %v215
        %v273 = vunpack.c.h.s8.bf16 %v215
        %v274 = vunpack.c.l.s8.bf16 %v216
        %v275 = vunpack.c.h.s8.bf16 %v216
        %v276 = vunpack.c.l.s8.bf16 %v217
        %v277 = vunpack.c.h.s8.bf16 %v217
        %v278 = vunpack.c.l.s8.bf16 %v218
        %v279 = vunpack.c.h.s8.bf16 %v218
        %v280 = vunpack.c.l.s8.bf16 %v219
        %v281 = vunpack.c.h.s8.bf16 %v219
        %v282 = vunpack.c.l.s8.bf16 %v220
        %v283 = vunpack.c.h.s8.bf16 %v220
        %v284 = vunpack.c.l.s8.bf16 %v221
        %v285 = vunpack.c.h.s8.bf16 %v221
        %v286 = vld [vmem:[%s173] sm:$0xff]
        %v287 = vld [vmem:[%s173 + $0x8] sm:$0xff]
        %v290 = vcombine.high %v286, %v286
        %v292 = vunpack.c.l.s4 1983009808
        %v293 = vunpack.c.0.s8 %v292
        %v294 = vlaneseq
        %v295 = vshrl.u32 %v294, 7
        %v296 = vsub.s32 %v293, %v295
        %v297 = vrot.slane %v286, %v296
        %v299 = vunpack.c.l.s4 1983009808
        %v300 = vunpack.c.0.s8 %v299
        %v301 = vlaneseq
        %v302 = vshrl.u32 %v301, 7
        %v303 = vsub.s32 %v300, %v302
        %v304 = vrot.slane %v290, %v303
        %v305 = vcombine.high %v297, %v297
        %v306 = vcombine.high %v304, %v304
        %v307 = vcombine.high %v287, %v287
        %v309 = vunpack.c.l.s4 1983009808
        %v310 = vunpack.c.0.s8 %v309
        %v311 = vlaneseq
        %v312 = vshrl.u32 %v311, 7
        %v313 = vsub.s32 %v310, %v312
        %v314 = vrot.slane %v287, %v313
        %v316 = vunpack.c.l.s4 1983009808
        %v317 = vunpack.c.0.s8 %v316
        %v318 = vlaneseq
        %v319 = vshrl.u32 %v318, 7
        %v320 = vsub.s32 %v317, %v319
        %v321 = vrot.slane %v307, %v320
        %v322 = vcombine.high %v314, %v314
        %v323 = vcombine.high %v321, %v321
        %v332 = vpack.c.bf16 %v297, %v297
        %v333 = vpack.c.bf16 %v305, %v305
        %v334 = vpack.c.bf16 %v304, %v304
        %v335 = vpack.c.bf16 %v306, %v306
        %v336 = vpack.c.bf16 %v314, %v314
        %v337 = vpack.c.bf16 %v322, %v322
        %v338 = vpack.c.bf16 %v321, %v321
        %v339 = vpack.c.bf16 %v323, %v323
        %v340 = vld [vmem:[#allocation4] sm:$0x3]
        %341 = vmatprep.subr.bf16.mxu0 0
        %342 = vmatpush1.bf16.msra.mxu0 %v222
        %343 = vmatprep.subr.bf16.mxu0 0
        %344 = vmatpush1.bf16.msra.mxu0 %v223
        %345 = vmatprep.subr.bf16.mxu0 0
        %346 = vmatpush1.bf16.msra.mxu0 %v224
        %347 = vmatprep.subr.bf16.mxu0 0
        %348 = vmatpush1.bf16.msra.mxu0 %v225
        %349 = vmatprep.subr.bf16.mxu0 0
        %350 = vmatpush1.bf16.msra.mxu0 %v226
        %351 = vmatprep.subr.bf16.mxu0 0
        %352 = vmatpush1.bf16.msra.mxu0 %v227
        %353 = vmatprep.subr.bf16.mxu0 0
        %354 = vmatpush1.bf16.msra.mxu0 %v228
        %355 = vmatprep.subr.bf16.mxu0 0
        %356 = vmatpush1.bf16.msra.mxu0 %v229
        %357 = vmatprep.subr.bf16.mxu0 0
        %358 = vmatpush1.bf16.msra.mxu0 %v230
        %359 = vmatprep.subr.bf16.mxu0 0
        %360 = vmatpush1.bf16.msra.mxu0 %v231
        %361 = vmatprep.subr.bf16.mxu0 0
        %362 = vmatpush1.bf16.msra.mxu0 %v232
        %363 = vmatprep.subr.bf16.mxu0 0
        %364 = vmatpush1.bf16.msra.mxu0 %v233
        %365 = vmatprep.subr.bf16.mxu0 0
        %366 = vmatpush1.bf16.msra.mxu0 %v234
        %367 = vmatprep.subr.bf16.mxu0 0
        %368 = vmatpush1.bf16.msra.mxu0 %v235
        %369 = vmatprep.subr.bf16.mxu0 0
        %370 = vmatpush1.bf16.msra.mxu0 %v236
        %371 = vmatprep.subr.bf16.mxu0 0
        %372 = vmatpush1.bf16.msra.mxu0 %v237
        %373 = vmatprep.mubr.bf16.mxu0 %v333
        %374 = vmatmul.mubr.bf16.gmra.mrb[0].mxu0 %v332
        %v375 = vpop.f32.mrb[0].mxu0
        %v376 = vadd.f32 0.0, %v375
        %v377 = vpop.f32.mrb[0].mxu0
        %v378 = vpop.f32.mrb[0].mxu0
        %v379 = vpop.f32.mrb[0].mxu0
        %380 = vdwg.mxu0
        %381 = vmatprep.subr.bf16.mxu0 0
        %382 = vmatpush1.bf16.msra.mxu0 %v238
        %383 = vmatprep.subr.bf16.mxu0 0
        %384 = vmatpush1.bf16.msra.mxu0 %v239
        %385 = vmatprep.subr.bf16.mxu0 0
        %386 = vmatpush1.bf16.msra.mxu0 %v240
        %387 = vmatprep.subr.bf16.mxu0 0
        %388 = vmatpush1.bf16.msra.mxu0 %v241
        %389 = vmatprep.subr.bf16.mxu0 0
        %390 = vmatpush1.bf16.msra.mxu0 %v242
        %391 = vmatprep.subr.bf16.mxu0 0
        %392 = vmatpush1.bf16.msra.mxu0 %v243
        %393 = vmatprep.subr.bf16.mxu0 0
        %394 = vmatpush1.bf16.msra.mxu0 %v244
        %395 = vmatprep.subr.bf16.mxu0 0
        %396 = vmatpush1.bf16.msra.mxu0 %v245
        %397 = vmatprep.subr.bf16.mxu0 0
        %398 = vmatpush1.bf16.msra.mxu0 %v246
        %399 = vmatprep.subr.bf16.mxu0 0
        %400 = vmatpush1.bf16.msra.mxu0 %v247
        %401 = vmatprep.subr.bf16.mxu0 0
        %402 = vmatpush1.bf16.msra.mxu0 %v248
        %403 = vmatprep.subr.bf16.mxu0 0
        %404 = vmatpush1.bf16.msra.mxu0 %v249
        %405 = vmatprep.subr.bf16.mxu0 0
        %406 = vmatpush1.bf16.msra.mxu0 %v250
        %407 = vmatprep.subr.bf16.mxu0 0
        %408 = vmatpush1.bf16.msra.mxu0 %v251
        %409 = vmatprep.subr.bf16.mxu0 0
        %410 = vmatpush1.bf16.msra.mxu0 %v252
        %411 = vmatprep.subr.bf16.mxu0 0
        %412 = vmatpush1.bf16.msra.mxu0 %v253
        %413 = vmatprep.mubr.bf16.mxu0 %v335
        %414 = vmatmul.mubr.bf16.gmra.mrb[0].mxu0 %v334
        %v415 = vpop.f32.mrb[0].mxu0
        %v416 = vadd.f32 %v376, %v415
        %v417 = vpop.f32.mrb[0].mxu0
        %v418 = vpop.f32.mrb[0].mxu0
        %v419 = vpop.f32.mrb[0].mxu0
        %420 = vdwg.mxu0
        %421 = vmatprep.subr.bf16.mxu0 0
        %422 = vmatpush1.bf16.msra.mxu0 %v254
        %423 = vmatprep.subr.bf16.mxu0 0
        %424 = vmatpush1.bf16.msra.mxu0 %v255
        %425 = vmatprep.subr.bf16.mxu0 0
        %426 = vmatpush1.bf16.msra.mxu0 %v256
        %427 = vmatprep.subr.bf16.mxu0 0
        %428 = vmatpush1.bf16.msra.mxu0 %v257
        %429 = vmatprep.subr.bf16.mxu0 0
        %430 = vmatpush1.bf16.msra.mxu0 %v258
        %431 = vmatprep.subr.bf16.mxu0 0
        %432 = vmatpush1.bf16.msra.mxu0 %v259
        %433 = vmatprep.subr.bf16.mxu0 0
        %434 = vmatpush1.bf16.msra.mxu0 %v260
        %435 = vmatprep.subr.bf16.mxu0 0
        %436 = vmatpush1.bf16.msra.mxu0 %v261
        %437 = vmatprep.subr.bf16.mxu0 0
        %438 = vmatpush1.bf16.msra.mxu0 %v262
        %439 = vmatprep.subr.bf16.mxu0 0
        %440 = vmatpush1.bf16.msra.mxu0 %v263
        %441 = vmatprep.subr.bf16.mxu0 0
        %442 = vmatpush1.bf16.msra.mxu0 %v264
        %443 = vmatprep.subr.bf16.mxu0 0
        %444 = vmatpush1.bf16.msra.mxu0 %v265
        %445 = vmatprep.subr.bf16.mxu0 0
        %446 = vmatpush1.bf16.msra.mxu0 %v266
        %447 = vmatprep.subr.bf16.mxu0 0
        %448 = vmatpush1.bf16.msra.mxu0 %v267
        %449 = vmatprep.subr.bf16.mxu0 0
        %450 = vmatpush1.bf16.msra.mxu0 %v268
        %451 = vmatprep.subr.bf16.mxu0 0
        %452 = vmatpush1.bf16.msra.mxu0 %v269
        %453 = vmatprep.mubr.bf16.mxu0 %v337
        %454 = vmatmul.mubr.bf16.gmra.mrb[0].mxu0 %v336
        %v455 = vpop.f32.mrb[0].mxu0
        %v456 = vadd.f32 %v416, %v455
        %v457 = vpop.f32.mrb[0].mxu0
        %v458 = vpop.f32.mrb[0].mxu0
        %v459 = vpop.f32.mrb[0].mxu0
        %460 = vdwg.mxu0
        %461 = vmatprep.subr.bf16.mxu0 0
        %462 = vmatpush1.bf16.msra.mxu0 %v270
        %463 = vmatprep.subr.bf16.mxu0 0
        %464 = vmatpush1.bf16.msra.mxu0 %v271
        %465 = vmatprep.subr.bf16.mxu0 0
        %466 = vmatpush1.bf16.msra.mxu0 %v272
        %467 = vmatprep.subr.bf16.mxu0 0
        %468 = vmatpush1.bf16.msra.mxu0 %v273
        %469 = vmatprep.subr.bf16.mxu0 0
        %470 = vmatpush1.bf16.msra.mxu0 %v274
        %471 = vmatprep.subr.bf16.mxu0 0
        %472 = vmatpush1.bf16.msra.mxu0 %v275
        %473 = vmatprep.subr.bf16.mxu0 0
        %474 = vmatpush1.bf16.msra.mxu0 %v276
        %475 = vmatprep.subr.bf16.mxu0 0
        %476 = vmatpush1.bf16.msra.mxu0 %v277
        %477 = vmatprep.subr.bf16.mxu0 0
        %478 = vmatpush1.bf16.msra.mxu0 %v278
        %479 = vmatprep.subr.bf16.mxu0 0
        %480 = vmatpush1.bf16.msra.mxu0 %v279
        %481 = vmatprep.subr.bf16.mxu0 0
        %482 = vmatpush1.bf16.msra.mxu0 %v280
        %483 = vmatprep.subr.bf16.mxu0 0
        %484 = vmatpush1.bf16.msra.mxu0 %v281
        %485 = vmatprep.subr.bf16.mxu0 0
        %486 = vmatpush1.bf16.msra.mxu0 %v282
        %487 = vmatprep.subr.bf16.mxu0 0
        %488 = vmatpush1.bf16.msra.mxu0 %v283
        %489 = vmatprep.subr.bf16.mxu0 0
        %490 = vmatpush1.bf16.msra.mxu0 %v284
        %491 = vmatprep.subr.bf16.mxu0 0
        %492 = vmatpush1.bf16.msra.mxu0 %v285
        %493 = vmatprep.mubr.bf16.mxu0 %v339
        %494 = vmatmul.mubr.bf16.gmra.mrb[0].mxu0 %v338
        %v495 = vpop.f32.mrb[0].mxu0
        %v496 = vadd.f32 %v456, %v495
        %v497 = vpop.f32.mrb[0].mxu0
        %v498 = vpop.f32.mrb[0].mxu0
        %v499 = vpop.f32.mrb[0].mxu0
        %500 = vdwg.mxu0
        %v501 = vadd.f32 %v340, %v496
        %502 = vst [vmem:[#allocation4] sm:$0x3] %v501
        %p503 = scmp.eq.s32.totalorder %s21, 3
        // Predicated region
        $region33: #{vgg_forward.7} parent=27 // pred_check
          %p504 = pneg %p503
        $region34: #{vgg_forward.7} parent=27 // pred_check_branch
          %506 = sbr.rel (%p504) target = $region36
        $region35: #{vgg_forward.7} parent=27 // pred_region
          %v507 = vld [vmem:[#allocation4] sm:$0x3]
          %s508 = sld [smem:[#allocation3]]
          %v509 = vstv %s508
          %v510 = vmul.f32 %v507, %v509
          %511 = vst [vmem:[#allocation4] sm:$0x3] %v510
        $region36: #{vgg_forward.7} parent=27 // pred_fallthru
          _
        // Predicated region
        $region37: #{vgg_forward.7} parent=27 // pred_check
          %p512 = pneg %p100
        $region38: #{vgg_forward.7} parent=27 // pred_check_branch
          %514 = sbr.rel (%p512) target = $region40
        $region39: #{vgg_forward.7} parent=27 // pred_region
          %s516 = ssub.s32 32, 32
          %517 = vsyncadd [#allocation5], %s516
          %s518 = smul.addr %s20, 32
          %s519 = scalar_lea.hbm %s3, %s518
          %s521 = sshll.u32 [#allocation4], 4
          %s522 = int_to_ptr.vmem [resolvable:$true] %s521
          %524 = dma.vmem_to_hbm [thread:$0]  %s522, 32, %s519, [#allocation5]
        $region40: #{vgg_forward.7} parent=27 // pred_fallthru
          _
        // Predicated region
        $region41: #{vgg_forward.7} parent=27 // pred_check
          %p525 = pneg %p100
        $region42: #{vgg_forward.7} parent=27 // pred_check_branch
          %527 = sbr.rel (%p525) target = $region44
        $region43: #{vgg_forward.7} parent=27 // pred_region
          %528 = dma.done [#allocation5], 32
        $region44: #{vgg_forward.7} parent=27 // pred_fallthru
          _
      $region28: #{vgg_forward.7} parent=5 // pred_fallthru
        _
      %p529 = scmp.le.s32.totalorder 2, %s11
      // Predicated region
      $region45: #{vgg_forward.7} parent=5 // pred_check
        %p530 = pneg %p529
      $region46: #{vgg_forward.7} parent=5 // pred_check_branch
        %532 = sbr.rel (%p530) target = $region48
      $region47: #{vgg_forward.7} parent=5 // pred_region
        %s533 = ssub.s32 %s11, 2
      $region48: #{vgg_forward.7} parent=5 // pred_fallthru
        _
    $region6: #{vgg_forward.7} parent=1 // loop_footer
      %s15 = sadd.s32 1, %s11
    $region7: #{vgg_forward.7} parent=1 // loop_footer_branch
      %10 = sbr.rel target = $region3
    $region8: #{vgg_forward.7} parent=1 // loop_exit
      _
    %534 = vsyncpa [#allocation5], 1
    %s535 = scalar_lea.sflag [#allocation5], 1
    %536 = vsyncpa %s535, 1

</llo_original>
